<compile_context>
chip_gen: v6e
topology: v6e:2x2x1
jax: 0.10.0
libtpu: 0.0.40
codegen_flags: <defaults>
</compile_context>

<pallas_src>
import functools
import math

import jax
import jax.numpy as jnp
from jax import lax
from jax.experimental import pallas as pl
from jax.experimental.pallas import tpu as pltpu

PAD = 0


# --------------------------------------------------------------------------------------
# Kernel 1: LSTM recurrence + masked dot-product attention + output transform
#           (+ optional fused classifier for small vocabularies)
# --------------------------------------------------------------------------------------
def _decoder_kernel(*refs, fuse_classifier):
    if fuse_classifier:
        (emb_ref, bias_ref, h0_ref, c0_ref,
         w_ih_ref, w_hh_ref, b_gates_ref,
         w_q_ref, w_oc_ref, w_oh_ref, b_o_ref,
         w_cls_ref, b_cls_ref, keys_hbm_ref,
         out_ref, h_out_ref, c_out_ref, attn_ref,
         keys_ref, hs_ref, gx_ref, copy_sem) = refs
    else:
        (emb_ref, bias_ref, h0_ref, c0_ref,
         w_ih_ref, w_hh_ref, b_gates_ref,
         w_q_ref, w_oc_ref, w_oh_ref, b_o_ref,
         keys_hbm_ref,
         out_ref, h_out_ref, c_out_ref, attn_ref,
         keys_ref, hs_ref, gx_ref, copy_sem) = refs
        w_cls_ref = b_cls_ref = None

    T, B, E = emb_ref.shape
    H = h0_ref.shape[-1]
    S, C = keys_ref.shape[-2], keys_ref.shape[-1]

    # ---- keys HBM->VMEM transfer: started now, hidden behind the serial recurrence ----
    keys_copy = pltpu.make_async_copy(keys_hbm_ref, keys_ref, copy_sem.at[0])
    keys_copy.start()

    # ---- hoisted LSTM input projection: one (T*B,E)x(E,4H) bf16 MXU matmul, f32 acc ----
    gx = (jnp.dot(emb_ref[...].reshape(T * B, E), w_ih_ref[...],
                  preferred_element_type=jnp.float32) + b_gates_ref[...])
    gx_ref[...] = gx.reshape(T, B, 4 * H)

    # ---- serial recurrence: only the (B,H)x(H,4H) matmul + gate VPU/EUP work per step.
    # W_hh is read from VMEM inside the dot (not held live across the unrolled loop) to
    # keep vreg pressure down; kept f32 (latency-bound -> no MXU throughput lost).
    def lstm_step(t, carry):
        h, c = carry
        gates = gx_ref[t] + jnp.dot(h, w_hh_ref[...], preferred_element_type=jnp.float32)
        i_g = jax.nn.sigmoid(gates[:, 0:H])               # 128-lane-aligned slices (H=128)
        f_g = jax.nn.sigmoid(gates[:, H:2 * H])
        g_g = jnp.tanh(gates[:, 2 * H:3 * H])
        o_g = jax.nn.sigmoid(gates[:, 3 * H:4 * H])
        c_new = f_g * c + i_g * g_g
        h_new = o_g * jnp.tanh(c_new)
        hs_ref[t] = h_new                                 # dense (B, H) store, time-major
        return (h_new, c_new)

    h_fin, c_fin = lax.fori_loop(0, T, lstm_step, (h0_ref[...], c0_ref[...]), unroll=True)
    h_out_ref[...] = h_fin
    c_out_ref[...] = c_fin

    keys_copy.wait()
    keys = keys_ref[...]                                                    # (B, S, C) bf16

    # ---- flattened decoder states stay time-major (row = t*B + b) end to end ----
    h_flat = hs_ref[...].reshape(T * B, H)
    h_bf16 = h_flat.astype(jnp.bfloat16)

    # attention query projection, batched over all T*B rows
    q = jnp.dot(h_bf16, w_q_ref[...], preferred_element_type=jnp.float32)   # (T*B, C) f32
    q3 = q.reshape(T, B, C)

    # Relayout confined to the tiny q / ctx tensors (a few KiB); implemented with
    # slice+concat (proven Mosaic lowering).  pltpu.einshape("tbc->btc", q3) is the
    # drop-in single-op alternative.
    q_btc = jnp.concatenate([q3[:, b, :][None] for b in range(B)],
                            axis=0).astype(jnp.bfloat16)                    # (B, T, C)

    scores = jnp.einsum("btc,bsc->bts", q_btc, keys,
                        preferred_element_type=jnp.float32)                 # (B, T, S)
    scores = scores + bias_ref[...][:, None, :]           # additive mask bias (0 / -1e9)
    scores = scores - jnp.max(scores, axis=-1, keepdims=True)
    p = jnp.exp(scores)
    attn = p * pl.reciprocal(jnp.sum(p, axis=-1, keepdims=True), approx=False)
    attn_ref[...] = attn                                                    # dense (B,T,S)

    ctx = jnp.einsum("bts,bsc->btc", attn.astype(jnp.bfloat16), keys,
                     preferred_element_type=jnp.float32)                    # (B, T, C) f32
    # back to time-major flat rows (row = t*B + b)
    ctx_flat = jnp.concatenate([ctx[:, t, :] for t in range(T)],
                               axis=0).astype(jnp.bfloat16)                 # (T*B, C)

    # ---- output transform: tanh(W_o [ctx ; h] + b_o), batched over T*B rows ----
    feat = jnp.tanh(
        jnp.dot(ctx_flat, w_oc_ref[...], preferred_element_type=jnp.float32)
        + jnp.dot(h_bf16, w_oh_ref[...], preferred_element_type=jnp.float32)
        + b_o_ref[...])                                                     # (T*B, H) f32

    if fuse_classifier:
        out_ref[...] = (jnp.dot(feat.astype(jnp.bfloat16), w_cls_ref[...],
                                preferred_element_type=jnp.float32)
                        + b_cls_ref[...])                                   # (T*B, V) f32
    else:
        out_ref[...] = feat.astype(out_ref.dtype)                           # (T*B, H) bf16


# --------------------------------------------------------------------------------------
# Kernel 2: classifier for large vocabularies, tiled over V (parallel grid axis)
# --------------------------------------------------------------------------------------
def _classifier_kernel(feat_ref, w_ref, b_ref, logits_ref):
    logits_ref[...] = (jnp.dot(feat_ref[...], w_ref[...],
                               preferred_element_type=jnp.float32) + b_ref[...])


def _pick_vocab_tile(v):
    # Largest 128-multiple tile <= 4096 dividing V, preferring >= 2 tiles so the
    # 'parallel' vocab axis can shard across v7x's two TensorCores.
    divs = [tv for tv in range(128, min(v, 4096) + 1, 128) if v % tv == 0]
    if not divs:
        return v
    two_plus = [tv for tv in divs if v // tv >= 2]
    return max(two_plus) if two_plus else max(divs)


def _nbytes(shape, dtype):
    return math.prod(shape) * jnp.dtype(dtype).itemsize


def _vmem_limit(nbytes):
    # ~2x headroom for compiler temps / double-buffering, clamped to a range that is safe
    # on v5e/v6e (128 MiB physical) and v7x (64 MiB physical, 32 MiB default scoped).
    return int(min(max(2 * nbytes + (2 << 20), 8 << 20), 40 << 20))


def recurrent_attention_decoder(tokens, context_outputs, mask, hidden, params,
                                *, classifier="auto"):
    """Embedding gather (glue) + fused LSTM/attention(/classifier) Pallas kernel(s)."""
    h0, c0 = hidden
    T, B = tokens.shape
    S = context_outputs.shape[0]
    C = context_outputs.shape[-1]
    H = h0.shape[-1]
    V = params["w_cls"].shape[0]
    BT = T * B

    # --- XLA-side glue: embedding gather, batch-leading keys, additive mask bias,
    #     pre-transposed weights.  MXU operands cast to bf16 (f32 accumulation in-kernel);
    #     biases and the recurrent weight W_hh stay f32. ---
    emb = jnp.take(params["embedding"], tokens, axis=0).astype(jnp.bfloat16)   # (T, B, E)
    keys = jnp.transpose(context_outputs, (1, 0, 2)).astype(jnp.bfloat16)      # (B, S, C)
    attn_bias = (mask.astype(jnp.float32) - 1.0) * 1e9                         # (B, S)
    w_ih_t = params["w_ih"].T.astype(jnp.bfloat16)       # (E, 4H)
    w_hh_t = params["w_hh"].T                            # (H, 4H)  f32 (recurrence)
    w_q_t = params["w_q"].T.astype(jnp.bfloat16)         # (H, C)
    w_oc_t = params["w_oc"].T.astype(jnp.bfloat16)       # (C, H)
    w_oh_t = params["w_oh"].T.astype(jnp.bfloat16)       # (H, H)
    w_cls_t = params["w_cls"].T.astype(jnp.bfloat16)     # (H, V)

    fused_cls_bytes = V * H * 2 + V * 4 + BT * V * 4     # W_cls + b_cls + logits resident
    fuse = classifier == "fused" or (classifier == "auto" and fused_cls_bytes <= (8 << 20))

    vmem = pl.BlockSpec(memory_space=pltpu.MemorySpace.VMEM)
    hbm_any = pl.BlockSpec(memory_space=pl.ANY)

    ins = [emb, attn_bias, h0.astype(jnp.float32), c0.astype(jnp.float32),
           w_ih_t, w_hh_t, params["b_gates"],
           w_q_t, w_oc_t, w_oh_t, params["b_o"]]
    in_specs = [vmem] * len(ins)
    if fuse:
        ins += [w_cls_t, params["b_cls"]]
        in_specs += [vmem, vmem]
    ins.append(keys)                    # stays in HBM; DMA overlapped with the recurrence
    in_specs.append(hbm_any)

    out0 = (jax.ShapeDtypeStruct((BT, V), jnp.float32) if fuse
            else jax.ShapeDtypeStruct((BT, H), jnp.bfloat16))
    outs = (out0,
            jax.ShapeDtypeStruct((B, H), jnp.float32),     # final h
            jax.ShapeDtypeStruct((B, H), jnp.float32),     # final c
            jax.ShapeDtypeStruct((B, T, S), jnp.float32))  # attention scores

    scratch = [pltpu.VMEM((B, S, C), jnp.bfloat16),        # keys landing buffer
               pltpu.VMEM((T, B, H), jnp.float32),         # LSTM hidden states
               pltpu.VMEM((T, B, 4 * H), jnp.float32),     # hoisted x @ W_ih + b
               pltpu.SemaphoreType.DMA((1,))]

    bytes1 = (sum(_nbytes(x.shape, x.dtype) for x in ins)
              + sum(_nbytes(o.shape, o.dtype) for o in outs)
              + _nbytes((B, S, C), jnp.bfloat16)
              + _nbytes((T, B, H), jnp.float32)
              + _nbytes((T, B, 4 * H), jnp.float32))

    out0_main, h_t, c_t, attn = pl.pallas_call(
        functools.partial(_decoder_kernel, fuse_classifier=fuse),
        out_shape=outs,
        in_specs=in_specs,
        out_specs=(vmem, vmem, vmem, vmem),
        scratch_shapes=scratch,
        compiler_params=pltpu.CompilerParams(vmem_limit_bytes=_vmem_limit(bytes1)),
    )(*ins)

    if fuse:
        logits_flat = out0_main                                             # (T*B, V)
    else:
        # classifier streamed over vocab tiles; feat (bf16) resident across the grid
        TV = _pick_vocab_tile(V)
        bytes2 = 2 * (BT * H * 2 + H * TV * 2 + TV * 4 + BT * TV * 4)
        logits_flat = pl.pallas_call(
            _classifier_kernel,
            out_shape=jax.ShapeDtypeStruct((BT, V), jnp.float32),
            grid=(V // TV,),
            in_specs=[
                pl.BlockSpec((BT, H), lambda v: (0, 0)),   # features: resident
                pl.BlockSpec((H, TV), lambda v: (0, v)),   # W_cls^T vocab tile (bf16)
                pl.BlockSpec((1, TV), lambda v: (0, v)),   # bias tile
            ],
            out_specs=pl.BlockSpec((BT, TV), lambda v: (0, v)),  # lane-dense logits slab
            compiler_params=pltpu.CompilerParams(
                dimension_semantics=("parallel",),
                vmem_limit_bytes=_vmem_limit(bytes2)),
        )(out0_main, w_cls_t, params["b_cls"])

    # rows are already time-major (row = t*B + b) -> plain reshape, no transpose
    logits = logits_flat.reshape(T, B, V)
    new_hidden = (h_t[None], c_t[None])                   # (num_layers=1, B, H)
    return logits, new_hidden, attn


def init_params(key, vocab_size, emb_size, hidden_size, context_size):
    ks = jax.random.split(key, 10)

    def rnd(k, shape, scale=0.1):
        return scale * jax.random.normal(k, shape, dtype=jnp.float32)

    emb = rnd(ks[0], (vocab_size, emb_size))
    emb = emb.at[PAD].set(0.0)                            # nn.Embedding padding_idx=PAD
    return dict(
        embedding=emb,
        w_ih=rnd(ks[1], (4 * hidden_size, emb_size)),     # LSTM input-hidden weights
        w_hh=rnd(ks[2], (4 * hidden_size, hidden_size)),  # LSTM hidden-hidden weights
        b_gates=rnd(ks[3], (1, 4 * hidden_size)),         # b_ih + b_hh combined
        w_q=rnd(ks[4], (context_size, hidden_size)),      # attention query projection
        w_oc=rnd(ks[5], (hidden_size, context_size)),     # output transform (ctx half)
        w_oh=rnd(ks[6], (hidden_size, hidden_size)),      # output transform (hidden half)
        b_o=rnd(ks[7], (1, hidden_size)),
        w_cls=rnd(ks[8], (vocab_size, hidden_size)),      # classifier
        b_cls=rnd(ks[9], (1, vocab_size)),
    )


def _reference_forward(tokens, context_outputs, mask, hidden, params):
    """Pure-JAX reference of the same forward pass (for correctness checking)."""
    h0, c0 = hidden
    H = h0.shape[-1]
    emb = jnp.take(params["embedding"], tokens, axis=0).astype(jnp.float32)   # (T, B, E)
    w_ih_t, w_hh_t = params["w_ih"].T, params["w_hh"].T

    def step(carry, x_t):
        h, c = carry
        g = x_t @ w_ih_t + h @ w_hh_t + params["b_gates"]
        i = jax.nn.sigmoid(g[:, 0:H])
        f = jax.nn.sigmoid(g[:, H:2 * H])
        gg = jnp.tanh(g[:, 2 * H:3 * H])
        o = jax.nn.sigmoid(g[:, 3 * H:4 * H])
        c = f * c + i * gg
        h = o * jnp.tanh(c)
        return (h, c), h

    (h_t, c_t), hs = lax.scan(step, (h0, c0), emb)                            # hs (T, B, H)
    q = hs @ params["w_q"].T                                                  # (T, B, C)
    scores = jnp.einsum('tbc,sbc->bts', q, context_outputs)
    scores = jnp.where(mask[:, None, :] > 0.0, scores, -1e9)
    attn = jax.nn.softmax(scores, axis=-1)                                    # (B, T, S)
    ctx = jnp.einsum('bts,sbc->tbc', attn, context_outputs)                   # (T, B, C)
    out = jnp.tanh(ctx @ params["w_oc"].T + hs @ params["w_oh"].T + params["b_o"])
    logits = out @ params["w_cls"].T + params["b_cls"]
    return logits, (h_t[None], c_t[None]), attn


if __name__ == "__main__":
    V, E, H, C = 1024, 128, 128, 128    # vocab, embedding, hidden, context sizes
    T, S, B = 8, 128, 2                 # target len, source len, batch

    root = jax.random.PRNGKey(0)
    k_par, k_tok, k_ctx = jax.random.split(root, 3)

    params = init_params(k_par, V, E, H, C)
    tokens = jax.random.randint(k_tok, (T, B), 1, V, dtype=jnp.int32)           # (T, B)
    context_outputs = 0.5 * jax.random.normal(k_ctx, (S, B, C), jnp.float32)    # (S, B, C)
    lengths = jnp.array([S, S - 37], dtype=jnp.int32)
    mask = (jnp.arange(S)[None, :] < lengths[:, None]).astype(jnp.float32)      # (B, S)
    h0 = jnp.zeros((B, H), jnp.float32)
    c0 = jnp.zeros((B, H), jnp.float32)

    # fused-classifier path (auto-selected at this vocab size)
    logits, (h_t, c_t), attn = recurrent_attention_decoder(
        tokens, context_outputs, mask, (h0, c0), params)
    # vocab-tiled classifier path (what large vocabularies use)
    logits_tiled, _, _ = recurrent_attention_decoder(
        tokens, context_outputs, mask, (h0, c0), params, classifier="tiled")
    jax.block_until_ready((logits, h_t, c_t, attn, logits_tiled))

    assert logits.shape == (T, B, V)
    assert logits_tiled.shape == (T, B, V)
    assert h_t.shape == (1, B, H) and c_t.shape == (1, B, H)
    assert attn.shape == (B, T, S)
    assert bool(jnp.all(jnp.isfinite(logits)))

    # correctness check against a pure-JAX f32 reference (relative tolerance covers the
    # bf16-operand / f32-accumulate MXU path; softmax is exact: approx=False reciprocal)
    with jax.default_matmul_precision("highest"):
        ref_logits, (ref_h, ref_c), ref_attn = _reference_forward(
            tokens, context_outputs, mask, (h0, c0), params)
    assert bool(jnp.allclose(logits, ref_logits, rtol=2e-2, atol=2e-2)), "logits mismatch"
    assert bool(jnp.allclose(logits_tiled, ref_logits, rtol=2e-2, atol=2e-2)), \
        "tiled logits mismatch"
    assert bool(jnp.allclose(logits, logits_tiled, atol=1e-3)), "fused/tiled mismatch"
    assert bool(jnp.allclose(h_t, ref_h, atol=1e-2)), "hidden h mismatch"
    assert bool(jnp.allclose(c_t, ref_c, atol=1e-2)), "hidden c mismatch"
    assert bool(jnp.allclose(attn, ref_attn, atol=1e-2)), "attention mismatch"

    print("KERNEL_OK")
</pallas_src>

<mosaic_0001>
module attributes {stable_mosaic.version = 11 : i64} {
  func.func @_decoder_kernel(%arg0: memref<8x2x128xbf16, #tpu.memory_space<vmem>>, %arg1: memref<2x128xf32, #tpu.memory_space<vmem>>, %arg2: memref<2x128xf32, #tpu.memory_space<vmem>>, %arg3: memref<2x128xf32, #tpu.memory_space<vmem>>, %arg4: memref<128x512xbf16, #tpu.memory_space<vmem>>, %arg5: memref<128x512xf32, #tpu.memory_space<vmem>>, %arg6: memref<1x512xf32, #tpu.memory_space<vmem>>, %arg7: memref<128x128xbf16, #tpu.memory_space<vmem>>, %arg8: memref<128x128xbf16, #tpu.memory_space<vmem>>, %arg9: memref<128x128xbf16, #tpu.memory_space<vmem>>, %arg10: memref<1x128xf32, #tpu.memory_space<vmem>>, %arg11: memref<128x1024xbf16, #tpu.memory_space<vmem>>, %arg12: memref<1x1024xf32, #tpu.memory_space<vmem>>, %arg13: memref<2x128x128xbf16, #tpu.memory_space<any>>, %arg14: memref<16x1024xf32, #tpu.memory_space<vmem>>, %arg15: memref<2x128xf32, #tpu.memory_space<vmem>>, %arg16: memref<2x128xf32, #tpu.memory_space<vmem>>, %arg17: memref<2x8x128xf32, #tpu.memory_space<vmem>>, %arg18: memref<2x128x128xbf16, #tpu.memory_space<vmem>>, %arg19: memref<8x2x128xf32, #tpu.memory_space<vmem>>, %arg20: memref<8x2x512xf32, #tpu.memory_space<vmem>>, %arg21: memref<1x!tpu.dma_semaphore, #tpu.memory_space<semaphore_mem>>) attributes {dimension_semantics = [], scalar_prefetch = 0 : i64, scratch_operands = 4 : i64, tpu.core_type = #tpu.core_type<tc>} {
    %c0_i32 = arith.constant 0 : i32
    %0 = tpu.memref_slice %arg21[%c0_i32] : memref<1x!tpu.dma_semaphore, #tpu.memory_space<semaphore_mem>> -> memref<1x!tpu.dma_semaphore, #tpu.memory_space<semaphore_mem>>
    %1 = tpu.memref_squeeze %0 : memref<1x!tpu.dma_semaphore, #tpu.memory_space<semaphore_mem>> -> memref<!tpu.dma_semaphore, #tpu.memory_space<semaphore_mem>>
    tpu.enqueue_dma source(%arg13 : memref<2x128x128xbf16, #tpu.memory_space<any>>) target(%arg18 : memref<2x128x128xbf16, #tpu.memory_space<vmem>>) target_semaphore(%1 : memref<!tpu.dma_semaphore, #tpu.memory_space<semaphore_mem>>)
    %c0 = arith.constant 0 : index
    %c0_0 = arith.constant 0 : index
    %c0_1 = arith.constant 0 : index
    %2 = vector.load %arg0[%c0, %c0_0, %c0_1] : memref<8x2x128xbf16, #tpu.memory_space<vmem>>, vector<8x2x128xbf16>
    %3 = vector.shape_cast %2 : vector<8x2x128xbf16> to vector<16x128xbf16>
    %c0_2 = arith.constant 0 : index
    %c0_3 = arith.constant 0 : index
    %4 = vector.load %arg4[%c0_2, %c0_3] : memref<128x512xbf16, #tpu.memory_space<vmem>>, vector<128x512xbf16>
    %cst = arith.constant dense<0.000000e+00> : vector<16x512xf32>
    %5 = tpu.matmul %3, %4, %cst {dimension_numbers = #tpu.dot_dimension_numbers<[1], [0], [0], [1], [0, 0, 1, 1], [], []>} : vector<16x128xbf16>, vector<128x512xbf16>, vector<16x512xf32> -> vector<16x512xf32>
    %c0_4 = arith.constant 0 : index
    %c0_5 = arith.constant 0 : index
    %6 = vector.load %arg6[%c0_4, %c0_5] : memref<1x512xf32, #tpu.memory_space<vmem>>, vector<1x512xf32>
    %7 = vector.broadcast %6 : vector<1x512xf32> to vector<16x512xf32>
    %8 = arith.addf %5, %7 : vector<16x512xf32>
    %9 = vector.shape_cast %8 : vector<16x512xf32> to vector<8x2x512xf32>
    %c0_6 = arith.constant 0 : index
    %c0_7 = arith.constant 0 : index
    %c0_8 = arith.constant 0 : index
    %10 = vector.load %arg20[%c0_6, %c0_7, %c0_8] : memref<8x2x512xf32, #tpu.memory_space<vmem>>, vector<8x2x512xf32>
    tpu.vector_store %arg20[%c0_6, %c0_7, %c0_8], %9 {strides = array<i32>} : memref<8x2x512xf32, #tpu.memory_space<vmem>>, vector<8x2x512xf32>,
    %c0_9 = arith.constant 0 : index
    %c0_10 = arith.constant 0 : index
    %11 = vector.load %arg2[%c0_9, %c0_10] : memref<2x128xf32, #tpu.memory_space<vmem>>, vector<2x128xf32>
    %c0_11 = arith.constant 0 : index
    %c0_12 = arith.constant 0 : index
    %12 = vector.load %arg3[%c0_11, %c0_12] : memref<2x128xf32, #tpu.memory_space<vmem>>, vector<2x128xf32>
    %c0_i32_13 = arith.constant 0 : i32
    %13 = arith.index_cast %c0_i32_13 : i32 to index
    %c0_14 = arith.constant 0 : index
    %c0_15 = arith.constant 0 : index
    %14 = vector.load %arg20[%13, %c0_14, %c0_15] : memref<8x2x512xf32, #tpu.memory_space<vmem>>, vector<1x2x512xf32>
    %15 = vector.shape_cast %14 : vector<1x2x512xf32> to vector<2x512xf32>
    %c0_16 = arith.constant 0 : index
    %c0_17 = arith.constant 0 : index
    %16 = vector.load %arg5[%c0_16, %c0_17] : memref<128x512xf32, #tpu.memory_space<vmem>>, vector<128x512xf32>
    %cst_18 = arith.constant dense<0.000000e+00> : vector<2x512xf32>
    %17 = tpu.matmul %11, %16, %cst_18 {dimension_numbers = #tpu.dot_dimension_numbers<[1], [0], [0], [1], [0, 0, 1, 1], [], []>} : vector<2x128xf32>, vector<128x512xf32>, vector<2x512xf32> -> vector<2x512xf32>
    %18 = arith.addf %15, %17 : vector<2x512xf32>
    %19 = vector.extract_strided_slice %18 {offsets = [0, 0], sizes = [2, 128], strides = [1, 1]} : vector<2x512xf32> to vector<2x128xf32>
    %20 = arith.negf %19 : vector<2x128xf32>
    %21 = math.exp %20 : vector<2x128xf32>
    %cst_19 = arith.constant 1.000000e+00 : f32
    %22 = vector.broadcast %cst_19 : f32 to vector<2x128xf32>
    %23 = arith.addf %22, %21 : vector<2x128xf32>
    %24 = arith.divf %22, %23 : vector<2x128xf32>
    %25 = vector.extract_strided_slice %18 {offsets = [0, 128], sizes = [2, 128], strides = [1, 1]} : vector<2x512xf32> to vector<2x128xf32>
    %26 = arith.negf %25 : vector<2x128xf32>
    %27 = math.exp %26 : vector<2x128xf32>
    %cst_20 = arith.constant 1.000000e+00 : f32
    %28 = vector.broadcast %cst_20 : f32 to vector<2x128xf32>
    %29 = arith.addf %28, %27 : vector<2x128xf32>
    %30 = arith.divf %28, %29 : vector<2x128xf32>
    %31 = vector.extract_strided_slice %18 {offsets = [0, 256], sizes = [2, 128], strides = [1, 1]} : vector<2x512xf32> to vector<2x128xf32>
    %32 = math.tanh %31 : vector<2x128xf32>
    %33 = vector.extract_strided_slice %18 {offsets = [0, 384], sizes = [2, 128], strides = [1, 1]} : vector<2x512xf32> to vector<2x128xf32>
    %34 = arith.negf %33 : vector<2x128xf32>
    %35 = math.exp %34 : vector<2x128xf32>
    %cst_21 = arith.constant 1.000000e+00 : f32
    %36 = vector.broadcast %cst_21 : f32 to vector<2x128xf32>
    %37 = arith.addf %36, %35 : vector<2x128xf32>
    %38 = arith.divf %36, %37 : vector<2x128xf32>
    %39 = arith.mulf %30, %12 : vector<2x128xf32>
    %40 = arith.mulf %24, %32 : vector<2x128xf32>
    %41 = arith.addf %39, %40 : vector<2x128xf32>
    %42 = math.tanh %41 : vector<2x128xf32>
    %43 = arith.mulf %38, %42 : vector<2x128xf32>
    %44 = arith.index_cast %c0_i32_13 : i32 to index
    %c0_22 = arith.constant 0 : index
    %c0_23 = arith.constant 0 : index
    %45 = vector.load %arg19[%44, %c0_22, %c0_23] : memref<8x2x128xf32, #tpu.memory_space<vmem>>, vector<1x2x128xf32>
    %46 = vector.shape_cast %45 : vector<1x2x128xf32> to vector<2x128xf32>
    %47 = vector.shape_cast %43 : vector<2x128xf32> to vector<1x2x128xf32>
    tpu.vector_store %arg19[%44, %c0_22, %c0_23], %47 {strides = array<i32>} : memref<8x2x128xf32, #tpu.memory_space<vmem>>, vector<1x2x128xf32>,
    %c1_i32 = arith.constant 1 : i32
    %48 = arith.index_cast %c1_i32 : i32 to index
    %c0_24 = arith.constant 0 : index
    %c0_25 = arith.constant 0 : index
    %49 = vector.load %arg20[%48, %c0_24, %c0_25] : memref<8x2x512xf32, #tpu.memory_space<vmem>>, vector<1x2x512xf32>
    %50 = vector.shape_cast %49 : vector<1x2x512xf32> to vector<2x512xf32>
    %c0_26 = arith.constant 0 : index
    %c0_27 = arith.constant 0 : index
    %51 = vector.load %arg5[%c0_26, %c0_27] : memref<128x512xf32, #tpu.memory_space<vmem>>, vector<128x512xf32>
    %cst_28 = arith.constant dense<0.000000e+00> : vector<2x512xf32>
    %52 = tpu.matmul %43, %51, %cst_28 {dimension_numbers = #tpu.dot_dimension_numbers<[1], [0], [0], [1], [0, 0, 1, 1], [], []>} : vector<2x128xf32>, vector<128x512xf32>, vector<2x512xf32> -> vector<2x512xf32>
    %53 = arith.addf %50, %52 : vector<2x512xf32>
    %54 = vector.extract_strided_slice %53 {offsets = [0, 0], sizes = [2, 128], strides = [1, 1]} : vector<2x512xf32> to vector<2x128xf32>
    %55 = arith.negf %54 : vector<2x128xf32>
    %56 = math.exp %55 : vector<2x128xf32>
    %cst_29 = arith.constant 1.000000e+00 : f32
    %57 = vector.broadcast %cst_29 : f32 to vector<2x128xf32>
    %58 = arith.addf %57, %56 : vector<2x128xf32>
    %59 = arith.divf %57, %58 : vector<2x128xf32>
    %60 = vector.extract_strided_slice %53 {offsets = [0, 128], sizes = [2, 128], strides = [1, 1]} : vector<2x512xf32> to vector<2x128xf32>
    %61 = arith.negf %60 : vector<2x128xf32>
    %62 = math.exp %61 : vector<2x128xf32>
    %cst_30 = arith.constant 1.000000e+00 : f32
    %63 = vector.broadcast %cst_30 : f32 to vector<2x128xf32>
    %64 = arith.addf %63, %62 : vector<2x128xf32>
    %65 = arith.divf %63, %64 : vector<2x128xf32>
    %66 = vector.extract_strided_slice %53 {offsets = [0, 256], sizes = [2, 128], strides = [1, 1]} : vector<2x512xf32> to vector<2x128xf32>
    %67 = math.tanh %66 : vector<2x128xf32>
    %68 = vector.extract_strided_slice %53 {offsets = [0, 384], sizes = [2, 128], strides = [1, 1]} : vector<2x512xf32> to vector<2x128xf32>
    %69 = arith.negf %68 : vector<2x128xf32>
    %70 = math.exp %69 : vector<2x128xf32>
    %cst_31 = arith.constant 1.000000e+00 : f32
    %71 = vector.broadcast %cst_31 : f32 to vector<2x128xf32>
    %72 = arith.addf %71, %70 : vector<2x128xf32>
    %73 = arith.divf %71, %72 : vector<2x128xf32>
    %74 = arith.mulf %65, %41 : vector<2x128xf32>
    %75 = arith.mulf %59, %67 : vector<2x128xf32>
    %76 = arith.addf %74, %75 : vector<2x128xf32>
    %77 = math.tanh %76 : vector<2x128xf32>
    %78 = arith.mulf %73, %77 : vector<2x128xf32>
    %79 = arith.index_cast %c1_i32 : i32 to index
    %c0_32 = arith.constant 0 : index
    %c0_33 = arith.constant 0 : index
    %80 = vector.load %arg19[%79, %c0_32, %c0_33] : memref<8x2x128xf32, #tpu.memory_space<vmem>>, vector<1x2x128xf32>
    %81 = vector.shape_cast %80 : vector<1x2x128xf32> to vector<2x128xf32>
    %82 = vector.shape_cast %78 : vector<2x128xf32> to vector<1x2x128xf32>
    tpu.vector_store %arg19[%79, %c0_32, %c0_33], %82 {strides = array<i32>} : memref<8x2x128xf32, #tpu.memory_space<vmem>>, vector<1x2x128xf32>,
    %c2_i32 = arith.constant 2 : i32
    %83 = arith.index_cast %c2_i32 : i32 to index
    %c0_34 = arith.constant 0 : index
    %c0_35 = arith.constant 0 : index
    %84 = vector.load %arg20[%83, %c0_34, %c0_35] : memref<8x2x512xf32, #tpu.memory_space<vmem>>, vector<1x2x512xf32>
    %85 = vector.shape_cast %84 : vector<1x2x512xf32> to vector<2x512xf32>
    %c0_36 = arith.constant 0 : index
    %c0_37 = arith.constant 0 : index
    %86 = vector.load %arg5[%c0_36, %c0_37] : memref<128x512xf32, #tpu.memory_space<vmem>>, vector<128x512xf32>
    %cst_38 = arith.constant dense<0.000000e+00> : vector<2x512xf32>
    %87 = tpu.matmul %78, %86, %cst_38 {dimension_numbers = #tpu.dot_dimension_numbers<[1], [0], [0], [1], [0, 0, 1, 1], [], []>} : vector<2x128xf32>, vector<128x512xf32>, vector<2x512xf32> -> vector<2x512xf32>
    %88 = arith.addf %85, %87 : vector<2x512xf32>
    %89 = vector.extract_strided_slice %88 {offsets = [0, 0], sizes = [2, 128], strides = [1, 1]} : vector<2x512xf32> to vector<2x128xf32>
    %90 = arith.negf %89 : vector<2x128xf32>
    %91 = math.exp %90 : vector<2x128xf32>
    %cst_39 = arith.constant 1.000000e+00 : f32
    %92 = vector.broadcast %cst_39 : f32 to vector<2x128xf32>
    %93 = arith.addf %92, %91 : vector<2x128xf32>
    %94 = arith.divf %92, %93 : vector<2x128xf32>
    %95 = vector.extract_strided_slice %88 {offsets = [0, 128], sizes = [2, 128], strides = [1, 1]} : vector<2x512xf32> to vector<2x128xf32>
    %96 = arith.negf %95 : vector<2x128xf32>
    %97 = math.exp %96 : vector<2x128xf32>
    %cst_40 = arith.constant 1.000000e+00 : f32
    %98 = vector.broadcast %cst_40 : f32 to vector<2x128xf32>
    %99 = arith.addf %98, %97 : vector<2x128xf32>
    %100 = arith.divf %98, %99 : vector<2x128xf32>
    %101 = vector.extract_strided_slice %88 {offsets = [0, 256], sizes = [2, 128], strides = [1, 1]} : vector<2x512xf32> to vector<2x128xf32>
    %102 = math.tanh %101 : vector<2x128xf32>
    %103 = vector.extract_strided_slice %88 {offsets = [0, 384], sizes = [2, 128], strides = [1, 1]} : vector<2x512xf32> to vector<2x128xf32>
    %104 = arith.negf %103 : vector<2x128xf32>
    %105 = math.exp %104 : vector<2x128xf32>
    %cst_41 = arith.constant 1.000000e+00 : f32
    %106 = vector.broadcast %cst_41 : f32 to vector<2x128xf32>
    %107 = arith.addf %106, %105 : vector<2x128xf32>
    %108 = arith.divf %106, %107 : vector<2x128xf32>
    %109 = arith.mulf %100, %76 : vector<2x128xf32>
    %110 = arith.mulf %94, %102 : vector<2x128xf32>
    %111 = arith.addf %109, %110 : vector<2x128xf32>
    %112 = math.tanh %111 : vector<2x128xf32>
    %113 = arith.mulf %108, %112 : vector<2x128xf32>
    %114 = arith.index_cast %c2_i32 : i32 to index
    %c0_42 = arith.constant 0 : index
    %c0_43 = arith.constant 0 : index
    %115 = vector.load %arg19[%114, %c0_42, %c0_43] : memref<8x2x128xf32, #tpu.memory_space<vmem>>, vector<1x2x128xf32>
    %116 = vector.shape_cast %115 : vector<1x2x128xf32> to vector<2x128xf32>
    %117 = vector.shape_cast %113 : vector<2x128xf32> to vector<1x2x128xf32>
    tpu.vector_store %arg19[%114, %c0_42, %c0_43], %117 {strides = array<i32>} : memref<8x2x128xf32, #tpu.memory_space<vmem>>, vector<1x2x128xf32>,
    %c3_i32 = arith.constant 3 : i32
    %118 = arith.index_cast %c3_i32 : i32 to index
    %c0_44 = arith.constant 0 : index
    %c0_45 = arith.constant 0 : index
    %119 = vector.load %arg20[%118, %c0_44, %c0_45] : memref<8x2x512xf32, #tpu.memory_space<vmem>>, vector<1x2x512xf32>
    %120 = vector.shape_cast %119 : vector<1x2x512xf32> to vector<2x512xf32>
    %c0_46 = arith.constant 0 : index
    %c0_47 = arith.constant 0 : index
    %121 = vector.load %arg5[%c0_46, %c0_47] : memref<128x512xf32, #tpu.memory_space<vmem>>, vector<128x512xf32>
    %cst_48 = arith.constant dense<0.000000e+00> : vector<2x512xf32>
    %122 = tpu.matmul %113, %121, %cst_48 {dimension_numbers = #tpu.dot_dimension_numbers<[1], [0], [0], [1], [0, 0, 1, 1], [], []>} : vector<2x128xf32>, vector<128x512xf32>, vector<2x512xf32> -> vector<2x512xf32>
    %123 = arith.addf %120, %122 : vector<2x512xf32>
    %124 = vector.extract_strided_slice %123 {offsets = [0, 0], sizes = [2, 128], strides = [1, 1]} : vector<2x512xf32> to vector<2x128xf32>
    %125 = arith.negf %124 : vector<2x128xf32>
    %126 = math.exp %125 : vector<2x128xf32>
    %cst_49 = arith.constant 1.000000e+00 : f32
    %127 = vector.broadcast %cst_49 : f32 to vector<2x128xf32>
    %128 = arith.addf %127, %126 : vector<2x128xf32>
    %129 = arith.divf %127, %128 : vector<2x128xf32>
    %130 = vector.extract_strided_slice %123 {offsets = [0, 128], sizes = [2, 128], strides = [1, 1]} : vector<2x512xf32> to vector<2x128xf32>
    %131 = arith.negf %130 : vector<2x128xf32>
    %132 = math.exp %131 : vector<2x128xf32>
    %cst_50 = arith.constant 1.000000e+00 : f32
    %133 = vector.broadcast %cst_50 : f32 to vector<2x128xf32>
    %134 = arith.addf %133, %132 : vector<2x128xf32>
    %135 = arith.divf %133, %134 : vector<2x128xf32>
    %136 = vector.extract_strided_slice %123 {offsets = [0, 256], sizes = [2, 128], strides = [1, 1]} : vector<2x512xf32> to vector<2x128xf32>
    %137 = math.tanh %136 : vector<2x128xf32>
    %138 = vector.extract_strided_slice %123 {offsets = [0, 384], sizes = [2, 128], strides = [1, 1]} : vector<2x512xf32> to vector<2x128xf32>
    %139 = arith.negf %138 : vector<2x128xf32>
    %140 = math.exp %139 : vector<2x128xf32>
    %cst_51 = arith.constant 1.000000e+00 : f32
    %141 = vector.broadcast %cst_51 : f32 to vector<2x128xf32>
    %142 = arith.addf %141, %140 : vector<2x128xf32>
    %143 = arith.divf %141, %142 : vector<2x128xf32>
    %144 = arith.mulf %135, %111 : vector<2x128xf32>
    %145 = arith.mulf %129, %137 : vector<2x128xf32>
    %146 = arith.addf %144, %145 : vector<2x128xf32>
    %147 = math.tanh %146 : vector<2x128xf32>
    %148 = arith.mulf %143, %147 : vector<2x128xf32>
    %149 = arith.index_cast %c3_i32 : i32 to index
    %c0_52 = arith.constant 0 : index
    %c0_53 = arith.constant 0 : index
    %150 = vector.load %arg19[%149, %c0_52, %c0_53] : memref<8x2x128xf32, #tpu.memory_space<vmem>>, vector<1x2x128xf32>
    %151 = vector.shape_cast %150 : vector<1x2x128xf32> to vector<2x128xf32>
    %152 = vector.shape_cast %148 : vector<2x128xf32> to vector<1x2x128xf32>
    tpu.vector_store %arg19[%149, %c0_52, %c0_53], %152 {strides = array<i32>} : memref<8x2x128xf32, #tpu.memory_space<vmem>>, vector<1x2x128xf32>,
    %c4_i32 = arith.constant 4 : i32
    %153 = arith.index_cast %c4_i32 : i32 to index
    %c0_54 = arith.constant 0 : index
    %c0_55 = arith.constant 0 : index
    %154 = vector.load %arg20[%153, %c0_54, %c0_55] : memref<8x2x512xf32, #tpu.memory_space<vmem>>, vector<1x2x512xf32>
    %155 = vector.shape_cast %154 : vector<1x2x512xf32> to vector<2x512xf32>
    %c0_56 = arith.constant 0 : index
    %c0_57 = arith.constant 0 : index
    %156 = vector.load %arg5[%c0_56, %c0_57] : memref<128x512xf32, #tpu.memory_space<vmem>>, vector<128x512xf32>
    %cst_58 = arith.constant dense<0.000000e+00> : vector<2x512xf32>
    %157 = tpu.matmul %148, %156, %cst_58 {dimension_numbers = #tpu.dot_dimension_numbers<[1], [0], [0], [1], [0, 0, 1, 1], [], []>} : vector<2x128xf32>, vector<128x512xf32>, vector<2x512xf32> -> vector<2x512xf32>
    %158 = arith.addf %155, %157 : vector<2x512xf32>
    %159 = vector.extract_strided_slice %158 {offsets = [0, 0], sizes = [2, 128], strides = [1, 1]} : vector<2x512xf32> to vector<2x128xf32>
    %160 = arith.negf %159 : vector<2x128xf32>
    %161 = math.exp %160 : vector<2x128xf32>
    %cst_59 = arith.constant 1.000000e+00 : f32
    %162 = vector.broadcast %cst_59 : f32 to vector<2x128xf32>
    %163 = arith.addf %162, %161 : vector<2x128xf32>
    %164 = arith.divf %162, %163 : vector<2x128xf32>
    %165 = vector.extract_strided_slice %158 {offsets = [0, 128], sizes = [2, 128], strides = [1, 1]} : vector<2x512xf32> to vector<2x128xf32>
    %166 = arith.negf %165 : vector<2x128xf32>
    %167 = math.exp %166 : vector<2x128xf32>
    %cst_60 = arith.constant 1.000000e+00 : f32
    %168 = vector.broadcast %cst_60 : f32 to vector<2x128xf32>
    %169 = arith.addf %168, %167 : vector<2x128xf32>
    %170 = arith.divf %168, %169 : vector<2x128xf32>
    %171 = vector.extract_strided_slice %158 {offsets = [0, 256], sizes = [2, 128], strides = [1, 1]} : vector<2x512xf32> to vector<2x128xf32>
    %172 = math.tanh %171 : vector<2x128xf32>
    %173 = vector.extract_strided_slice %158 {offsets = [0, 384], sizes = [2, 128], strides = [1, 1]} : vector<2x512xf32> to vector<2x128xf32>
    %174 = arith.negf %173 : vector<2x128xf32>
    %175 = math.exp %174 : vector<2x128xf32>
    %cst_61 = arith.constant 1.000000e+00 : f32
    %176 = vector.broadcast %cst_61 : f32 to vector<2x128xf32>
    %177 = arith.addf %176, %175 : vector<2x128xf32>
    %178 = arith.divf %176, %177 : vector<2x128xf32>
    %179 = arith.mulf %170, %146 : vector<2x128xf32>
    %180 = arith.mulf %164, %172 : vector<2x128xf32>
    %181 = arith.addf %179, %180 : vector<2x128xf32>
    %182 = math.tanh %181 : vector<2x128xf32>
    %183 = arith.mulf %178, %182 : vector<2x128xf32>
    %184 = arith.index_cast %c4_i32 : i32 to index
    %c0_62 = arith.constant 0 : index
    %c0_63 = arith.constant 0 : index
    %185 = vector.load %arg19[%184, %c0_62, %c0_63] : memref<8x2x128xf32, #tpu.memory_space<vmem>>, vector<1x2x128xf32>
    %186 = vector.shape_cast %185 : vector<1x2x128xf32> to vector<2x128xf32>
    %187 = vector.shape_cast %183 : vector<2x128xf32> to vector<1x2x128xf32>
    tpu.vector_store %arg19[%184, %c0_62, %c0_63], %187 {strides = array<i32>} : memref<8x2x128xf32, #tpu.memory_space<vmem>>, vector<1x2x128xf32>,
    %c5_i32 = arith.constant 5 : i32
    %188 = arith.index_cast %c5_i32 : i32 to index
    %c0_64 = arith.constant 0 : index
    %c0_65 = arith.constant 0 : index
    %189 = vector.load %arg20[%188, %c0_64, %c0_65] : memref<8x2x512xf32, #tpu.memory_space<vmem>>, vector<1x2x512xf32>
    %190 = vector.shape_cast %189 : vector<1x2x512xf32> to vector<2x512xf32>
    %c0_66 = arith.constant 0 : index
    %c0_67 = arith.constant 0 : index
    %191 = vector.load %arg5[%c0_66, %c0_67] : memref<128x512xf32, #tpu.memory_space<vmem>>, vector<128x512xf32>
    %cst_68 = arith.constant dense<0.000000e+00> : vector<2x512xf32>
    %192 = tpu.matmul %183, %191, %cst_68 {dimension_numbers = #tpu.dot_dimension_numbers<[1], [0], [0], [1], [0, 0, 1, 1], [], []>} : vector<2x128xf32>, vector<128x512xf32>, vector<2x512xf32> -> vector<2x512xf32>
    %193 = arith.addf %190, %192 : vector<2x512xf32>
    %194 = vector.extract_strided_slice %193 {offsets = [0, 0], sizes = [2, 128], strides = [1, 1]} : vector<2x512xf32> to vector<2x128xf32>
    %195 = arith.negf %194 : vector<2x128xf32>
    %196 = math.exp %195 : vector<2x128xf32>
    %cst_69 = arith.constant 1.000000e+00 : f32
    %197 = vector.broadcast %cst_69 : f32 to vector<2x128xf32>
    %198 = arith.addf %197, %196 : vector<2x128xf32>
    %199 = arith.divf %197, %198 : vector<2x128xf32>
    %200 = vector.extract_strided_slice %193 {offsets = [0, 128], sizes = [2, 128], strides = [1, 1]} : vector<2x512xf32> to vector<2x128xf32>
    %201 = arith.negf %200 : vector<2x128xf32>
    %202 = math.exp %201 : vector<2x128xf32>
    %cst_70 = arith.constant 1.000000e+00 : f32
    %203 = vector.broadcast %cst_70 : f32 to vector<2x128xf32>
    %204 = arith.addf %203, %202 : vector<2x128xf32>
    %205 = arith.divf %203, %204 : vector<2x128xf32>
    %206 = vector.extract_strided_slice %193 {offsets = [0, 256], sizes = [2, 128], strides = [1, 1]} : vector<2x512xf32> to vector<2x128xf32>
    %207 = math.tanh %206 : vector<2x128xf32>
    %208 = vector.extract_strided_slice %193 {offsets = [0, 384], sizes = [2, 128], strides = [1, 1]} : vector<2x512xf32> to vector<2x128xf32>
    %209 = arith.negf %208 : vector<2x128xf32>
    %210 = math.exp %209 : vector<2x128xf32>
    %cst_71 = arith.constant 1.000000e+00 : f32
    %211 = vector.broadcast %cst_71 : f32 to vector<2x128xf32>
    %212 = arith.addf %211, %210 : vector<2x128xf32>
    %213 = arith.divf %211, %212 : vector<2x128xf32>
    %214 = arith.mulf %205, %181 : vector<2x128xf32>
    %215 = arith.mulf %199, %207 : vector<2x128xf32>
    %216 = arith.addf %214, %215 : vector<2x128xf32>
    %217 = math.tanh %216 : vector<2x128xf32>
    %218 = arith.mulf %213, %217 : vector<2x128xf32>
    %219 = arith.index_cast %c5_i32 : i32 to index
    %c0_72 = arith.constant 0 : index
    %c0_73 = arith.constant 0 : index
    %220 = vector.load %arg19[%219, %c0_72, %c0_73] : memref<8x2x128xf32, #tpu.memory_space<vmem>>, vector<1x2x128xf32>
    %221 = vector.shape_cast %220 : vector<1x2x128xf32> to vector<2x128xf32>
    %222 = vector.shape_cast %218 : vector<2x128xf32> to vector<1x2x128xf32>
    tpu.vector_store %arg19[%219, %c0_72, %c0_73], %222 {strides = array<i32>} : memref<8x2x128xf32, #tpu.memory_space<vmem>>, vector<1x2x128xf32>,
    %c6_i32 = arith.constant 6 : i32
    %223 = arith.index_cast %c6_i32 : i32 to index
    %c0_74 = arith.constant 0 : index
    %c0_75 = arith.constant 0 : index
    %224 = vector.load %arg20[%223, %c0_74, %c0_75] : memref<8x2x512xf32, #tpu.memory_space<vmem>>, vector<1x2x512xf32>
    %225 = vector.shape_cast %224 : vector<1x2x512xf32> to vector<2x512xf32>
    %c0_76 = arith.constant 0 : index
    %c0_77 = arith.constant 0 : index
    %226 = vector.load %arg5[%c0_76, %c0_77] : memref<128x512xf32, #tpu.memory_space<vmem>>, vector<128x512xf32>
    %cst_78 = arith.constant dense<0.000000e+00> : vector<2x512xf32>
    %227 = tpu.matmul %218, %226, %cst_78 {dimension_numbers = #tpu.dot_dimension_numbers<[1], [0], [0], [1], [0, 0, 1, 1], [], []>} : vector<2x128xf32>, vector<128x512xf32>, vector<2x512xf32> -> vector<2x512xf32>
    %228 = arith.addf %225, %227 : vector<2x512xf32>
    %229 = vector.extract_strided_slice %228 {offsets = [0, 0], sizes = [2, 128], strides = [1, 1]} : vector<2x512xf32> to vector<2x128xf32>
    %230 = arith.negf %229 : vector<2x128xf32>
    %231 = math.exp %230 : vector<2x128xf32>
    %cst_79 = arith.constant 1.000000e+00 : f32
    %232 = vector.broadcast %cst_79 : f32 to vector<2x128xf32>
    %233 = arith.addf %232, %231 : vector<2x128xf32>
    %234 = arith.divf %232, %233 : vector<2x128xf32>
    %235 = vector.extract_strided_slice %228 {offsets = [0, 128], sizes = [2, 128], strides = [1, 1]} : vector<2x512xf32> to vector<2x128xf32>
    %236 = arith.negf %235 : vector<2x128xf32>
    %237 = math.exp %236 : vector<2x128xf32>
    %cst_80 = arith.constant 1.000000e+00 : f32
    %238 = vector.broadcast %cst_80 : f32 to vector<2x128xf32>
    %239 = arith.addf %238, %237 : vector<2x128xf32>
    %240 = arith.divf %238, %239 : vector<2x128xf32>
    %241 = vector.extract_strided_slice %228 {offsets = [0, 256], sizes = [2, 128], strides = [1, 1]} : vector<2x512xf32> to vector<2x128xf32>
    %242 = math.tanh %241 : vector<2x128xf32>
    %243 = vector.extract_strided_slice %228 {offsets = [0, 384], sizes = [2, 128], strides = [1, 1]} : vector<2x512xf32> to vector<2x128xf32>
    %244 = arith.negf %243 : vector<2x128xf32>
    %245 = math.exp %244 : vector<2x128xf32>
    %cst_81 = arith.constant 1.000000e+00 : f32
    %246 = vector.broadcast %cst_81 : f32 to vector<2x128xf32>
    %247 = arith.addf %246, %245 : vector<2x128xf32>
    %248 = arith.divf %246, %247 : vector<2x128xf32>
    %249 = arith.mulf %240, %216 : vector<2x128xf32>
    %250 = arith.mulf %234, %242 : vector<2x128xf32>
    %251 = arith.addf %249, %250 : vector<2x128xf32>
    %252 = math.tanh %251 : vector<2x128xf32>
    %253 = arith.mulf %248, %252 : vector<2x128xf32>
    %254 = arith.index_cast %c6_i32 : i32 to index
    %c0_82 = arith.constant 0 : index
    %c0_83 = arith.constant 0 : index
    %255 = vector.load %arg19[%254, %c0_82, %c0_83] : memref<8x2x128xf32, #tpu.memory_space<vmem>>, vector<1x2x128xf32>
    %256 = vector.shape_cast %255 : vector<1x2x128xf32> to vector<2x128xf32>
    %257 = vector.shape_cast %253 : vector<2x128xf32> to vector<1x2x128xf32>
    tpu.vector_store %arg19[%254, %c0_82, %c0_83], %257 {strides = array<i32>} : memref<8x2x128xf32, #tpu.memory_space<vmem>>, vector<1x2x128xf32>,
    %c7_i32 = arith.constant 7 : i32
    %258 = arith.index_cast %c7_i32 : i32 to index
    %c0_84 = arith.constant 0 : index
    %c0_85 = arith.constant 0 : index
    %259 = vector.load %arg20[%258, %c0_84, %c0_85] : memref<8x2x512xf32, #tpu.memory_space<vmem>>, vector<1x2x512xf32>
    %260 = vector.shape_cast %259 : vector<1x2x512xf32> to vector<2x512xf32>
    %c0_86 = arith.constant 0 : index
    %c0_87 = arith.constant 0 : index
    %261 = vector.load %arg5[%c0_86, %c0_87] : memref<128x512xf32, #tpu.memory_space<vmem>>, vector<128x512xf32>
    %cst_88 = arith.constant dense<0.000000e+00> : vector<2x512xf32>
    %262 = tpu.matmul %253, %261, %cst_88 {dimension_numbers = #tpu.dot_dimension_numbers<[1], [0], [0], [1], [0, 0, 1, 1], [], []>} : vector<2x128xf32>, vector<128x512xf32>, vector<2x512xf32> -> vector<2x512xf32>
    %263 = arith.addf %260, %262 : vector<2x512xf32>
    %264 = vector.extract_strided_slice %263 {offsets = [0, 0], sizes = [2, 128], strides = [1, 1]} : vector<2x512xf32> to vector<2x128xf32>
    %265 = arith.negf %264 : vector<2x128xf32>
    %266 = math.exp %265 : vector<2x128xf32>
    %cst_89 = arith.constant 1.000000e+00 : f32
    %267 = vector.broadcast %cst_89 : f32 to vector<2x128xf32>
    %268 = arith.addf %267, %266 : vector<2x128xf32>
    %269 = arith.divf %267, %268 : vector<2x128xf32>
    %270 = vector.extract_strided_slice %263 {offsets = [0, 128], sizes = [2, 128], strides = [1, 1]} : vector<2x512xf32> to vector<2x128xf32>
    %271 = arith.negf %270 : vector<2x128xf32>
    %272 = math.exp %271 : vector<2x128xf32>
    %cst_90 = arith.constant 1.000000e+00 : f32
    %273 = vector.broadcast %cst_90 : f32 to vector<2x128xf32>
    %274 = arith.addf %273, %272 : vector<2x128xf32>
    %275 = arith.divf %273, %274 : vector<2x128xf32>
    %276 = vector.extract_strided_slice %263 {offsets = [0, 256], sizes = [2, 128], strides = [1, 1]} : vector<2x512xf32> to vector<2x128xf32>
    %277 = math.tanh %276 : vector<2x128xf32>
    %278 = vector.extract_strided_slice %263 {offsets = [0, 384], sizes = [2, 128], strides = [1, 1]} : vector<2x512xf32> to vector<2x128xf32>
    %279 = arith.negf %278 : vector<2x128xf32>
    %280 = math.exp %279 : vector<2x128xf32>
    %cst_91 = arith.constant 1.000000e+00 : f32
    %281 = vector.broadcast %cst_91 : f32 to vector<2x128xf32>
    %282 = arith.addf %281, %280 : vector<2x128xf32>
    %283 = arith.divf %281, %282 : vector<2x128xf32>
    %284 = arith.mulf %275, %251 : vector<2x128xf32>
    %285 = arith.mulf %269, %277 : vector<2x128xf32>
    %286 = arith.addf %284, %285 : vector<2x128xf32>
    %287 = math.tanh %286 : vector<2x128xf32>
    %288 = arith.mulf %283, %287 : vector<2x128xf32>
    %289 = arith.index_cast %c7_i32 : i32 to index
    %c0_92 = arith.constant 0 : index
    %c0_93 = arith.constant 0 : index
    %290 = vector.load %arg19[%289, %c0_92, %c0_93] : memref<8x2x128xf32, #tpu.memory_space<vmem>>, vector<1x2x128xf32>
    %291 = vector.shape_cast %290 : vector<1x2x128xf32> to vector<2x128xf32>
    %292 = vector.shape_cast %288 : vector<2x128xf32> to vector<1x2x128xf32>
    tpu.vector_store %arg19[%289, %c0_92, %c0_93], %292 {strides = array<i32>} : memref<8x2x128xf32, #tpu.memory_space<vmem>>, vector<1x2x128xf32>,
    %c8_i32 = arith.constant 8 : i32
    %c0_94 = arith.constant 0 : index
    %c0_95 = arith.constant 0 : index
    %293 = vector.load %arg15[%c0_94, %c0_95] : memref<2x128xf32, #tpu.memory_space<vmem>>, vector<2x128xf32>
    tpu.vector_store %arg15[%c0_94, %c0_95], %288 {strides = array<i32>} : memref<2x128xf32, #tpu.memory_space<vmem>>, vector<2x128xf32>,
    %c0_96 = arith.constant 0 : index
    %c0_97 = arith.constant 0 : index
    %294 = vector.load %arg16[%c0_96, %c0_97] : memref<2x128xf32, #tpu.memory_space<vmem>>, vector<2x128xf32>
    tpu.vector_store %arg16[%c0_96, %c0_97], %286 {strides = array<i32>} : memref<2x128xf32, #tpu.memory_space<vmem>>, vector<2x128xf32>,
    %c0_i32_98 = arith.constant 0 : i32
    %295 = tpu.memref_slice %arg21[%c0_i32_98] : memref<1x!tpu.dma_semaphore, #tpu.memory_space<semaphore_mem>> -> memref<1x!tpu.dma_semaphore, #tpu.memory_space<semaphore_mem>>
    %296 = tpu.memref_squeeze %295 : memref<1x!tpu.dma_semaphore, #tpu.memory_space<semaphore_mem>> -> memref<!tpu.dma_semaphore, #tpu.memory_space<semaphore_mem>>
    tpu.wait_dma2 semaphore(%296 : memref<!tpu.dma_semaphore, #tpu.memory_space<semaphore_mem>>) src(%arg13 : memref<2x128x128xbf16, #tpu.memory_space<any>>) dst(%arg18 : memref<2x128x128xbf16, #tpu.memory_space<vmem>>)
    %c0_99 = arith.constant 0 : index
    %c0_100 = arith.constant 0 : index
    %c0_101 = arith.constant 0 : index
    %297 = vector.load %arg18[%c0_99, %c0_100, %c0_101] : memref<2x128x128xbf16, #tpu.memory_space<vmem>>, vector<2x128x128xbf16>
    %c0_102 = arith.constant 0 : index
    %c0_103 = arith.constant 0 : index
    %c0_104 = arith.constant 0 : index
    %298 = vector.load %arg19[%c0_102, %c0_103, %c0_104] : memref<8x2x128xf32, #tpu.memory_space<vmem>>, vector<8x2x128xf32>
    %299 = vector.shape_cast %298 : vector<8x2x128xf32> to vector<16x128xf32>
    %300 = arith.truncf %299 : vector<16x128xf32> to vector<16x128xbf16>
    %c0_105 = arith.constant 0 : index
    %c0_106 = arith.constant 0 : index
    %301 = vector.load %arg7[%c0_105, %c0_106] : memref<128x128xbf16, #tpu.memory_space<vmem>>, vector<128x128xbf16>
    %cst_107 = arith.constant dense<0.000000e+00> : vector<16x128xf32>
    %302 = tpu.matmul %300, %301, %cst_107 {dimension_numbers = #tpu.dot_dimension_numbers<[1], [0], [0], [1], [0, 0, 1, 1], [], []>} : vector<16x128xbf16>, vector<128x128xbf16>, vector<16x128xf32> -> vector<16x128xf32>
    %303 = vector.shape_cast %302 : vector<16x128xf32> to vector<8x2x128xf32>
    %304 = vector.extract_strided_slice %303 {offsets = [0, 0, 0], sizes = [8, 1, 128], strides = [1, 1, 1]} : vector<8x2x128xf32> to vector<8x1x128xf32>
    %305 = vector.shape_cast %304 : vector<8x1x128xf32> to vector<8x128xf32>
    %306 = vector.shape_cast %305 : vector<8x128xf32> to vector<1x8x128xf32>
    %307 = vector.extract_strided_slice %303 {offsets = [0, 1, 0], sizes = [8, 1, 128], strides = [1, 1, 1]} : vector<8x2x128xf32> to vector<8x1x128xf32>
    %308 = vector.shape_cast %307 : vector<8x1x128xf32> to vector<8x128xf32>
    %309 = vector.shape_cast %308 : vector<8x128xf32> to vector<1x8x128xf32>
    %310 = tpu.concatenate %306, %309 in 0 : vector<1x8x128xf32>, vector<1x8x128xf32> -> vector<2x8x128xf32>
    %311 = arith.truncf %310 : vector<2x8x128xf32> to vector<2x8x128xbf16>
    "tpu.trace_start"() <{level = 10 : i32, message = "btc,bsc->bts"}> : () -> ()
    %cst_108 = arith.constant dense<0.000000e+00> : vector<2x8x128xf32>
    %312 = tpu.matmul %311, %297, %cst_108 {dimension_numbers = #tpu.dot_dimension_numbers<[2], [2], [1], [1], [0, 0, 0, 1, 1, 1], [0], [0]>} : vector<2x8x128xbf16>, vector<2x128x128xbf16>, vector<2x8x128xf32> -> vector<2x8x128xf32>
    "tpu.trace_stop"() : () -> ()
    %c0_109 = arith.constant 0 : index
    %c0_110 = arith.constant 0 : index
    %313 = vector.load %arg1[%c0_109, %c0_110] : memref<2x128xf32, #tpu.memory_space<vmem>>, vector<2x128xf32>
    %314 = vector.shape_cast %313 : vector<2x128xf32> to vector<2x1x128xf32>
    %315 = vector.broadcast %314 : vector<2x1x128xf32> to vector<2x8x128xf32>
    %316 = arith.addf %312, %315 : vector<2x8x128xf32>
    %cst_111 = arith.constant dense<0xFF800000> : vector<2x8xf32>
    %317 = vector.multi_reduction <maximumf>, %316, %cst_111 [2] : vector<2x8x128xf32> to vector<2x8xf32>
    %318 = vector.shape_cast %317 : vector<2x8xf32> to vector<2x8x1xf32>
    %319 = vector.broadcast %318 : vector<2x8x1xf32> to vector<2x8x128xf32>
    %320 = arith.subf %316, %319 : vector<2x8x128xf32>
    %321 = math.exp %320 : vector<2x8x128xf32>
    %cst_112 = arith.constant dense<0.000000e+00> : vector<2x8xf32>
    %322 = vector.multi_reduction <add>, %321, %cst_112 [2] : vector<2x8x128xf32> to vector<2x8xf32>
    %323 = vector.shape_cast %322 : vector<2x8xf32> to vector<2x8x1xf32>
    %324 = tpu.reciprocal %323 : vector<2x8x1xf32> -> vector<2x8x1xf32>
    %325 = vector.broadcast %324 : vector<2x8x1xf32> to vector<2x8x128xf32>
    %326 = arith.mulf %321, %325 : vector<2x8x128xf32>
    %c0_113 = arith.constant 0 : index
    %c0_114 = arith.constant 0 : index
    %c0_115 = arith.constant 0 : index
    %327 = vector.load %arg17[%c0_113, %c0_114, %c0_115] : memref<2x8x128xf32, #tpu.memory_space<vmem>>, vector<2x8x128xf32>
    tpu.vector_store %arg17[%c0_113, %c0_114, %c0_115], %326 {strides = array<i32>} : memref<2x8x128xf32, #tpu.memory_space<vmem>>, vector<2x8x128xf32>,
    %328 = arith.truncf %326 : vector<2x8x128xf32> to vector<2x8x128xbf16>
    "tpu.trace_start"() <{level = 10 : i32, message = "bts,bsc->btc"}> : () -> ()
    %cst_116 = arith.constant dense<0.000000e+00> : vector<2x8x128xf32>
    %329 = tpu.matmul %328, %297, %cst_116 {dimension_numbers = #tpu.dot_dimension_numbers<[2], [1], [1], [2], [0, 0, 0, 1, 1, 2], [0], [0]>} : vector<2x8x128xbf16>, vector<2x128x128xbf16>, vector<2x8x128xf32> -> vector<2x8x128xf32>
    "tpu.trace_stop"() : () -> ()
    %330 = vector.extract_strided_slice %329 {offsets = [0, 0, 0], sizes = [2, 1, 128], strides = [1, 1, 1]} : vector<2x8x128xf32> to vector<2x1x128xf32>
    %331 = vector.shape_cast %330 : vector<2x1x128xf32> to vector<2x128xf32>
    %332 = vector.extract_strided_slice %329 {offsets = [0, 1, 0], sizes = [2, 1, 128], strides = [1, 1, 1]} : vector<2x8x128xf32> to vector<2x1x128xf32>
    %333 = vector.shape_cast %332 : vector<2x1x128xf32> to vector<2x128xf32>
    %334 = vector.extract_strided_slice %329 {offsets = [0, 2, 0], sizes = [2, 1, 128], strides = [1, 1, 1]} : vector<2x8x128xf32> to vector<2x1x128xf32>
    %335 = vector.shape_cast %334 : vector<2x1x128xf32> to vector<2x128xf32>
    %336 = vector.extract_strided_slice %329 {offsets = [0, 3, 0], sizes = [2, 1, 128], strides = [1, 1, 1]} : vector<2x8x128xf32> to vector<2x1x128xf32>
    %337 = vector.shape_cast %336 : vector<2x1x128xf32> to vector<2x128xf32>
    %338 = vector.extract_strided_slice %329 {offsets = [0, 4, 0], sizes = [2, 1, 128], strides = [1, 1, 1]} : vector<2x8x128xf32> to vector<2x1x128xf32>
    %339 = vector.shape_cast %338 : vector<2x1x128xf32> to vector<2x128xf32>
    %340 = vector.extract_strided_slice %329 {offsets = [0, 5, 0], sizes = [2, 1, 128], strides = [1, 1, 1]} : vector<2x8x128xf32> to vector<2x1x128xf32>
    %341 = vector.shape_cast %340 : vector<2x1x128xf32> to vector<2x128xf32>
    %342 = vector.extract_strided_slice %329 {offsets = [0, 6, 0], sizes = [2, 1, 128], strides = [1, 1, 1]} : vector<2x8x128xf32> to vector<2x1x128xf32>
    %343 = vector.shape_cast %342 : vector<2x1x128xf32> to vector<2x128xf32>
    %344 = vector.extract_strided_slice %329 {offsets = [0, 7, 0], sizes = [2, 1, 128], strides = [1, 1, 1]} : vector<2x8x128xf32> to vector<2x1x128xf32>
    %345 = vector.shape_cast %344 : vector<2x1x128xf32> to vector<2x128xf32>
    %346 = tpu.concatenate %331, %333, %335, %337, %339, %341, %343, %345 in 0 : vector<2x128xf32>, vector<2x128xf32>, vector<2x128xf32>, vector<2x128xf32>, vector<2x128xf32>, vector<2x128xf32>, vector<2x128xf32>, vector<2x128xf32> -> vector<16x128xf32>
    %347 = arith.truncf %346 : vector<16x128xf32> to vector<16x128xbf16>
    %c0_117 = arith.constant 0 : index
    %c0_118 = arith.constant 0 : index
    %348 = vector.load %arg8[%c0_117, %c0_118] : memref<128x128xbf16, #tpu.memory_space<vmem>>, vector<128x128xbf16>
    %cst_119 = arith.constant dense<0.000000e+00> : vector<16x128xf32>
    %349 = tpu.matmul %347, %348, %cst_119 {dimension_numbers = #tpu.dot_dimension_numbers<[1], [0], [0], [1], [0, 0, 1, 1], [], []>} : vector<16x128xbf16>, vector<128x128xbf16>, vector<16x128xf32> -> vector<16x128xf32>
    %c0_120 = arith.constant 0 : index
    %c0_121 = arith.constant 0 : index
    %350 = vector.load %arg9[%c0_120, %c0_121] : memref<128x128xbf16, #tpu.memory_space<vmem>>, vector<128x128xbf16>
    %cst_122 = arith.constant dense<0.000000e+00> : vector<16x128xf32>
    %351 = tpu.matmul %300, %350, %cst_122 {dimension_numbers = #tpu.dot_dimension_numbers<[1], [0], [0], [1], [0, 0, 1, 1], [], []>} : vector<16x128xbf16>, vector<128x128xbf16>, vector<16x128xf32> -> vector<16x128xf32>
    %352 = arith.addf %349, %351 : vector<16x128xf32>
    %c0_123 = arith.constant 0 : index
    %c0_124 = arith.constant 0 : index
    %353 = vector.load %arg10[%c0_123, %c0_124] : memref<1x128xf32, #tpu.memory_space<vmem>>, vector<1x128xf32>
    %354 = vector.broadcast %353 : vector<1x128xf32> to vector<16x128xf32>
    %355 = arith.addf %352, %354 : vector<16x128xf32>
    %356 = math.tanh %355 : vector<16x128xf32>
    %357 = arith.truncf %356 : vector<16x128xf32> to vector<16x128xbf16>
    %c0_125 = arith.constant 0 : index
    %c0_126 = arith.constant 0 : index
    %358 = vector.load %arg11[%c0_125, %c0_126] : memref<128x1024xbf16, #tpu.memory_space<vmem>>, vector<128x1024xbf16>
    %cst_127 = arith.constant dense<0.000000e+00> : vector<16x1024xf32>
    %359 = tpu.matmul %357, %358, %cst_127 {dimension_numbers = #tpu.dot_dimension_numbers<[1], [0], [0], [1], [0, 0, 1, 1], [], []>} : vector<16x128xbf16>, vector<128x1024xbf16>, vector<16x1024xf32> -> vector<16x1024xf32>
    %c0_128 = arith.constant 0 : index
    %c0_129 = arith.constant 0 : index
    %360 = vector.load %arg12[%c0_128, %c0_129] : memref<1x1024xf32, #tpu.memory_space<vmem>>, vector<1x1024xf32>
    %361 = vector.broadcast %360 : vector<1x1024xf32> to vector<16x1024xf32>
    %362 = arith.addf %359, %361 : vector<16x1024xf32>
    %c0_130 = arith.constant 0 : index
    %c0_131 = arith.constant 0 : index
    %363 = vector.load %arg14[%c0_130, %c0_131] : memref<16x1024xf32, #tpu.memory_space<vmem>>, vector<16x1024xf32>
    tpu.vector_store %arg14[%c0_130, %c0_131], %362 {strides = array<i32>} : memref<16x1024xf32, #tpu.memory_space<vmem>>, vector<16x1024xf32>,
    return
  }
}

</mosaic_0001>

<llo_original>
// kernel: tpu_custom_call.1
$region0: #{tpu_custom_call.1}
  #allocation0 [shape = 'u32[]', space=smem, size = 0x4, offset = 0x4, fixed_abs, tag = 'smem constant byte address 0x4 - core index']
  #allocation1 [shape = 'u32[144,128]{1,0:T(1,128)}', space=vmem, size = 0x12000, scoped, tag = 'internal scratch']
  #allocation2 [shape = 'bf16[2,128,128]{2,1,0:T(8,128)(2,1)}', space=vmem, size = 0x10000, scoped, tag = 'scratch operand']
  #allocation3 [shape = 'f32[8,2,128]{2,1,0:T(2,128)}', space=vmem, size = 0x2000, scoped, tag = 'scratch operand']
  #allocation4 [shape = 'f32[8,2,512]{2,1,0:T(2,128)}', space=vmem, size = 0x8000, scoped, tag = 'scratch operand']
  #allocation5 [shape = 's32[1]{0}', space=sflag, size = 0x4, scoped, tag = 'scratch operand']
  #allocation27 [shape = 's32[]', space=sflag, size = 0x4, offset = 0, fixed_abs, tag = 'sflag constant byte address 0x0 - dummy sync flag']
  #allocation28 [shape = 's32[]', space=sflag, size = 0x4, offset = 0, fixed_abs, tag = 'sflag constant byte address 0x0 - dummy sync flag']
  #allocation29 [shape = 'u32[]', space=smem, size = 0x4, offset = 0x44, fixed_abs, tag = 'smem constant byte address 0x44 - assertion arg 0']
  #allocation30 [shape = 'u32[]', space=smem, size = 0x4, offset = 0x48, fixed_abs, tag = 'smem constant byte address 0x48 - assertion arg 1']
  %s0 = inlined_call_operand.hbm [shape: bf16[8,2,128], index: 0, kind: input, shape index: {}]
  %s1 = inlined_call_operand.hbm [shape: f32[2,128], index: 1, kind: input, shape index: {}]
  %s2 = inlined_call_operand.vmem [shape: f32[2,128], index: 2, kind: input, shape index: {}]
  %s3 = inlined_call_operand.hbm [shape: f32[2,128], index: 3, kind: input, shape index: {}]
  %s4 = inlined_call_operand.hbm [shape: bf16[128,512], index: 4, kind: input, shape index: {}]
  %s5 = inlined_call_operand.hbm [shape: f32[128,512], index: 5, kind: input, shape index: {}]
  %s6 = inlined_call_operand.vmem [shape: f32[1,512], index: 6, kind: input, shape index: {}]
  %s7 = inlined_call_operand.hbm [shape: bf16[128,128], index: 7, kind: input, shape index: {}]
  %s8 = inlined_call_operand.hbm [shape: bf16[128,128], index: 8, kind: input, shape index: {}]
  %s9 = inlined_call_operand.hbm [shape: bf16[128,128], index: 9, kind: input, shape index: {}]
  %s10 = inlined_call_operand.vmem [shape: f32[1,128], index: 10, kind: input, shape index: {}]
  %s11 = inlined_call_operand.hbm [shape: bf16[128,1024], index: 11, kind: input, shape index: {}]
  %s12 = inlined_call_operand.vmem [shape: f32[1,1024], index: 12, kind: input, shape index: {}]
  %s13 = inlined_call_operand.hbm [shape: bf16[2,128,128], index: 13, kind: input, shape index: {}]
  %s14 = inlined_call_operand.hbm [shape: f32[16,1024], index: 14, kind: output, shape index: {0}]
  %s15 = inlined_call_operand.hbm [shape: f32[2,128], index: 15, kind: output, shape index: {1}]
  %s16 = inlined_call_operand.hbm [shape: f32[2,128], index: 16, kind: output, shape index: {2}]
  %s17 = inlined_call_operand.hbm [shape: f32[2,8,128], index: 17, kind: output, shape index: {3}]
  %18 = xla_tuple %s14, %s15, %s16, %s17
  %s19 = sld [smem:[#allocation0]]
  $region126: #{tpu_custom_call.1} parent=0
    _
  %s21 = ssub.s32 1, %s19
  %s22 = scalar_select 0, %s21, %s19
  $region1: #{tpu_custom_call.1} parent=0
    #allocation6 [shape = 'u8[4096]{0}', space=vmem, size = 0x1000, scoped, tag = 'input window, operand 0, single buffered']
    #allocation7 [shape = 's32[1]{0}', space=sflag, size = 0x4, scoped, tag = 'scoped memory for tpu_custom_call.1']
    #allocation8 [shape = 's32[1]{0}', space=sflag, size = 0x4, scoped, tag = 'scoped memory for tpu_custom_call.1']
    #allocation9 [shape = 'u8[1024]{0}', space=vmem, size = 0x400, scoped, tag = 'input window, operand 1, single buffered']
    #allocation10 [shape = 's32[1]{0}', space=sflag, size = 0x4, scoped, tag = 'scoped memory for tpu_custom_call.1']
    #allocation11 [shape = 'u8[1024]{0}', space=vmem, size = 0x400, scoped, tag = 'input window, operand 3, single buffered']
    #allocation12 [shape = 'u8[131072]{0}', space=vmem, size = 0x20000, scoped, tag = 'input window, operand 4, single buffered']
    #allocation13 [shape = 's32[1]{0}', space=sflag, size = 0x4, scoped, tag = 'scoped memory for tpu_custom_call.1']
    #allocation14 [shape = 'u8[262144]{0}', space=vmem, size = 0x40000, scoped, tag = 'input window, operand 5, single buffered']
    #allocation15 [shape = 'u8[32768]{0}', space=vmem, size = 0x8000, scoped, tag = 'input window, operand 7, single buffered']
    #allocation16 [shape = 's32[1]{0}', space=sflag, size = 0x4, scoped, tag = 'scoped memory for tpu_custom_call.1']
    #allocation17 [shape = 'u8[32768]{0}', space=vmem, size = 0x8000, scoped, tag = 'input window, operand 8, single buffered']
    #allocation18 [shape = 'u8[32768]{0}', space=vmem, size = 0x8000, scoped, tag = 'input window, operand 9, single buffered']
    #allocation19 [shape = 's32[1]{0}', space=sflag, size = 0x4, scoped, tag = 'scoped memory for tpu_custom_call.1']
    #allocation20 [shape = 'u8[262144]{0}', space=vmem, size = 0x40000, scoped, tag = 'input window, operand 11, single buffered']
    #allocation21 [shape = 'u8[65536]{0}', space=vmem, size = 0x10000, scoped, tag = 'output window, operand 0, single buffered']
    #allocation22 [shape = 'u8[1024]{0}', space=vmem, size = 0x400, scoped, tag = 'output window, operand 1, single buffered']
    #allocation23 [shape = 's32[1]{0}', space=sflag, size = 0x4, scoped, tag = 'scoped memory for tpu_custom_call.1']
    #allocation24 [shape = 'u8[1024]{0}', space=vmem, size = 0x400, scoped, tag = 'output window, operand 2, single buffered']
    #allocation25 [shape = 'u8[8192]{0}', space=vmem, size = 0x2000, scoped, tag = 'output window, operand 3, single buffered']
    #allocation26 [shape = 's32[1]{0}', space=sflag, size = 0x4, scoped, tag = 'scoped memory for tpu_custom_call.1']
    %23 = vsyncpa [#allocation7], 0
    %24 = vsyncpa [#allocation10], 0
    %25 = vsyncpa [#allocation13], 0
    %26 = vsyncpa [#allocation16], 0
    %27 = vsyncpa [#allocation19], 0
    %28 = vsyncpa [#allocation8], 0
    %29 = vsyncpa [#allocation23], 0
    %30 = vsyncpa [#allocation26], 0
    // Predicated region
    $region2: #{tpu_custom_call.1} parent=1 // pred_check
      _
    $region3: #{tpu_custom_call.1} parent=1 // pred_check_branch
      %32 = sbr.rel (0) target = $region5
    $region4: #{tpu_custom_call.1} parent=1 // pred_region
      %s34 = ssub.s32 128, 128
      %35 = vsyncadd [#allocation7], %s34
      %s36 = sshll.u32 [#allocation6], 4
      %s37 = int_to_ptr.vmem [resolvable:$true] %s36
      %42 = dma.hbm_to_vmem [thread:$0]  %s0, 128, %s37, [#allocation7], 16, 16, 1
    $region5: #{tpu_custom_call.1} parent=1 // pred_fallthru
      _
    // Predicated region
    $region6: #{tpu_custom_call.1} parent=1 // pred_check
      _
    $region7: #{tpu_custom_call.1} parent=1 // pred_check_branch
      %44 = sbr.rel (0) target = $region9
    $region8: #{tpu_custom_call.1} parent=1 // pred_region
      %s46 = ssub.s32 32, 32
      %47 = vsyncadd [#allocation10], %s46
      %s49 = sshll.u32 [#allocation9], 4
      %s50 = int_to_ptr.vmem [resolvable:$true] %s49
      %52 = dma.hbm_to_vmem [thread:$0]  %s1, 32, %s50, [#allocation10]
    $region9: #{tpu_custom_call.1} parent=1 // pred_fallthru
      _
    // Predicated region
    $region10: #{tpu_custom_call.1} parent=1 // pred_check
      _
    $region11: #{tpu_custom_call.1} parent=1 // pred_check_branch
      %54 = sbr.rel (0) target = $region13
    $region12: #{tpu_custom_call.1} parent=1 // pred_region
      _
    $region13: #{tpu_custom_call.1} parent=1 // pred_fallthru
      _
    // Predicated region
    $region14: #{tpu_custom_call.1} parent=1 // pred_check
      _
    $region15: #{tpu_custom_call.1} parent=1 // pred_check_branch
      %56 = sbr.rel (0) target = $region17
    $region16: #{tpu_custom_call.1} parent=1 // pred_region
      %s58 = ssub.s32 32, 32
      %59 = vsyncadd [#allocation10], %s58
      %s61 = sshll.u32 [#allocation11], 4
      %s62 = int_to_ptr.vmem [resolvable:$true] %s61
      %64 = dma.hbm_to_vmem [thread:$0]  %s3, 32, %s62, [#allocation10]
    $region17: #{tpu_custom_call.1} parent=1 // pred_fallthru
      _
    // Predicated region
    $region18: #{tpu_custom_call.1} parent=1 // pred_check
      _
    $region19: #{tpu_custom_call.1} parent=1 // pred_check_branch
      %66 = sbr.rel (0) target = $region21
    $region20: #{tpu_custom_call.1} parent=1 // pred_region
      %s68 = ssub.s32 4096, 4096
      %69 = vsyncadd [#allocation13], %s68
      %s70 = sshll.u32 [#allocation12], 4
      %s71 = int_to_ptr.vmem [resolvable:$true] %s70
      %76 = dma.hbm_to_vmem [thread:$0]  %s4, 4096, %s71, [#allocation13], 256, 256, 16
    $region21: #{tpu_custom_call.1} parent=1 // pred_fallthru
      _
    // Predicated region
    $region22: #{tpu_custom_call.1} parent=1 // pred_check
      _
    $region23: #{tpu_custom_call.1} parent=1 // pred_check_branch
      %78 = sbr.rel (0) target = $region25
    $region24: #{tpu_custom_call.1} parent=1 // pred_region
      %s80 = ssub.s32 8192, 8192
      %81 = vsyncadd [#allocation13], %s80
      %s82 = sshll.u32 [#allocation14], 4
      %s83 = int_to_ptr.vmem [resolvable:$true] %s82
      %88 = dma.hbm_to_vmem [thread:$0]  %s5, 8192, %s83, [#allocation13], 512, 512, 32
    $region25: #{tpu_custom_call.1} parent=1 // pred_fallthru
      _
    // Predicated region
    $region26: #{tpu_custom_call.1} parent=1 // pred_check
      _
    $region27: #{tpu_custom_call.1} parent=1 // pred_check_branch
      %90 = sbr.rel (0) target = $region29
    $region28: #{tpu_custom_call.1} parent=1 // pred_region
      _
    $region29: #{tpu_custom_call.1} parent=1 // pred_fallthru
      _
    // Predicated region
    $region30: #{tpu_custom_call.1} parent=1 // pred_check
      _
    $region31: #{tpu_custom_call.1} parent=1 // pred_check_branch
      %92 = sbr.rel (0) target = $region33
    $region32: #{tpu_custom_call.1} parent=1 // pred_region
      %s94 = ssub.s32 1024, 1024
      %95 = vsyncadd [#allocation16], %s94
      %s96 = sshll.u32 [#allocation15], 4
      %s97 = int_to_ptr.vmem [resolvable:$true] %s96
      %102 = dma.hbm_to_vmem [thread:$0]  %s7, 1024, %s97, [#allocation16], 64, 64, 4
    $region33: #{tpu_custom_call.1} parent=1 // pred_fallthru
      _
    // Predicated region
    $region34: #{tpu_custom_call.1} parent=1 // pred_check
      _
    $region35: #{tpu_custom_call.1} parent=1 // pred_check_branch
      %104 = sbr.rel (0) target = $region37
    $region36: #{tpu_custom_call.1} parent=1 // pred_region
      %s106 = ssub.s32 1024, 1024
      %107 = vsyncadd [#allocation16], %s106
      %s108 = sshll.u32 [#allocation17], 4
      %s109 = int_to_ptr.vmem [resolvable:$true] %s108
      %114 = dma.hbm_to_vmem [thread:$0]  %s8, 1024, %s109, [#allocation16], 64, 64, 4
    $region37: #{tpu_custom_call.1} parent=1 // pred_fallthru
      _
    // Predicated region
    $region38: #{tpu_custom_call.1} parent=1 // pred_check
      _
    $region39: #{tpu_custom_call.1} parent=1 // pred_check_branch
      %116 = sbr.rel (0) target = $region41
    $region40: #{tpu_custom_call.1} parent=1 // pred_region
      %s118 = ssub.s32 1024, 1024
      %119 = vsyncadd [#allocation19], %s118
      %s120 = sshll.u32 [#allocation18], 4
      %s121 = int_to_ptr.vmem [resolvable:$true] %s120
      %126 = dma.hbm_to_vmem [thread:$0]  %s9, 1024, %s121, [#allocation19], 64, 64, 4
    $region41: #{tpu_custom_call.1} parent=1 // pred_fallthru
      _
    // Predicated region
    $region42: #{tpu_custom_call.1} parent=1 // pred_check
      _
    $region43: #{tpu_custom_call.1} parent=1 // pred_check_branch
      %128 = sbr.rel (0) target = $region45
    $region44: #{tpu_custom_call.1} parent=1 // pred_region
      _
    $region45: #{tpu_custom_call.1} parent=1 // pred_fallthru
      _
    // Predicated region
    $region46: #{tpu_custom_call.1} parent=1 // pred_check
      _
    $region47: #{tpu_custom_call.1} parent=1 // pred_check_branch
      %130 = sbr.rel (0) target = $region49
    $region48: #{tpu_custom_call.1} parent=1 // pred_region
      %s132 = ssub.s32 8192, 8192
      %133 = vsyncadd [#allocation19], %s132
      %s134 = sshll.u32 [#allocation20], 4
      %s135 = int_to_ptr.vmem [resolvable:$true] %s134
      %140 = dma.hbm_to_vmem [thread:$0]  %s11, 8192, %s135, [#allocation19], 512, 512, 32
    $region49: #{tpu_custom_call.1} parent=1 // pred_fallthru
      _
    // Predicated region
    $region50: #{tpu_custom_call.1} parent=1 // pred_check
      _
    $region51: #{tpu_custom_call.1} parent=1 // pred_check_branch
      %142 = sbr.rel (0) target = $region53
    $region52: #{tpu_custom_call.1} parent=1 // pred_region
      _
    $region53: #{tpu_custom_call.1} parent=1 // pred_fallthru
      _
    // Predicated region
    $region54: #{tpu_custom_call.1} parent=1 // pred_check
      _
    $region55: #{tpu_custom_call.1} parent=1 // pred_check_branch
      %144 = sbr.rel (0) target = $region57
    $region56: #{tpu_custom_call.1} parent=1 // pred_region
      %145 = dma.done [#allocation7], 128
    $region57: #{tpu_custom_call.1} parent=1 // pred_fallthru
      _
    // Predicated region
    $region58: #{tpu_custom_call.1} parent=1 // pred_check
      _
    $region59: #{tpu_custom_call.1} parent=1 // pred_check_branch
      %147 = sbr.rel (0) target = $region61
    $region60: #{tpu_custom_call.1} parent=1 // pred_region
      %148 = dma.done [#allocation10], 32
    $region61: #{tpu_custom_call.1} parent=1 // pred_fallthru
      _
    // Predicated region
    $region62: #{tpu_custom_call.1} parent=1 // pred_check
      _
    $region63: #{tpu_custom_call.1} parent=1 // pred_check_branch
      %150 = sbr.rel (0) target = $region65
    $region64: #{tpu_custom_call.1} parent=1 // pred_region
      %151 = dma.done [#allocation10], 32
    $region65: #{tpu_custom_call.1} parent=1 // pred_fallthru
      _
    // Predicated region
    $region66: #{tpu_custom_call.1} parent=1 // pred_check
      _
    $region67: #{tpu_custom_call.1} parent=1 // pred_check_branch
      %153 = sbr.rel (0) target = $region69
    $region68: #{tpu_custom_call.1} parent=1 // pred_region
      %154 = dma.done [#allocation13], 4096
    $region69: #{tpu_custom_call.1} parent=1 // pred_fallthru
      _
    // Predicated region
    $region70: #{tpu_custom_call.1} parent=1 // pred_check
      _
    $region71: #{tpu_custom_call.1} parent=1 // pred_check_branch
      %156 = sbr.rel (0) target = $region73
    $region72: #{tpu_custom_call.1} parent=1 // pred_region
      %157 = dma.done [#allocation13], 8192
    $region73: #{tpu_custom_call.1} parent=1 // pred_fallthru
      _
    // Predicated region
    $region74: #{tpu_custom_call.1} parent=1 // pred_check
      _
    $region75: #{tpu_custom_call.1} parent=1 // pred_check_branch
      %159 = sbr.rel (0) target = $region77
    $region76: #{tpu_custom_call.1} parent=1 // pred_region
      %160 = dma.done [#allocation16], 1024
    $region77: #{tpu_custom_call.1} parent=1 // pred_fallthru
      _
    // Predicated region
    $region78: #{tpu_custom_call.1} parent=1 // pred_check
      _
    $region79: #{tpu_custom_call.1} parent=1 // pred_check_branch
      %162 = sbr.rel (0) target = $region81
    $region80: #{tpu_custom_call.1} parent=1 // pred_region
      %163 = dma.done [#allocation16], 1024
    $region81: #{tpu_custom_call.1} parent=1 // pred_fallthru
      _
    // Predicated region
    $region82: #{tpu_custom_call.1} parent=1 // pred_check
      _
    $region83: #{tpu_custom_call.1} parent=1 // pred_check_branch
      %165 = sbr.rel (0) target = $region85
    $region84: #{tpu_custom_call.1} parent=1 // pred_region
      %166 = dma.done [#allocation19], 1024
    $region85: #{tpu_custom_call.1} parent=1 // pred_fallthru
      _
    // Predicated region
    $region86: #{tpu_custom_call.1} parent=1 // pred_check
      _
    $region87: #{tpu_custom_call.1} parent=1 // pred_check_branch
      %168 = sbr.rel (0) target = $region89
    $region88: #{tpu_custom_call.1} parent=1 // pred_region
      %169 = dma.done [#allocation19], 8192
    $region89: #{tpu_custom_call.1} parent=1 // pred_fallthru
      _
    // Predicated region
    $region90: #{tpu_custom_call.1} parent=1 // pred_check
      _
    $region91: #{tpu_custom_call.1} parent=1 // pred_check_branch
      %172 = sbr.rel target = $region93
    $region92: #{tpu_custom_call.1} parent=1 // pred_region
      %173 = sst [smem:[#allocation29]] [#allocation28]
      %174 = sst [smem:[#allocation30]] [#allocation27]
    $region93: #{tpu_custom_call.1} parent=1 // pred_fallthru
      _
    %176 = shalt.err (0)
    %s178 = sshll.u32 [#allocation2], 4
    %s179 = int_to_ptr.vmem [resolvable:$true] %s178
    %181 = dma.hbm_to_vmem [thread:$0]  %s13, 2048, %s179, [#allocation5]
    %v182 = vld [vmem:[#allocation6] sm:$0x1]
    %v183 = vld [vmem:[#allocation6 + $0x1] sm:$0x1]
    %v184 = vld [vmem:[#allocation6 + $0x2] sm:$0x1]
    %v185 = vld [vmem:[#allocation6 + $0x3] sm:$0x1]
    %v186 = vld [vmem:[#allocation6 + $0x4] sm:$0x1]
    %v187 = vld [vmem:[#allocation6 + $0x5] sm:$0x1]
    %v188 = vld [vmem:[#allocation6 + $0x6] sm:$0x1]
    %v189 = vld [vmem:[#allocation6 + $0x7] sm:$0x1]
    %v190 = vld [vmem:[#allocation12] sm:$0xff]
    %v191 = vld [vmem:[#allocation12 + $0x8] sm:$0xff]
    %v192 = vld [vmem:[#allocation12 + $0x10] sm:$0xff]
    %v193 = vld [vmem:[#allocation12 + $0x18] sm:$0xff]
    %v194 = vld [vmem:[#allocation12 + $0x20] sm:$0xff]
    %v195 = vld [vmem:[#allocation12 + $0x28] sm:$0xff]
    %v196 = vld [vmem:[#allocation12 + $0x30] sm:$0xff]
    %v197 = vld [vmem:[#allocation12 + $0x38] sm:$0xff]
    %v198 = vld [vmem:[#allocation12 + $0x40] sm:$0xff]
    %v199 = vld [vmem:[#allocation12 + $0x48] sm:$0xff]
    %v200 = vld [vmem:[#allocation12 + $0x50] sm:$0xff]
    %v201 = vld [vmem:[#allocation12 + $0x58] sm:$0xff]
    %v202 = vld [vmem:[#allocation12 + $0x60] sm:$0xff]
    %v203 = vld [vmem:[#allocation12 + $0x68] sm:$0xff]
    %v204 = vld [vmem:[#allocation12 + $0x70] sm:$0xff]
    %v205 = vld [vmem:[#allocation12 + $0x78] sm:$0xff]
    %v206 = vld [vmem:[#allocation12 + $0x80] sm:$0xff]
    %v207 = vld [vmem:[#allocation12 + $0x88] sm:$0xff]
    %v208 = vld [vmem:[#allocation12 + $0x90] sm:$0xff]
    %v209 = vld [vmem:[#allocation12 + $0x98] sm:$0xff]
    %v210 = vld [vmem:[#allocation12 + $0xa0] sm:$0xff]
    %v211 = vld [vmem:[#allocation12 + $0xa8] sm:$0xff]
    %v212 = vld [vmem:[#allocation12 + $0xb0] sm:$0xff]
    %v213 = vld [vmem:[#allocation12 + $0xb8] sm:$0xff]
    %v214 = vld [vmem:[#allocation12 + $0xc0] sm:$0xff]
    %v215 = vld [vmem:[#allocation12 + $0xc8] sm:$0xff]
    %v216 = vld [vmem:[#allocation12 + $0xd0] sm:$0xff]
    %v217 = vld [vmem:[#allocation12 + $0xd8] sm:$0xff]
    %v218 = vld [vmem:[#allocation12 + $0xe0] sm:$0xff]
    %v219 = vld [vmem:[#allocation12 + $0xe8] sm:$0xff]
    %v220 = vld [vmem:[#allocation12 + $0xf0] sm:$0xff]
    %v221 = vld [vmem:[#allocation12 + $0xf8] sm:$0xff]
    %v222 = vld [vmem:[%s6] sm:$0xf]
    %v224 = vlaneseq
    %v225 = vshrl.u32 %v224, 7
    %v226 = vsub.s32 0, %v225
    %v227 = vrot.slane %v222, %v226
    %v228 = vlaneseq
    %v229 = vshrl.u32 %v228, 7
    %v230 = vsub.s32 1, %v229
    %v231 = vrot.slane %v222, %v230
    %v232 = vlaneseq
    %v233 = vshrl.u32 %v232, 7
    %v234 = vsub.s32 2, %v233
    %v235 = vrot.slane %v222, %v234
    %v236 = vlaneseq
    %v237 = vshrl.u32 %v236, 7
    %v238 = vsub.s32 3, %v237
    %v239 = vrot.slane %v222, %v238
    %v252 = vcombine.low %v182, %v183
    %v253 = vcombine.low %v184, %v185
    %v254 = vcombine.low %v186, %v187
    %v255 = vcombine.low %v188, %v189
    %v257 = vunpack.c.l.s4 1966171168
    %v258 = vunpack.c.0.s8 %v257
    %v259 = vlaneseq
    %v260 = vshrl.u32 %v259, 7
    %v261 = vsub.s32 %v258, %v260
    %v262 = vrot.slane %v252, %v261
    %v264 = vunpack.c.l.s4 1966171168
    %v265 = vunpack.c.0.s8 %v264
    %v266 = vlaneseq
    %v267 = vshrl.u32 %v266, 7
    %v268 = vsub.s32 %v265, %v267
    %v269 = vrot.slane %v253, %v268
    %v271 = vunpack.c.l.s4 1966171168
    %v272 = vunpack.c.0.s8 %v271
    %v273 = vlaneseq
    %v274 = vshrl.u32 %v273, 7
    %v275 = vsub.s32 %v272, %v274
    %v276 = vrot.slane %v254, %v275
    %v278 = vunpack.c.l.s4 1966171168
    %v279 = vunpack.c.0.s8 %v278
    %v280 = vlaneseq
    %v281 = vshrl.u32 %v280, 7
    %v282 = vsub.s32 %v279, %v281
    %v283 = vrot.slane %v255, %v282
    %v284 = vcombine.low %v262, %v269
    %v285 = vcombine.low %v276, %v283
    %v287 = vunpack.c.l.s4 1966171168
    %v288 = vunpack.c.0.s8 %v287
    %v289 = vlaneseq
    %v290 = vshrl.u32 %v289, 7
    %v291 = vsub.s32 %v288, %v290
    %v292 = vrot.slane %v284, %v291
    %v294 = vunpack.c.l.s4 1966171168
    %v295 = vunpack.c.0.s8 %v294
    %v296 = vlaneseq
    %v297 = vshrl.u32 %v296, 7
    %v298 = vsub.s32 %v295, %v297
    %v299 = vrot.slane %v285, %v298
    %v300 = vcombine.low %v292, %v299
    %v334 = vunpack.c.l.b16 %v190
    %v335 = vunpack.c.h.b16 %v190
    %v336 = vunpack.c.l.b16 %v191
    %v337 = vunpack.c.h.b16 %v191
    %v338 = vunpack.c.l.b16 %v192
    %v339 = vunpack.c.h.b16 %v192
    %v340 = vunpack.c.l.b16 %v193
    %v341 = vunpack.c.h.b16 %v193
    %v342 = vunpack.c.l.b16 %v194
    %v343 = vunpack.c.h.b16 %v194
    %v344 = vunpack.c.l.b16 %v195
    %v345 = vunpack.c.h.b16 %v195
    %v346 = vunpack.c.l.b16 %v196
    %v347 = vunpack.c.h.b16 %v196
    %v348 = vunpack.c.l.b16 %v197
    %v349 = vunpack.c.h.b16 %v197
    %v350 = vunpack.c.l.b16 %v198
    %v351 = vunpack.c.h.b16 %v198
    %v352 = vunpack.c.l.b16 %v199
    %v353 = vunpack.c.h.b16 %v199
    %v354 = vunpack.c.l.b16 %v200
    %v355 = vunpack.c.h.b16 %v200
    %v356 = vunpack.c.l.b16 %v201
    %v357 = vunpack.c.h.b16 %v201
    %v358 = vunpack.c.l.b16 %v202
    %v359 = vunpack.c.h.b16 %v202
    %v360 = vunpack.c.l.b16 %v203
    %v361 = vunpack.c.h.b16 %v203
    %v362 = vunpack.c.l.b16 %v204
    %v363 = vunpack.c.h.b16 %v204
    %v364 = vunpack.c.l.b16 %v205
    %v365 = vunpack.c.h.b16 %v205
    %v366 = vunpack.c.l.b16 %v206
    %v367 = vunpack.c.h.b16 %v206
    %v368 = vunpack.c.l.b16 %v207
    %v369 = vunpack.c.h.b16 %v207
    %v370 = vunpack.c.l.b16 %v208
    %v371 = vunpack.c.h.b16 %v208
    %v372 = vunpack.c.l.b16 %v209
    %v373 = vunpack.c.h.b16 %v209
    %v374 = vunpack.c.l.b16 %v210
    %v375 = vunpack.c.h.b16 %v210
    %v376 = vunpack.c.l.b16 %v211
    %v377 = vunpack.c.h.b16 %v211
    %v378 = vunpack.c.l.b16 %v212
    %v379 = vunpack.c.h.b16 %v212
    %v380 = vunpack.c.l.b16 %v213
    %v381 = vunpack.c.h.b16 %v213
    %v382 = vunpack.c.l.b16 %v214
    %v383 = vunpack.c.h.b16 %v214
    %v384 = vunpack.c.l.b16 %v215
    %v385 = vunpack.c.h.b16 %v215
    %v386 = vunpack.c.l.b16 %v216
    %v387 = vunpack.c.h.b16 %v216
    %v388 = vunpack.c.l.b16 %v217
    %v389 = vunpack.c.h.b16 %v217
    %v390 = vunpack.c.l.b16 %v218
    %v391 = vunpack.c.h.b16 %v218
    %v392 = vunpack.c.l.b16 %v219
    %v393 = vunpack.c.h.b16 %v219
    %v394 = vunpack.c.l.b16 %v220
    %v395 = vunpack.c.h.b16 %v220
    %v396 = vunpack.c.l.b16 %v221
    %v397 = vunpack.c.h.b16 %v221
    %v398 = vpack.c.b16 %v338, %v334
    %v399 = vpack.c.b16 %v339, %v335
    %v400 = vpack.c.b16 %v340, %v336
    %v401 = vpack.c.b16 %v341, %v337
    %v402 = vpack.c.b16 %v346, %v342
    %v403 = vpack.c.b16 %v347, %v343
    %v404 = vpack.c.b16 %v348, %v344
    %v405 = vpack.c.b16 %v349, %v345
    %v406 = vpack.c.b16 %v354, %v350
    %v407 = vpack.c.b16 %v355, %v351
    %v408 = vpack.c.b16 %v356, %v352
    %v409 = vpack.c.b16 %v357, %v353
    %v410 = vpack.c.b16 %v362, %v358
    %v411 = vpack.c.b16 %v363, %v359
    %v412 = vpack.c.b16 %v364, %v360
    %v413 = vpack.c.b16 %v365, %v361
    %v414 = vpack.c.b16 %v370, %v366
    %v415 = vpack.c.b16 %v371, %v367
    %v416 = vpack.c.b16 %v372, %v368
    %v417 = vpack.c.b16 %v373, %v369
    %v418 = vpack.c.b16 %v378, %v374
    %v419 = vpack.c.b16 %v379, %v375
    %v420 = vpack.c.b16 %v380, %v376
    %v421 = vpack.c.b16 %v381, %v377
    %v422 = vpack.c.b16 %v386, %v382
    %v423 = vpack.c.b16 %v387, %v383
    %v424 = vpack.c.b16 %v388, %v384
    %v425 = vpack.c.b16 %v389, %v385
    %v426 = vpack.c.b16 %v394, %v390
    %v427 = vpack.c.b16 %v395, %v391
    %v428 = vpack.c.b16 %v396, %v392
    %v429 = vpack.c.b16 %v397, %v393
    %462 = vmatprep.subr.bf16.mxu0 %v427
    %463 = vmatpush1.bf16.msra.mxu0 %v426
    %464 = vmatprep.subr.bf16.mxu0 %v423
    %465 = vmatpush1.bf16.msra.mxu0 %v422
    %466 = vmatprep.subr.bf16.mxu0 %v419
    %467 = vmatpush1.bf16.msra.mxu0 %v418
    %468 = vmatprep.subr.bf16.mxu0 %v415
    %469 = vmatpush1.bf16.msra.mxu0 %v414
    %470 = vmatprep.subr.bf16.mxu0 %v411
    %471 = vmatpush1.bf16.msra.mxu0 %v410
    %472 = vmatprep.subr.bf16.mxu0 %v407
    %473 = vmatpush1.bf16.msra.mxu0 %v406
    %474 = vmatprep.subr.bf16.mxu0 %v403
    %475 = vmatpush1.bf16.msra.mxu0 %v402
    %476 = vmatprep.subr.bf16.mxu0 %v399
    %477 = vmatpush1.bf16.msra.mxu0 %v398
    %478 = vmatprep.subr.bf16.mxu0 0
    %479 = vmatpush2.bf16.msra.mxu0 0
    %480 = vmatprep.subr.bf16.mxu0 0
    %481 = vmatpush2.bf16.msra.mxu0 0
    %482 = vmatprep.subr.bf16.mxu0 0
    %483 = vmatpush2.bf16.msra.mxu0 0
    %484 = vmatprep.subr.bf16.mxu0 0
    %485 = vmatpush2.bf16.msra.mxu0 0
    %486 = vmatprep.subr.bf16.mxu0 0
    %487 = vmatpush2.bf16.msra.mxu0 0
    %488 = vmatprep.subr.bf16.mxu0 0
    %489 = vmatpush2.bf16.msra.mxu0 0
    %490 = vmatprep.subr.bf16.mxu0 0
    %491 = vmatpush2.bf16.msra.mxu0 0
    %492 = vmatprep.subr.bf16.mxu0 0
    %493 = vmatpush2.bf16.msra.mxu0 0
    %494 = vmatprep.mubr.bf16.mxu0 0
    %495 = vmatmul.mubr.bf16.gmra.mxu0 %v300
    %v496 = vpop.f32.mrf.mxu0
    %v497 = vadd.f32 %v227, %v496
    %v498 = vpop.f32.mrf.mxu0
    %v499 = vadd.f32 %v231, %v498
    %v500 = vpop.f32.mrf.mxu0
    %v501 = vadd.f32 %v227, %v500
    %v502 = vpop.f32.mrf.mxu0
    %v503 = vadd.f32 %v231, %v502
    %504 = vdwg.mxu0
    %505 = vmatprep.subr.bf16.mxu0 %v429
    %506 = vmatpush1.bf16.msra.mxu0 %v428
    %507 = vmatprep.subr.bf16.mxu0 %v425
    %508 = vmatpush1.bf16.msra.mxu0 %v424
    %509 = vmatprep.subr.bf16.mxu0 %v421
    %510 = vmatpush1.bf16.msra.mxu0 %v420
    %511 = vmatprep.subr.bf16.mxu0 %v417
    %512 = vmatpush1.bf16.msra.mxu0 %v416
    %513 = vmatprep.subr.bf16.mxu0 %v413
    %514 = vmatpush1.bf16.msra.mxu0 %v412
    %515 = vmatprep.subr.bf16.mxu0 %v409
    %516 = vmatpush1.bf16.msra.mxu0 %v408
    %517 = vmatprep.subr.bf16.mxu0 %v405
    %518 = vmatpush1.bf16.msra.mxu0 %v404
    %519 = vmatprep.subr.bf16.mxu0 %v401
    %520 = vmatpush1.bf16.msra.mxu0 %v400
    %521 = vmatprep.subr.bf16.mxu0 0
    %522 = vmatpush2.bf16.msra.mxu0 0
    %523 = vmatprep.subr.bf16.mxu0 0
    %524 = vmatpush2.bf16.msra.mxu0 0
    %525 = vmatprep.subr.bf16.mxu0 0
    %526 = vmatpush2.bf16.msra.mxu0 0
    %527 = vmatprep.subr.bf16.mxu0 0
    %528 = vmatpush2.bf16.msra.mxu0 0
    %529 = vmatprep.subr.bf16.mxu0 0
    %530 = vmatpush2.bf16.msra.mxu0 0
    %531 = vmatprep.subr.bf16.mxu0 0
    %532 = vmatpush2.bf16.msra.mxu0 0
    %533 = vmatprep.subr.bf16.mxu0 0
    %534 = vmatpush2.bf16.msra.mxu0 0
    %535 = vmatprep.subr.bf16.mxu0 0
    %536 = vmatpush2.bf16.msra.mxu0 0
    %537 = vmatprep.mubr.bf16.mxu0 0
    %538 = vmatmul.mubr.bf16.gmra.mxu0 %v300
    %v539 = vpop.f32.mrf.mxu0
    %v540 = vadd.f32 %v235, %v539
    %v541 = vpop.f32.mrf.mxu0
    %v542 = vadd.f32 %v239, %v541
    %v543 = vpop.f32.mrf.mxu0
    %v544 = vadd.f32 %v235, %v543
    %v545 = vpop.f32.mrf.mxu0
    %v546 = vadd.f32 %v239, %v545
    %547 = vdwg.mxu0
    %v556 = vcombine.low %v497, %v499
    %v557 = vcombine.high %v497, %v499
    %v558 = vcombine.low %v540, %v542
    %v559 = vcombine.high %v540, %v542
    %v561 = vunpack.c.l.s4 1983009808
    %v562 = vunpack.c.0.s8 %v561
    %v563 = vlaneseq
    %v564 = vshrl.u32 %v563, 7
    %v565 = vsub.s32 %v562, %v564
    %v566 = vrot.slane %v556, %v565
    %v568 = vunpack.c.l.s4 1983009808
    %v569 = vunpack.c.0.s8 %v568
    %v570 = vlaneseq
    %v571 = vshrl.u32 %v570, 7
    %v572 = vsub.s32 %v569, %v571
    %v573 = vrot.slane %v557, %v572
    %v575 = vunpack.c.l.s4 1983009808
    %v576 = vunpack.c.0.s8 %v575
    %v577 = vlaneseq
    %v578 = vshrl.u32 %v577, 7
    %v579 = vsub.s32 %v576, %v578
    %v580 = vrot.slane %v558, %v579
    %v582 = vunpack.c.l.s4 1983009808
    %v583 = vunpack.c.0.s8 %v582
    %v584 = vlaneseq
    %v585 = vshrl.u32 %v584, 7
    %v586 = vsub.s32 %v583, %v585
    %v587 = vrot.slane %v559, %v586
    %v588 = vcombine.low %v566, %v580
    %v589 = vcombine.high %v566, %v580
    %v590 = vcombine.low %v573, %v587
    %v591 = vcombine.high %v573, %v587
    %v592 = vcombine.low %v501, %v503
    %v593 = vcombine.high %v501, %v503
    %v594 = vcombine.low %v544, %v546
    %v595 = vcombine.high %v544, %v546
    %v597 = vunpack.c.l.s4 1983009808
    %v598 = vunpack.c.0.s8 %v597
    %v599 = vlaneseq
    %v600 = vshrl.u32 %v599, 7
    %v601 = vsub.s32 %v598, %v600
    %v602 = vrot.slane %v592, %v601
    %v604 = vunpack.c.l.s4 1983009808
    %v605 = vunpack.c.0.s8 %v604
    %v606 = vlaneseq
    %v607 = vshrl.u32 %v606, 7
    %v608 = vsub.s32 %v605, %v607
    %v609 = vrot.slane %v593, %v608
    %v611 = vunpack.c.l.s4 1983009808
    %v612 = vunpack.c.0.s8 %v611
    %v613 = vlaneseq
    %v614 = vshrl.u32 %v613, 7
    %v615 = vsub.s32 %v612, %v614
    %v616 = vrot.slane %v594, %v615
    %v618 = vunpack.c.l.s4 1983009808
    %v619 = vunpack.c.0.s8 %v618
    %v620 = vlaneseq
    %v621 = vshrl.u32 %v620, 7
    %v622 = vsub.s32 %v619, %v621
    %v623 = vrot.slane %v595, %v622
    %v624 = vcombine.low %v602, %v616
    %v625 = vcombine.high %v602, %v616
    %v626 = vcombine.low %v609, %v623
    %v627 = vcombine.high %v609, %v623
    %636 = vst [vmem:[#allocation4] sm:$0xff] %v588
    %637 = vst [vmem:[#allocation4 + $0x8] sm:$0xff] %v589
    %638 = vst [vmem:[#allocation4 + $0x10] sm:$0xff] %v590
    %639 = vst [vmem:[#allocation4 + $0x18] sm:$0xff] %v591
    %640 = vst [vmem:[#allocation4 + $0x20] sm:$0xff] %v624
    %641 = vst [vmem:[#allocation4 + $0x28] sm:$0xff] %v625
    %642 = vst [vmem:[#allocation4 + $0x30] sm:$0xff] %v626
    %643 = vst [vmem:[#allocation4 + $0x38] sm:$0xff] %v627
    %v644 = vld [vmem:[%s2] sm:$0x3]
    %v645 = vld [vmem:[#allocation11] sm:$0x3]
    %v646 = vld [vmem:[#allocation4] sm:$0xff]
    %v647 = vld [vmem:[#allocation14] sm:$0xff]
    %v648 = vld [vmem:[#allocation14 + $0x8] sm:$0xff]
    %v649 = vld [vmem:[#allocation14 + $0x10] sm:$0xff]
    %v650 = vld [vmem:[#allocation14 + $0x18] sm:$0xff]
    %v651 = vld [vmem:[#allocation14 + $0x20] sm:$0xff]
    %v652 = vld [vmem:[#allocation14 + $0x28] sm:$0xff]
    %v653 = vld [vmem:[#allocation14 + $0x30] sm:$0xff]
    %v654 = vld [vmem:[#allocation14 + $0x38] sm:$0xff]
    %v655 = vld [vmem:[#allocation14 + $0x40] sm:$0xff]
    %v656 = vld [vmem:[#allocation14 + $0x48] sm:$0xff]
    %v657 = vld [vmem:[#allocation14 + $0x50] sm:$0xff]
    %v658 = vld [vmem:[#allocation14 + $0x58] sm:$0xff]
    %v659 = vld [vmem:[#allocation14 + $0x60] sm:$0xff]
    %v660 = vld [vmem:[#allocation14 + $0x68] sm:$0xff]
    %v661 = vld [vmem:[#allocation14 + $0x70] sm:$0xff]
    %v662 = vld [vmem:[#allocation14 + $0x78] sm:$0xff]
    %v663 = vld [vmem:[#allocation14 + $0x80] sm:$0xff]
    %v664 = vld [vmem:[#allocation14 + $0x88] sm:$0xff]
    %v665 = vld [vmem:[#allocation14 + $0x90] sm:$0xff]
    %v666 = vld [vmem:[#allocation14 + $0x98] sm:$0xff]
    %v667 = vld [vmem:[#allocation14 + $0xa0] sm:$0xff]
    %v668 = vld [vmem:[#allocation14 + $0xa8] sm:$0xff]
    %v669 = vld [vmem:[#allocation14 + $0xb0] sm:$0xff]
    %v670 = vld [vmem:[#allocation14 + $0xb8] sm:$0xff]
    %v671 = vld [vmem:[#allocation14 + $0xc0] sm:$0xff]
    %v672 = vld [vmem:[#allocation14 + $0xc8] sm:$0xff]
    %v673 = vld [vmem:[#allocation14 + $0xd0] sm:$0xff]
    %v674 = vld [vmem:[#allocation14 + $0xd8] sm:$0xff]
    %v675 = vld [vmem:[#allocation14 + $0xe0] sm:$0xff]
    %v676 = vld [vmem:[#allocation14 + $0xe8] sm:$0xff]
    %v677 = vld [vmem:[#allocation14 + $0xf0] sm:$0xff]
    %v678 = vld [vmem:[#allocation14 + $0xf8] sm:$0xff]
    %v679 = vld [vmem:[#allocation14 + $0x100] sm:$0xff]
    %v680 = vld [vmem:[#allocation14 + $0x108] sm:$0xff]
    %v681 = vld [vmem:[#allocation14 + $0x110] sm:$0xff]
    %v682 = vld [vmem:[#allocation14 + $0x118] sm:$0xff]
    %v683 = vld [vmem:[#allocation14 + $0x120] sm:$0xff]
    %v684 = vld [vmem:[#allocation14 + $0x128] sm:$0xff]
    %v685 = vld [vmem:[#allocation14 + $0x130] sm:$0xff]
    %v686 = vld [vmem:[#allocation14 + $0x138] sm:$0xff]
    %v687 = vld [vmem:[#allocation14 + $0x140] sm:$0xff]
    %v688 = vld [vmem:[#allocation14 + $0x148] sm:$0xff]
    %v689 = vld [vmem:[#allocation14 + $0x150] sm:$0xff]
    %v690 = vld [vmem:[#allocation14 + $0x158] sm:$0xff]
    %v691 = vld [vmem:[#allocation14 + $0x160] sm:$0xff]
    %v692 = vld [vmem:[#allocation14 + $0x168] sm:$0xff]
    %v693 = vld [vmem:[#allocation14 + $0x170] sm:$0xff]
    %v694 = vld [vmem:[#allocation14 + $0x178] sm:$0xff]
    %v695 = vld [vmem:[#allocation14 + $0x180] sm:$0xff]
    %v696 = vld [vmem:[#allocation14 + $0x188] sm:$0xff]
    %v697 = vld [vmem:[#allocation14 + $0x190] sm:$0xff]
    %v698 = vld [vmem:[#allocation14 + $0x198] sm:$0xff]
    %v699 = vld [vmem:[#allocation14 + $0x1a0] sm:$0xff]
    %v700 = vld [vmem:[#allocation14 + $0x1a8] sm:$0xff]
    %v701 = vld [vmem:[#allocation14 + $0x1b0] sm:$0xff]
    %v702 = vld [vmem:[#allocation14 + $0x1b8] sm:$0xff]
    %v703 = vld [vmem:[#allocation14 + $0x1c0] sm:$0xff]
    %v704 = vld [vmem:[#allocation14 + $0x1c8] sm:$0xff]
    %v705 = vld [vmem:[#allocation14 + $0x1d0] sm:$0xff]
    %v706 = vld [vmem:[#allocation14 + $0x1d8] sm:$0xff]
    %v707 = vld [vmem:[#allocation14 + $0x1e0] sm:$0xff]
    %v708 = vld [vmem:[#allocation14 + $0x1e8] sm:$0xff]
    %v709 = vld [vmem:[#allocation14 + $0x1f0] sm:$0xff]
    %v710 = vld [vmem:[#allocation14 + $0x1f8] sm:$0xff]
    %711 = vmatprep.subr.mxu0 %v708
    %712 = vmatpush1.msra.mxu0 %v707
    %713 = vmatprep.subr.mxu0 %v704
    %714 = vmatpush1.msra.mxu0 %v703
    %715 = vmatprep.subr.mxu0 %v700
    %716 = vmatpush1.msra.mxu0 %v699
    %717 = vmatprep.subr.mxu0 %v696
    %718 = vmatpush1.msra.mxu0 %v695
    %719 = vmatprep.subr.mxu0 %v692
    %720 = vmatpush1.msra.mxu0 %v691
    %721 = vmatprep.subr.mxu0 %v688
    %722 = vmatpush1.msra.mxu0 %v687
    %723 = vmatprep.subr.mxu0 %v684
    %724 = vmatpush1.msra.mxu0 %v683
    %725 = vmatprep.subr.mxu0 %v680
    %726 = vmatpush1.msra.mxu0 %v679
    %727 = vmatprep.subr.mxu0 %v676
    %728 = vmatpush1.msra.mxu0 %v675
    %729 = vmatprep.subr.mxu0 %v672
    %730 = vmatpush1.msra.mxu0 %v671
    %731 = vmatprep.subr.mxu0 %v668
    %732 = vmatpush1.msra.mxu0 %v667
    %733 = vmatprep.subr.mxu0 %v664
    %734 = vmatpush1.msra.mxu0 %v663
    %735 = vmatprep.subr.mxu0 %v660
    %736 = vmatpush1.msra.mxu0 %v659
    %737 = vmatprep.subr.mxu0 %v656
    %738 = vmatpush1.msra.mxu0 %v655
    %739 = vmatprep.subr.mxu0 %v652
    %740 = vmatpush1.msra.mxu0 %v651
    %741 = vmatprep.subr.mxu0 %v648
    %742 = vmatpush1.msra.mxu0 %v647
    %743 = vmatprep.subr.mxu0 0.0
    %744 = vmatpush2.msra.mxu0 0.0
    %745 = vmatprep.subr.mxu0 0.0
    %746 = vmatpush2.msra.mxu0 0.0
    %747 = vmatprep.subr.mxu0 0.0
    %748 = vmatpush2.msra.mxu0 0.0
    %749 = vmatprep.subr.mxu0 0.0
    %750 = vmatpush2.msra.mxu0 0.0
    %751 = vmatprep.subr.mxu0 0.0
    %752 = vmatpush2.msra.mxu0 0.0
    %753 = vmatprep.subr.mxu0 0.0
    %754 = vmatpush2.msra.mxu0 0.0
    %755 = vmatprep.subr.mxu0 0.0
    %756 = vmatpush2.msra.mxu0 0.0
    %757 = vmatprep.subr.mxu0 0.0
    %758 = vmatpush2.msra.mxu0 0.0
    %759 = vmatprep.subr.mxu0 0.0
    %760 = vmatpush2.msra.mxu0 0.0
    %761 = vmatprep.subr.mxu0 0.0
    %762 = vmatpush2.msra.mxu0 0.0
    %763 = vmatprep.subr.mxu0 0.0
    %764 = vmatpush2.msra.mxu0 0.0
    %765 = vmatprep.subr.mxu0 0.0
    %766 = vmatpush2.msra.mxu0 0.0
    %767 = vmatprep.subr.mxu0 0.0
    %768 = vmatpush2.msra.mxu0 0.0
    %769 = vmatprep.subr.mxu0 0.0
    %770 = vmatpush2.msra.mxu0 0.0
    %771 = vmatprep.subr.mxu0 0.0
    %772 = vmatpush2.msra.mxu0 0.0
    %773 = vmatprep.subr.mxu0 0.0
    %774 = vmatpush2.msra.mxu0 0.0
    %775 = vmatprep.mubr.f32.mxu0 0.0
    %776 = vmatmul.mubr.f32.gmra.mxu0 %v644
    %v777 = vpop.f32.mrf.mxu0
    %v778 = vadd.f32 0.0, %v777
    %v779 = vpop.f32.mrf.mxu0
    %v780 = vadd.f32 0.0, %v779
    %781 = vdwg.mxu0
    %782 = vmatprep.subr.mxu0 %v710
    %783 = vmatpush1.msra.mxu0 %v709
    %784 = vmatprep.subr.mxu0 %v706
    %785 = vmatpush1.msra.mxu0 %v705
    %786 = vmatprep.subr.mxu0 %v702
    %787 = vmatpush1.msra.mxu0 %v701
    %788 = vmatprep.subr.mxu0 %v698
    %789 = vmatpush1.msra.mxu0 %v697
    %790 = vmatprep.subr.mxu0 %v694
    %791 = vmatpush1.msra.mxu0 %v693
    %792 = vmatprep.subr.mxu0 %v690
    %793 = vmatpush1.msra.mxu0 %v689
    %794 = vmatprep.subr.mxu0 %v686
    %795 = vmatpush1.msra.mxu0 %v685
    %796 = vmatprep.subr.mxu0 %v682
    %797 = vmatpush1.msra.mxu0 %v681
    %798 = vmatprep.subr.mxu0 %v678
    %799 = vmatpush1.msra.mxu0 %v677
    %800 = vmatprep.subr.mxu0 %v674
    %801 = vmatpush1.msra.mxu0 %v673
    %802 = vmatprep.subr.mxu0 %v670
    %803 = vmatpush1.msra.mxu0 %v669
    %804 = vmatprep.subr.mxu0 %v666
    %805 = vmatpush1.msra.mxu0 %v665
    %806 = vmatprep.subr.mxu0 %v662
    %807 = vmatpush1.msra.mxu0 %v661
    %808 = vmatprep.subr.mxu0 %v658
    %809 = vmatpush1.msra.mxu0 %v657
    %810 = vmatprep.subr.mxu0 %v654
    %811 = vmatpush1.msra.mxu0 %v653
    %812 = vmatprep.subr.mxu0 %v650
    %813 = vmatpush1.msra.mxu0 %v649
    %814 = vmatprep.subr.mxu0 0.0
    %815 = vmatpush2.msra.mxu0 0.0
    %816 = vmatprep.subr.mxu0 0.0
    %817 = vmatpush2.msra.mxu0 0.0
    %818 = vmatprep.subr.mxu0 0.0
    %819 = vmatpush2.msra.mxu0 0.0
    %820 = vmatprep.subr.mxu0 0.0
    %821 = vmatpush2.msra.mxu0 0.0
    %822 = vmatprep.subr.mxu0 0.0
    %823 = vmatpush2.msra.mxu0 0.0
    %824 = vmatprep.subr.mxu0 0.0
    %825 = vmatpush2.msra.mxu0 0.0
    %826 = vmatprep.subr.mxu0 0.0
    %827 = vmatpush2.msra.mxu0 0.0
    %828 = vmatprep.subr.mxu0 0.0
    %829 = vmatpush2.msra.mxu0 0.0
    %830 = vmatprep.subr.mxu0 0.0
    %831 = vmatpush2.msra.mxu0 0.0
    %832 = vmatprep.subr.mxu0 0.0
    %833 = vmatpush2.msra.mxu0 0.0
    %834 = vmatprep.subr.mxu0 0.0
    %835 = vmatpush2.msra.mxu0 0.0
    %836 = vmatprep.subr.mxu0 0.0
    %837 = vmatpush2.msra.mxu0 0.0
    %838 = vmatprep.subr.mxu0 0.0
    %839 = vmatpush2.msra.mxu0 0.0
    %840 = vmatprep.subr.mxu0 0.0
    %841 = vmatpush2.msra.mxu0 0.0
    %842 = vmatprep.subr.mxu0 0.0
    %843 = vmatpush2.msra.mxu0 0.0
    %844 = vmatprep.subr.mxu0 0.0
    %845 = vmatpush2.msra.mxu0 0.0
    %846 = vmatprep.mubr.f32.mxu0 0.0
    %847 = vmatmul.mubr.f32.gmra.mxu0 %v644
    %v848 = vpop.f32.mrf.mxu0
    %v849 = vadd.f32 0.0, %v848
    %v850 = vpop.f32.mrf.mxu0
    %v851 = vadd.f32 0.0, %v850
    %852 = vdwg.mxu0
    %v857 = vcombine.low %v778, %v780
    %v858 = vcombine.low %v849, %v851
    %v860 = vunpack.c.l.s4 1983009808
    %v861 = vunpack.c.0.s8 %v860
    %v862 = vlaneseq
    %v863 = vshrl.u32 %v862, 7
    %v864 = vsub.s32 %v861, %v863
    %v865 = vrot.slane %v857, %v864
    %v867 = vunpack.c.l.s4 1983009808
    %v868 = vunpack.c.0.s8 %v867
    %v869 = vlaneseq
    %v870 = vshrl.u32 %v869, 7
    %v871 = vsub.s32 %v868, %v870
    %v872 = vrot.slane %v858, %v871
    %v873 = vcombine.low %v865, %v872
    %v875 = vadd.f32 %v646, %v873
    %v876 = vxor.u32 %v875, 2147483648
    %v877 = vmul.f32 %v876, 1.442695
    %v878 = vpow.pop %v877
    %v879 = vadd.f32 %v878, 1.0
    %v880 = vrcp.pop %v879
    %v881 = vmul.f32 1.0, %v880
    %v883 = vrot.slane %v875, 2
    %v885 = vxor.u32 %v883, 2147483648
    %v886 = vmul.f32 %v885, 1.442695
    %v887 = vpow.pop %v886
    %v888 = vadd.f32 %v887, 1.0
    %v889 = vrcp.pop %v888
    %v890 = vmul.f32 1.0, %v889
    %v891 = vrot.slane %v875, 4
    %v893 = vtanh.pop %v891
    %v894 = vrot.slane %v875, 6
    %v896 = vxor.u32 %v894, 2147483648
    %v897 = vmul.f32 %v896, 1.442695
    %v898 = vpow.pop %v897
    %v899 = vadd.f32 %v898, 1.0
    %v900 = vrcp.pop %v899
    %v901 = vmul.f32 1.0, %v900
    %v902 = vmul.f32 %v890, %v645
    %v903 = vmul.f32 %v881, %v893
    %v904 = vadd.f32 %v902, %v903
    %v905 = vtanh.pop %v904
    %v906 = vmul.f32 %v901, %v905
    %907 = vst [vmem:[#allocation3] sm:$0x3] %v906
    %s908 = scalar_lea.vmem [#allocation4], 8
    %v909 = vld [vmem:[%s908] sm:$0xff]
    %v910 = vld [vmem:[#allocation14] sm:$0xff]
    %v911 = vld [vmem:[#allocation14 + $0x8] sm:$0xff]
    %v912 = vld [vmem:[#allocation14 + $0x10] sm:$0xff]
    %v913 = vld [vmem:[#allocation14 + $0x18] sm:$0xff]
    %v914 = vld [vmem:[#allocation14 + $0x20] sm:$0xff]
    %v915 = vld [vmem:[#allocation14 + $0x28] sm:$0xff]
    %v916 = vld [vmem:[#allocation14 + $0x30] sm:$0xff]
    %v917 = vld [vmem:[#allocation14 + $0x38] sm:$0xff]
    %v918 = vld [vmem:[#allocation14 + $0x40] sm:$0xff]
    %v919 = vld [vmem:[#allocation14 + $0x48] sm:$0xff]
    %v920 = vld [vmem:[#allocation14 + $0x50] sm:$0xff]
    %v921 = vld [vmem:[#allocation14 + $0x58] sm:$0xff]
    %v922 = vld [vmem:[#allocation14 + $0x60] sm:$0xff]
    %v923 = vld [vmem:[#allocation14 + $0x68] sm:$0xff]
    %v924 = vld [vmem:[#allocation14 + $0x70] sm:$0xff]
    %v925 = vld [vmem:[#allocation14 + $0x78] sm:$0xff]
    %v926 = vld [vmem:[#allocation14 + $0x80] sm:$0xff]
    %v927 = vld [vmem:[#allocation14 + $0x88] sm:$0xff]
    %v928 = vld [vmem:[#allocation14 + $0x90] sm:$0xff]
    %v929 = vld [vmem:[#allocation14 + $0x98] sm:$0xff]
    %v930 = vld [vmem:[#allocation14 + $0xa0] sm:$0xff]
    %v931 = vld [vmem:[#allocation14 + $0xa8] sm:$0xff]
    %v932 = vld [vmem:[#allocation14 + $0xb0] sm:$0xff]
    %v933 = vld [vmem:[#allocation14 + $0xb8] sm:$0xff]
    %v934 = vld [vmem:[#allocation14 + $0xc0] sm:$0xff]
    %v935 = vld [vmem:[#allocation14 + $0xc8] sm:$0xff]
    %v936 = vld [vmem:[#allocation14 + $0xd0] sm:$0xff]
    %v937 = vld [vmem:[#allocation14 + $0xd8] sm:$0xff]
    %v938 = vld [vmem:[#allocation14 + $0xe0] sm:$0xff]
    %v939 = vld [vmem:[#allocation14 + $0xe8] sm:$0xff]
    %v940 = vld [vmem:[#allocation14 + $0xf0] sm:$0xff]
    %v941 = vld [vmem:[#allocation14 + $0xf8] sm:$0xff]
    %v942 = vld [vmem:[#allocation14 + $0x100] sm:$0xff]
    %v943 = vld [vmem:[#allocation14 + $0x108] sm:$0xff]
    %v944 = vld [vmem:[#allocation14 + $0x110] sm:$0xff]
    %v945 = vld [vmem:[#allocation14 + $0x118] sm:$0xff]
    %v946 = vld [vmem:[#allocation14 + $0x120] sm:$0xff]
    %v947 = vld [vmem:[#allocation14 + $0x128] sm:$0xff]
    %v948 = vld [vmem:[#allocation14 + $0x130] sm:$0xff]
    %v949 = vld [vmem:[#allocation14 + $0x138] sm:$0xff]
    %v950 = vld [vmem:[#allocation14 + $0x140] sm:$0xff]
    %v951 = vld [vmem:[#allocation14 + $0x148] sm:$0xff]
    %v952 = vld [vmem:[#allocation14 + $0x150] sm:$0xff]
    %v953 = vld [vmem:[#allocation14 + $0x158] sm:$0xff]
    %v954 = vld [vmem:[#allocation14 + $0x160] sm:$0xff]
    %v955 = vld [vmem:[#allocation14 + $0x168] sm:$0xff]
    %v956 = vld [vmem:[#allocation14 + $0x170] sm:$0xff]
    %v957 = vld [vmem:[#allocation14 + $0x178] sm:$0xff]
    %v958 = vld [vmem:[#allocation14 + $0x180] sm:$0xff]
    %v959 = vld [vmem:[#allocation14 + $0x188] sm:$0xff]
    %v960 = vld [vmem:[#allocation14 + $0x190] sm:$0xff]
    %v961 = vld [vmem:[#allocation14 + $0x198] sm:$0xff]
    %v962 = vld [vmem:[#allocation14 + $0x1a0] sm:$0xff]
    %v963 = vld [vmem:[#allocation14 + $0x1a8] sm:$0xff]
    %v964 = vld [vmem:[#allocation14 + $0x1b0] sm:$0xff]
    %v965 = vld [vmem:[#allocation14 + $0x1b8] sm:$0xff]
    %v966 = vld [vmem:[#allocation14 + $0x1c0] sm:$0xff]
    %v967 = vld [vmem:[#allocation14 + $0x1c8] sm:$0xff]
    %v968 = vld [vmem:[#allocation14 + $0x1d0] sm:$0xff]
    %v969 = vld [vmem:[#allocation14 + $0x1d8] sm:$0xff]
    %v970 = vld [vmem:[#allocation14 + $0x1e0] sm:$0xff]
    %v971 = vld [vmem:[#allocation14 + $0x1e8] sm:$0xff]
    %v972 = vld [vmem:[#allocation14 + $0x1f0] sm:$0xff]
    %v973 = vld [vmem:[#allocation14 + $0x1f8] sm:$0xff]
    %974 = vmatprep.subr.mxu0 %v971
    %975 = vmatpush1.msra.mxu0 %v970
    %976 = vmatprep.subr.mxu0 %v967
    %977 = vmatpush1.msra.mxu0 %v966
    %978 = vmatprep.subr.mxu0 %v963
    %979 = vmatpush1.msra.mxu0 %v962
    %980 = vmatprep.subr.mxu0 %v959
    %981 = vmatpush1.msra.mxu0 %v958
    %982 = vmatprep.subr.mxu0 %v955
    %983 = vmatpush1.msra.mxu0 %v954
    %984 = vmatprep.subr.mxu0 %v951
    %985 = vmatpush1.msra.mxu0 %v950
    %986 = vmatprep.subr.mxu0 %v947
    %987 = vmatpush1.msra.mxu0 %v946
    %988 = vmatprep.subr.mxu0 %v943
    %989 = vmatpush1.msra.mxu0 %v942
    %990 = vmatprep.subr.mxu0 %v939
    %991 = vmatpush1.msra.mxu0 %v938
    %992 = vmatprep.subr.mxu0 %v935
    %993 = vmatpush1.msra.mxu0 %v934
    %994 = vmatprep.subr.mxu0 %v931
    %995 = vmatpush1.msra.mxu0 %v930
    %996 = vmatprep.subr.mxu0 %v927
    %997 = vmatpush1.msra.mxu0 %v926
    %998 = vmatprep.subr.mxu0 %v923
    %999 = vmatpush1.msra.mxu0 %v922
    %1000 = vmatprep.subr.mxu0 %v919
    %1001 = vmatpush1.msra.mxu0 %v918
    %1002 = vmatprep.subr.mxu0 %v915
    %1003 = vmatpush1.msra.mxu0 %v914
    %1004 = vmatprep.subr.mxu0 %v911
    %1005 = vmatpush1.msra.mxu0 %v910
    %1006 = vmatprep.subr.mxu0 0.0
    %1007 = vmatpush2.msra.mxu0 0.0
    %1008 = vmatprep.subr.mxu0 0.0
    %1009 = vmatpush2.msra.mxu0 0.0
    %1010 = vmatprep.subr.mxu0 0.0
    %1011 = vmatpush2.msra.mxu0 0.0
    %1012 = vmatprep.subr.mxu0 0.0
    %1013 = vmatpush2.msra.mxu0 0.0
    %1014 = vmatprep.subr.mxu0 0.0
    %1015 = vmatpush2.msra.mxu0 0.0
    %1016 = vmatprep.subr.mxu0 0.0
    %1017 = vmatpush2.msra.mxu0 0.0
    %1018 = vmatprep.subr.mxu0 0.0
    %1019 = vmatpush2.msra.mxu0 0.0
    %1020 = vmatprep.subr.mxu0 0.0
    %1021 = vmatpush2.msra.mxu0 0.0
    %1022 = vmatprep.subr.mxu0 0.0
    %1023 = vmatpush2.msra.mxu0 0.0
    %1024 = vmatprep.subr.mxu0 0.0
    %1025 = vmatpush2.msra.mxu0 0.0
    %1026 = vmatprep.subr.mxu0 0.0
    %1027 = vmatpush2.msra.mxu0 0.0
    %1028 = vmatprep.subr.mxu0 0.0
    %1029 = vmatpush2.msra.mxu0 0.0
    %1030 = vmatprep.subr.mxu0 0.0
    %1031 = vmatpush2.msra.mxu0 0.0
    %1032 = vmatprep.subr.mxu0 0.0
    %1033 = vmatpush2.msra.mxu0 0.0
    %1034 = vmatprep.subr.mxu0 0.0
    %1035 = vmatpush2.msra.mxu0 0.0
    %1036 = vmatprep.subr.mxu0 0.0
    %1037 = vmatpush2.msra.mxu0 0.0
    %1038 = vmatprep.mubr.f32.mxu0 0.0
    %1039 = vmatmul.mubr.f32.gmra.mxu0 %v906
    %v1040 = vpop.f32.mrf.mxu0
    %v1041 = vadd.f32 0.0, %v1040
    %v1042 = vpop.f32.mrf.mxu0
    %v1043 = vadd.f32 0.0, %v1042
    %1044 = vdwg.mxu0
    %1045 = vmatprep.subr.mxu0 %v973
    %1046 = vmatpush1.msra.mxu0 %v972
    %1047 = vmatprep.subr.mxu0 %v969
    %1048 = vmatpush1.msra.mxu0 %v968
    %1049 = vmatprep.subr.mxu0 %v965
    %1050 = vmatpush1.msra.mxu0 %v964
    %1051 = vmatprep.subr.mxu0 %v961
    %1052 = vmatpush1.msra.mxu0 %v960
    %1053 = vmatprep.subr.mxu0 %v957
    %1054 = vmatpush1.msra.mxu0 %v956
    %1055 = vmatprep.subr.mxu0 %v953
    %1056 = vmatpush1.msra.mxu0 %v952
    %1057 = vmatprep.subr.mxu0 %v949
    %1058 = vmatpush1.msra.mxu0 %v948
    %1059 = vmatprep.subr.mxu0 %v945
    %1060 = vmatpush1.msra.mxu0 %v944
    %1061 = vmatprep.subr.mxu0 %v941
    %1062 = vmatpush1.msra.mxu0 %v940
    %1063 = vmatprep.subr.mxu0 %v937
    %1064 = vmatpush1.msra.mxu0 %v936
    %1065 = vmatprep.subr.mxu0 %v933
    %1066 = vmatpush1.msra.mxu0 %v932
    %1067 = vmatprep.subr.mxu0 %v929
    %1068 = vmatpush1.msra.mxu0 %v928
    %1069 = vmatprep.subr.mxu0 %v925
    %1070 = vmatpush1.msra.mxu0 %v924
    %1071 = vmatprep.subr.mxu0 %v921
    %1072 = vmatpush1.msra.mxu0 %v920
    %1073 = vmatprep.subr.mxu0 %v917
    %1074 = vmatpush1.msra.mxu0 %v916
    %1075 = vmatprep.subr.mxu0 %v913
    %1076 = vmatpush1.msra.mxu0 %v912
    %1077 = vmatprep.subr.mxu0 0.0
    %1078 = vmatpush2.msra.mxu0 0.0
    %1079 = vmatprep.subr.mxu0 0.0
    %1080 = vmatpush2.msra.mxu0 0.0
    %1081 = vmatprep.subr.mxu0 0.0
    %1082 = vmatpush2.msra.mxu0 0.0
    %1083 = vmatprep.subr.mxu0 0.0
    %1084 = vmatpush2.msra.mxu0 0.0
    %1085 = vmatprep.subr.mxu0 0.0
    %1086 = vmatpush2.msra.mxu0 0.0
    %1087 = vmatprep.subr.mxu0 0.0
    %1088 = vmatpush2.msra.mxu0 0.0
    %1089 = vmatprep.subr.mxu0 0.0
    %1090 = vmatpush2.msra.mxu0 0.0
    %1091 = vmatprep.subr.mxu0 0.0
    %1092 = vmatpush2.msra.mxu0 0.0
    %1093 = vmatprep.subr.mxu0 0.0
    %1094 = vmatpush2.msra.mxu0 0.0
    %1095 = vmatprep.subr.mxu0 0.0
    %1096 = vmatpush2.msra.mxu0 0.0
    %1097 = vmatprep.subr.mxu0 0.0
    %1098 = vmatpush2.msra.mxu0 0.0
    %1099 = vmatprep.subr.mxu0 0.0
    %1100 = vmatpush2.msra.mxu0 0.0
    %1101 = vmatprep.subr.mxu0 0.0
    %1102 = vmatpush2.msra.mxu0 0.0
    %1103 = vmatprep.subr.mxu0 0.0
    %1104 = vmatpush2.msra.mxu0 0.0
    %1105 = vmatprep.subr.mxu0 0.0
    %1106 = vmatpush2.msra.mxu0 0.0
    %1107 = vmatprep.subr.mxu0 0.0
    %1108 = vmatpush2.msra.mxu0 0.0
    %1109 = vmatprep.mubr.f32.mxu0 0.0
    %1110 = vmatmul.mubr.f32.gmra.mxu0 %v906
    %v1111 = vpop.f32.mrf.mxu0
    %v1112 = vadd.f32 0.0, %v1111
    %v1113 = vpop.f32.mrf.mxu0
    %v1114 = vadd.f32 0.0, %v1113
    %1115 = vdwg.mxu0
    %v1120 = vcombine.low %v1041, %v1043
    %v1121 = vcombine.low %v1112, %v1114
    %v1123 = vunpack.c.l.s4 1983009808
    %v1124 = vunpack.c.0.s8 %v1123
    %v1125 = vlaneseq
    %v1126 = vshrl.u32 %v1125, 7
    %v1127 = vsub.s32 %v1124, %v1126
    %v1128 = vrot.slane %v1120, %v1127
    %v1130 = vunpack.c.l.s4 1983009808
    %v1131 = vunpack.c.0.s8 %v1130
    %v1132 = vlaneseq
    %v1133 = vshrl.u32 %v1132, 7
    %v1134 = vsub.s32 %v1131, %v1133
    %v1135 = vrot.slane %v1121, %v1134
    %v1136 = vcombine.low %v1128, %v1135
    %v1138 = vadd.f32 %v909, %v1136
    %v1139 = vxor.u32 %v1138, 2147483648
    %v1140 = vmul.f32 %v1139, 1.442695
    %v1141 = vpow.pop %v1140
    %v1142 = vadd.f32 %v1141, 1.0
    %v1143 = vrcp.pop %v1142
    %v1144 = vmul.f32 1.0, %v1143
    %v1146 = vrot.slane %v1138, 2
    %v1148 = vxor.u32 %v1146, 2147483648
    %v1149 = vmul.f32 %v1148, 1.442695
    %v1150 = vpow.pop %v1149
    %v1151 = vadd.f32 %v1150, 1.0
    %v1152 = vrcp.pop %v1151
    %v1153 = vmul.f32 1.0, %v1152
    %v1154 = vrot.slane %v1138, 4
    %v1156 = vtanh.pop %v1154
    %v1157 = vrot.slane %v1138, 6
    %v1159 = vxor.u32 %v1157, 2147483648
    %v1160 = vmul.f32 %v1159, 1.442695
    %v1161 = vpow.pop %v1160
    %v1162 = vadd.f32 %v1161, 1.0
    %v1163 = vrcp.pop %v1162
    %v1164 = vmul.f32 1.0, %v1163
    %v1165 = vmul.f32 %v1153, %v904
    %v1166 = vmul.f32 %v1144, %v1156
    %v1167 = vadd.f32 %v1165, %v1166
    %v1168 = vtanh.pop %v1167
    %v1169 = vmul.f32 %v1164, %v1168
    %s1170 = scalar_lea.vmem [#allocation3], 2
    %1171 = vst [vmem:[%s1170] sm:$0x3] %v1169
    %s1172 = scalar_lea.vmem [#allocation4], 16
    %v1173 = vld [vmem:[%s1172] sm:$0xff]
    %v1174 = vld [vmem:[#allocation14] sm:$0xff]
    %v1175 = vld [vmem:[#allocation14 + $0x8] sm:$0xff]
    %v1176 = vld [vmem:[#allocation14 + $0x10] sm:$0xff]
    %v1177 = vld [vmem:[#allocation14 + $0x18] sm:$0xff]
    %v1178 = vld [vmem:[#allocation14 + $0x20] sm:$0xff]
    %v1179 = vld [vmem:[#allocation14 + $0x28] sm:$0xff]
    %v1180 = vld [vmem:[#allocation14 + $0x30] sm:$0xff]
    %v1181 = vld [vmem:[#allocation14 + $0x38] sm:$0xff]
    %v1182 = vld [vmem:[#allocation14 + $0x40] sm:$0xff]
    %v1183 = vld [vmem:[#allocation14 + $0x48] sm:$0xff]
    %v1184 = vld [vmem:[#allocation14 + $0x50] sm:$0xff]
    %v1185 = vld [vmem:[#allocation14 + $0x58] sm:$0xff]
    %v1186 = vld [vmem:[#allocation14 + $0x60] sm:$0xff]
    %v1187 = vld [vmem:[#allocation14 + $0x68] sm:$0xff]
    %v1188 = vld [vmem:[#allocation14 + $0x70] sm:$0xff]
    %v1189 = vld [vmem:[#allocation14 + $0x78] sm:$0xff]
    %v1190 = vld [vmem:[#allocation14 + $0x80] sm:$0xff]
    %v1191 = vld [vmem:[#allocation14 + $0x88] sm:$0xff]
    %v1192 = vld [vmem:[#allocation14 + $0x90] sm:$0xff]
    %v1193 = vld [vmem:[#allocation14 + $0x98] sm:$0xff]
    %v1194 = vld [vmem:[#allocation14 + $0xa0] sm:$0xff]
    %v1195 = vld [vmem:[#allocation14 + $0xa8] sm:$0xff]
    %v1196 = vld [vmem:[#allocation14 + $0xb0] sm:$0xff]
    %v1197 = vld [vmem:[#allocation14 + $0xb8] sm:$0xff]
    %v1198 = vld [vmem:[#allocation14 + $0xc0] sm:$0xff]
    %v1199 = vld [vmem:[#allocation14 + $0xc8] sm:$0xff]
    %v1200 = vld [vmem:[#allocation14 + $0xd0] sm:$0xff]
    %v1201 = vld [vmem:[#allocation14 + $0xd8] sm:$0xff]
    %v1202 = vld [vmem:[#allocation14 + $0xe0] sm:$0xff]
    %v1203 = vld [vmem:[#allocation14 + $0xe8] sm:$0xff]
    %v1204 = vld [vmem:[#allocation14 + $0xf0] sm:$0xff]
    %v1205 = vld [vmem:[#allocation14 + $0xf8] sm:$0xff]
    %v1206 = vld [vmem:[#allocation14 + $0x100] sm:$0xff]
    %v1207 = vld [vmem:[#allocation14 + $0x108] sm:$0xff]
    %v1208 = vld [vmem:[#allocation14 + $0x110] sm:$0xff]
    %v1209 = vld [vmem:[#allocation14 + $0x118] sm:$0xff]
    %v1210 = vld [vmem:[#allocation14 + $0x120] sm:$0xff]
    %v1211 = vld [vmem:[#allocation14 + $0x128] sm:$0xff]
    %v1212 = vld [vmem:[#allocation14 + $0x130] sm:$0xff]
    %v1213 = vld [vmem:[#allocation14 + $0x138] sm:$0xff]
    %v1214 = vld [vmem:[#allocation14 + $0x140] sm:$0xff]
    %v1215 = vld [vmem:[#allocation14 + $0x148] sm:$0xff]
    %v1216 = vld [vmem:[#allocation14 + $0x150] sm:$0xff]
    %v1217 = vld [vmem:[#allocation14 + $0x158] sm:$0xff]
    %v1218 = vld [vmem:[#allocation14 + $0x160] sm:$0xff]
    %v1219 = vld [vmem:[#allocation14 + $0x168] sm:$0xff]
    %v1220 = vld [vmem:[#allocation14 + $0x170] sm:$0xff]
    %v1221 = vld [vmem:[#allocation14 + $0x178] sm:$0xff]
    %v1222 = vld [vmem:[#allocation14 + $0x180] sm:$0xff]
    %v1223 = vld [vmem:[#allocation14 + $0x188] sm:$0xff]
    %v1224 = vld [vmem:[#allocation14 + $0x190] sm:$0xff]
    %v1225 = vld [vmem:[#allocation14 + $0x198] sm:$0xff]
    %v1226 = vld [vmem:[#allocation14 + $0x1a0] sm:$0xff]
    %v1227 = vld [vmem:[#allocation14 + $0x1a8] sm:$0xff]
    %v1228 = vld [vmem:[#allocation14 + $0x1b0] sm:$0xff]
    %v1229 = vld [vmem:[#allocation14 + $0x1b8] sm:$0xff]
    %v1230 = vld [vmem:[#allocation14 + $0x1c0] sm:$0xff]
    %v1231 = vld [vmem:[#allocation14 + $0x1c8] sm:$0xff]
    %v1232 = vld [vmem:[#allocation14 + $0x1d0] sm:$0xff]
    %v1233 = vld [vmem:[#allocation14 + $0x1d8] sm:$0xff]
    %v1234 = vld [vmem:[#allocation14 + $0x1e0] sm:$0xff]
    %v1235 = vld [vmem:[#allocation14 + $0x1e8] sm:$0xff]
    %v1236 = vld [vmem:[#allocation14 + $0x1f0] sm:$0xff]
    %v1237 = vld [vmem:[#allocation14 + $0x1f8] sm:$0xff]
    %1238 = vmatprep.subr.mxu0 %v1235
    %1239 = vmatpush1.msra.mxu0 %v1234
    %1240 = vmatprep.subr.mxu0 %v1231
    %1241 = vmatpush1.msra.mxu0 %v1230
    %1242 = vmatprep.subr.mxu0 %v1227
    %1243 = vmatpush1.msra.mxu0 %v1226
    %1244 = vmatprep.subr.mxu0 %v1223
    %1245 = vmatpush1.msra.mxu0 %v1222
    %1246 = vmatprep.subr.mxu0 %v1219
    %1247 = vmatpush1.msra.mxu0 %v1218
    %1248 = vmatprep.subr.mxu0 %v1215
    %1249 = vmatpush1.msra.mxu0 %v1214
    %1250 = vmatprep.subr.mxu0 %v1211
    %1251 = vmatpush1.msra.mxu0 %v1210
    %1252 = vmatprep.subr.mxu0 %v1207
    %1253 = vmatpush1.msra.mxu0 %v1206
    %1254 = vmatprep.subr.mxu0 %v1203
    %1255 = vmatpush1.msra.mxu0 %v1202
    %1256 = vmatprep.subr.mxu0 %v1199
    %1257 = vmatpush1.msra.mxu0 %v1198
    %1258 = vmatprep.subr.mxu0 %v1195
    %1259 = vmatpush1.msra.mxu0 %v1194
    %1260 = vmatprep.subr.mxu0 %v1191
    %1261 = vmatpush1.msra.mxu0 %v1190
    %1262 = vmatprep.subr.mxu0 %v1187
    %1263 = vmatpush1.msra.mxu0 %v1186
    %1264 = vmatprep.subr.mxu0 %v1183
    %1265 = vmatpush1.msra.mxu0 %v1182
    %1266 = vmatprep.subr.mxu0 %v1179
    %1267 = vmatpush1.msra.mxu0 %v1178
    %1268 = vmatprep.subr.mxu0 %v1175
    %1269 = vmatpush1.msra.mxu0 %v1174
    %1270 = vmatprep.subr.mxu0 0.0
    %1271 = vmatpush2.msra.mxu0 0.0
    %1272 = vmatprep.subr.mxu0 0.0
    %1273 = vmatpush2.msra.mxu0 0.0
    %1274 = vmatprep.subr.mxu0 0.0
    %1275 = vmatpush2.msra.mxu0 0.0
    %1276 = vmatprep.subr.mxu0 0.0
    %1277 = vmatpush2.msra.mxu0 0.0
    %1278 = vmatprep.subr.mxu0 0.0
    %1279 = vmatpush2.msra.mxu0 0.0
    %1280 = vmatprep.subr.mxu0 0.0
    %1281 = vmatpush2.msra.mxu0 0.0
    %1282 = vmatprep.subr.mxu0 0.0
    %1283 = vmatpush2.msra.mxu0 0.0
    %1284 = vmatprep.subr.mxu0 0.0
    %1285 = vmatpush2.msra.mxu0 0.0
    %1286 = vmatprep.subr.mxu0 0.0
    %1287 = vmatpush2.msra.mxu0 0.0
    %1288 = vmatprep.subr.mxu0 0.0
    %1289 = vmatpush2.msra.mxu0 0.0
    %1290 = vmatprep.subr.mxu0 0.0
    %1291 = vmatpush2.msra.mxu0 0.0
    %1292 = vmatprep.subr.mxu0 0.0
    %1293 = vmatpush2.msra.mxu0 0.0
    %1294 = vmatprep.subr.mxu0 0.0
    %1295 = vmatpush2.msra.mxu0 0.0
    %1296 = vmatprep.subr.mxu0 0.0
    %1297 = vmatpush2.msra.mxu0 0.0
    %1298 = vmatprep.subr.mxu0 0.0
    %1299 = vmatpush2.msra.mxu0 0.0
    %1300 = vmatprep.subr.mxu0 0.0
    %1301 = vmatpush2.msra.mxu0 0.0
    %1302 = vmatprep.mubr.f32.mxu0 0.0
    %1303 = vmatmul.mubr.f32.gmra.mxu0 %v1169
    %v1304 = vpop.f32.mrf.mxu0
    %v1305 = vadd.f32 0.0, %v1304
    %v1306 = vpop.f32.mrf.mxu0
    %v1307 = vadd.f32 0.0, %v1306
    %1308 = vdwg.mxu0
    %1309 = vmatprep.subr.mxu0 %v1237
    %1310 = vmatpush1.msra.mxu0 %v1236
    %1311 = vmatprep.subr.mxu0 %v1233
    %1312 = vmatpush1.msra.mxu0 %v1232
    %1313 = vmatprep.subr.mxu0 %v1229
    %1314 = vmatpush1.msra.mxu0 %v1228
    %1315 = vmatprep.subr.mxu0 %v1225
    %1316 = vmatpush1.msra.mxu0 %v1224
    %1317 = vmatprep.subr.mxu0 %v1221
    %1318 = vmatpush1.msra.mxu0 %v1220
    %1319 = vmatprep.subr.mxu0 %v1217
    %1320 = vmatpush1.msra.mxu0 %v1216
    %1321 = vmatprep.subr.mxu0 %v1213
    %1322 = vmatpush1.msra.mxu0 %v1212
    %1323 = vmatprep.subr.mxu0 %v1209
    %1324 = vmatpush1.msra.mxu0 %v1208
    %1325 = vmatprep.subr.mxu0 %v1205
    %1326 = vmatpush1.msra.mxu0 %v1204
    %1327 = vmatprep.subr.mxu0 %v1201
    %1328 = vmatpush1.msra.mxu0 %v1200
    %1329 = vmatprep.subr.mxu0 %v1197
    %1330 = vmatpush1.msra.mxu0 %v1196
    %1331 = vmatprep.subr.mxu0 %v1193
    %1332 = vmatpush1.msra.mxu0 %v1192
    %1333 = vmatprep.subr.mxu0 %v1189
    %1334 = vmatpush1.msra.mxu0 %v1188
    %1335 = vmatprep.subr.mxu0 %v1185
    %1336 = vmatpush1.msra.mxu0 %v1184
    %1337 = vmatprep.subr.mxu0 %v1181
    %1338 = vmatpush1.msra.mxu0 %v1180
    %1339 = vmatprep.subr.mxu0 %v1177
    %1340 = vmatpush1.msra.mxu0 %v1176
    %1341 = vmatprep.subr.mxu0 0.0
    %1342 = vmatpush2.msra.mxu0 0.0
    %1343 = vmatprep.subr.mxu0 0.0
    %1344 = vmatpush2.msra.mxu0 0.0
    %1345 = vmatprep.subr.mxu0 0.0
    %1346 = vmatpush2.msra.mxu0 0.0
    %1347 = vmatprep.subr.mxu0 0.0
    %1348 = vmatpush2.msra.mxu0 0.0
    %1349 = vmatprep.subr.mxu0 0.0
    %1350 = vmatpush2.msra.mxu0 0.0
    %1351 = vmatprep.subr.mxu0 0.0
    %1352 = vmatpush2.msra.mxu0 0.0
    %1353 = vmatprep.subr.mxu0 0.0
    %1354 = vmatpush2.msra.mxu0 0.0
    %1355 = vmatprep.subr.mxu0 0.0
    %1356 = vmatpush2.msra.mxu0 0.0
    %1357 = vmatprep.subr.mxu0 0.0
    %1358 = vmatpush2.msra.mxu0 0.0
    %1359 = vmatprep.subr.mxu0 0.0
    %1360 = vmatpush2.msra.mxu0 0.0
    %1361 = vmatprep.subr.mxu0 0.0
    %1362 = vmatpush2.msra.mxu0 0.0
    %1363 = vmatprep.subr.mxu0 0.0
    %1364 = vmatpush2.msra.mxu0 0.0
    %1365 = vmatprep.subr.mxu0 0.0
    %1366 = vmatpush2.msra.mxu0 0.0
    %1367 = vmatprep.subr.mxu0 0.0
    %1368 = vmatpush2.msra.mxu0 0.0
    %1369 = vmatprep.subr.mxu0 0.0
    %1370 = vmatpush2.msra.mxu0 0.0
    %1371 = vmatprep.subr.mxu0 0.0
    %1372 = vmatpush2.msra.mxu0 0.0
    %1373 = vmatprep.mubr.f32.mxu0 0.0
    %1374 = vmatmul.mubr.f32.gmra.mxu0 %v1169
    %v1375 = vpop.f32.mrf.mxu0
    %v1376 = vadd.f32 0.0, %v1375
    %v1377 = vpop.f32.mrf.mxu0
    %v1378 = vadd.f32 0.0, %v1377
    %1379 = vdwg.mxu0
    %v1384 = vcombine.low %v1305, %v1307
    %v1385 = vcombine.low %v1376, %v1378
    %v1387 = vunpack.c.l.s4 1983009808
    %v1388 = vunpack.c.0.s8 %v1387
    %v1389 = vlaneseq
    %v1390 = vshrl.u32 %v1389, 7
    %v1391 = vsub.s32 %v1388, %v1390
    %v1392 = vrot.slane %v1384, %v1391
    %v1394 = vunpack.c.l.s4 1983009808
    %v1395 = vunpack.c.0.s8 %v1394
    %v1396 = vlaneseq
    %v1397 = vshrl.u32 %v1396, 7
    %v1398 = vsub.s32 %v1395, %v1397
    %v1399 = vrot.slane %v1385, %v1398
    %v1400 = vcombine.low %v1392, %v1399
    %v1402 = vadd.f32 %v1173, %v1400
    %v1403 = vxor.u32 %v1402, 2147483648
    %v1404 = vmul.f32 %v1403, 1.442695
    %v1405 = vpow.pop %v1404
    %v1406 = vadd.f32 %v1405, 1.0
    %v1407 = vrcp.pop %v1406
    %v1408 = vmul.f32 1.0, %v1407
    %v1410 = vrot.slane %v1402, 2
    %v1412 = vxor.u32 %v1410, 2147483648
    %v1413 = vmul.f32 %v1412, 1.442695
    %v1414 = vpow.pop %v1413
    %v1415 = vadd.f32 %v1414, 1.0
    %v1416 = vrcp.pop %v1415
    %v1417 = vmul.f32 1.0, %v1416
    %v1418 = vrot.slane %v1402, 4
    %v1420 = vtanh.pop %v1418
    %v1421 = vrot.slane %v1402, 6
    %v1423 = vxor.u32 %v1421, 2147483648
    %v1424 = vmul.f32 %v1423, 1.442695
    %v1425 = vpow.pop %v1424
    %v1426 = vadd.f32 %v1425, 1.0
    %v1427 = vrcp.pop %v1426
    %v1428 = vmul.f32 1.0, %v1427
    %v1429 = vmul.f32 %v1417, %v1167
    %v1430 = vmul.f32 %v1408, %v1420
    %v1431 = vadd.f32 %v1429, %v1430
    %v1432 = vtanh.pop %v1431
    %v1433 = vmul.f32 %v1428, %v1432
    %s1434 = scalar_lea.vmem [#allocation3], 4
    %1435 = vst [vmem:[%s1434] sm:$0x3] %v1433
    %s1436 = scalar_lea.vmem [#allocation4], 24
    %v1437 = vld [vmem:[%s1436] sm:$0xff]
    %v1438 = vld [vmem:[#allocation14] sm:$0xff]
    %v1439 = vld [vmem:[#allocation14 + $0x8] sm:$0xff]
    %v1440 = vld [vmem:[#allocation14 + $0x10] sm:$0xff]
    %v1441 = vld [vmem:[#allocation14 + $0x18] sm:$0xff]
    %v1442 = vld [vmem:[#allocation14 + $0x20] sm:$0xff]
    %v1443 = vld [vmem:[#allocation14 + $0x28] sm:$0xff]
    %v1444 = vld [vmem:[#allocation14 + $0x30] sm:$0xff]
    %v1445 = vld [vmem:[#allocation14 + $0x38] sm:$0xff]
    %v1446 = vld [vmem:[#allocation14 + $0x40] sm:$0xff]
    %v1447 = vld [vmem:[#allocation14 + $0x48] sm:$0xff]
    %v1448 = vld [vmem:[#allocation14 + $0x50] sm:$0xff]
    %v1449 = vld [vmem:[#allocation14 + $0x58] sm:$0xff]
    %v1450 = vld [vmem:[#allocation14 + $0x60] sm:$0xff]
    %v1451 = vld [vmem:[#allocation14 + $0x68] sm:$0xff]
    %v1452 = vld [vmem:[#allocation14 + $0x70] sm:$0xff]
    %v1453 = vld [vmem:[#allocation14 + $0x78] sm:$0xff]
    %v1454 = vld [vmem:[#allocation14 + $0x80] sm:$0xff]
    %v1455 = vld [vmem:[#allocation14 + $0x88] sm:$0xff]
    %v1456 = vld [vmem:[#allocation14 + $0x90] sm:$0xff]
    %v1457 = vld [vmem:[#allocation14 + $0x98] sm:$0xff]
    %v1458 = vld [vmem:[#allocation14 + $0xa0] sm:$0xff]
    %v1459 = vld [vmem:[#allocation14 + $0xa8] sm:$0xff]
    %v1460 = vld [vmem:[#allocation14 + $0xb0] sm:$0xff]
    %v1461 = vld [vmem:[#allocation14 + $0xb8] sm:$0xff]
    %v1462 = vld [vmem:[#allocation14 + $0xc0] sm:$0xff]
    %v1463 = vld [vmem:[#allocation14 + $0xc8] sm:$0xff]
    %v1464 = vld [vmem:[#allocation14 + $0xd0] sm:$0xff]
    %v1465 = vld [vmem:[#allocation14 + $0xd8] sm:$0xff]
    %v1466 = vld [vmem:[#allocation14 + $0xe0] sm:$0xff]
    %v1467 = vld [vmem:[#allocation14 + $0xe8] sm:$0xff]
    %v1468 = vld [vmem:[#allocation14 + $0xf0] sm:$0xff]
    %v1469 = vld [vmem:[#allocation14 + $0xf8] sm:$0xff]
    %v1470 = vld [vmem:[#allocation14 + $0x100] sm:$0xff]
    %v1471 = vld [vmem:[#allocation14 + $0x108] sm:$0xff]
    %v1472 = vld [vmem:[#allocation14 + $0x110] sm:$0xff]
    %v1473 = vld [vmem:[#allocation14 + $0x118] sm:$0xff]
    %v1474 = vld [vmem:[#allocation14 + $0x120] sm:$0xff]
    %v1475 = vld [vmem:[#allocation14 + $0x128] sm:$0xff]
    %v1476 = vld [vmem:[#allocation14 + $0x130] sm:$0xff]
    %v1477 = vld [vmem:[#allocation14 + $0x138] sm:$0xff]
    %v1478 = vld [vmem:[#allocation14 + $0x140] sm:$0xff]
    %v1479 = vld [vmem:[#allocation14 + $0x148] sm:$0xff]
    %v1480 = vld [vmem:[#allocation14 + $0x150] sm:$0xff]
    %v1481 = vld [vmem:[#allocation14 + $0x158] sm:$0xff]
    %v1482 = vld [vmem:[#allocation14 + $0x160] sm:$0xff]
    %v1483 = vld [vmem:[#allocation14 + $0x168] sm:$0xff]
    %v1484 = vld [vmem:[#allocation14 + $0x170] sm:$0xff]
    %v1485 = vld [vmem:[#allocation14 + $0x178] sm:$0xff]
    %v1486 = vld [vmem:[#allocation14 + $0x180] sm:$0xff]
    %v1487 = vld [vmem:[#allocation14 + $0x188] sm:$0xff]
    %v1488 = vld [vmem:[#allocation14 + $0x190] sm:$0xff]
    %v1489 = vld [vmem:[#allocation14 + $0x198] sm:$0xff]
    %v1490 = vld [vmem:[#allocation14 + $0x1a0] sm:$0xff]
    %v1491 = vld [vmem:[#allocation14 + $0x1a8] sm:$0xff]
    %v1492 = vld [vmem:[#allocation14 + $0x1b0] sm:$0xff]
    %v1493 = vld [vmem:[#allocation14 + $0x1b8] sm:$0xff]
    %v1494 = vld [vmem:[#allocation14 + $0x1c0] sm:$0xff]
    %v1495 = vld [vmem:[#allocation14 + $0x1c8] sm:$0xff]
    %v1496 = vld [vmem:[#allocation14 + $0x1d0] sm:$0xff]
    %v1497 = vld [vmem:[#allocation14 + $0x1d8] sm:$0xff]
    %v1498 = vld [vmem:[#allocation14 + $0x1e0] sm:$0xff]
    %v1499 = vld [vmem:[#allocation14 + $0x1e8] sm:$0xff]
    %v1500 = vld [vmem:[#allocation14 + $0x1f0] sm:$0xff]
    %v1501 = vld [vmem:[#allocation14 + $0x1f8] sm:$0xff]
    %1502 = vmatprep.subr.mxu0 %v1499
    %1503 = vmatpush1.msra.mxu0 %v1498
    %1504 = vmatprep.subr.mxu0 %v1495
    %1505 = vmatpush1.msra.mxu0 %v1494
    %1506 = vmatprep.subr.mxu0 %v1491
    %1507 = vmatpush1.msra.mxu0 %v1490
    %1508 = vmatprep.subr.mxu0 %v1487
    %1509 = vmatpush1.msra.mxu0 %v1486
    %1510 = vmatprep.subr.mxu0 %v1483
    %1511 = vmatpush1.msra.mxu0 %v1482
    %1512 = vmatprep.subr.mxu0 %v1479
    %1513 = vmatpush1.msra.mxu0 %v1478
    %1514 = vmatprep.subr.mxu0 %v1475
    %1515 = vmatpush1.msra.mxu0 %v1474
    %1516 = vmatprep.subr.mxu0 %v1471
    %1517 = vmatpush1.msra.mxu0 %v1470
    %1518 = vmatprep.subr.mxu0 %v1467
    %1519 = vmatpush1.msra.mxu0 %v1466
    %1520 = vmatprep.subr.mxu0 %v1463
    %1521 = vmatpush1.msra.mxu0 %v1462
    %1522 = vmatprep.subr.mxu0 %v1459
    %1523 = vmatpush1.msra.mxu0 %v1458
    %1524 = vmatprep.subr.mxu0 %v1455
    %1525 = vmatpush1.msra.mxu0 %v1454
    %1526 = vmatprep.subr.mxu0 %v1451
    %1527 = vmatpush1.msra.mxu0 %v1450
    %1528 = vmatprep.subr.mxu0 %v1447
    %1529 = vmatpush1.msra.mxu0 %v1446
    %1530 = vmatprep.subr.mxu0 %v1443
    %1531 = vmatpush1.msra.mxu0 %v1442
    %1532 = vmatprep.subr.mxu0 %v1439
    %1533 = vmatpush1.msra.mxu0 %v1438
    %1534 = vmatprep.subr.mxu0 0.0
    %1535 = vmatpush2.msra.mxu0 0.0
    %1536 = vmatprep.subr.mxu0 0.0
    %1537 = vmatpush2.msra.mxu0 0.0
    %1538 = vmatprep.subr.mxu0 0.0
    %1539 = vmatpush2.msra.mxu0 0.0
    %1540 = vmatprep.subr.mxu0 0.0
    %1541 = vmatpush2.msra.mxu0 0.0
    %1542 = vmatprep.subr.mxu0 0.0
    %1543 = vmatpush2.msra.mxu0 0.0
    %1544 = vmatprep.subr.mxu0 0.0
    %1545 = vmatpush2.msra.mxu0 0.0
    %1546 = vmatprep.subr.mxu0 0.0
    %1547 = vmatpush2.msra.mxu0 0.0
    %1548 = vmatprep.subr.mxu0 0.0
    %1549 = vmatpush2.msra.mxu0 0.0
    %1550 = vmatprep.subr.mxu0 0.0
    %1551 = vmatpush2.msra.mxu0 0.0
    %1552 = vmatprep.subr.mxu0 0.0
    %1553 = vmatpush2.msra.mxu0 0.0
    %1554 = vmatprep.subr.mxu0 0.0
    %1555 = vmatpush2.msra.mxu0 0.0
    %1556 = vmatprep.subr.mxu0 0.0
    %1557 = vmatpush2.msra.mxu0 0.0
    %1558 = vmatprep.subr.mxu0 0.0
    %1559 = vmatpush2.msra.mxu0 0.0
    %1560 = vmatprep.subr.mxu0 0.0
    %1561 = vmatpush2.msra.mxu0 0.0
    %1562 = vmatprep.subr.mxu0 0.0
    %1563 = vmatpush2.msra.mxu0 0.0
    %1564 = vmatprep.subr.mxu0 0.0
    %1565 = vmatpush2.msra.mxu0 0.0
    %1566 = vmatprep.mubr.f32.mxu0 0.0
    %1567 = vmatmul.mubr.f32.gmra.mxu0 %v1433
    %v1568 = vpop.f32.mrf.mxu0
    %v1569 = vadd.f32 0.0, %v1568
    %v1570 = vpop.f32.mrf.mxu0
    %v1571 = vadd.f32 0.0, %v1570
    %1572 = vdwg.mxu0
    %1573 = vmatprep.subr.mxu0 %v1501
    %1574 = vmatpush1.msra.mxu0 %v1500
    %1575 = vmatprep.subr.mxu0 %v1497
    %1576 = vmatpush1.msra.mxu0 %v1496
    %1577 = vmatprep.subr.mxu0 %v1493
    %1578 = vmatpush1.msra.mxu0 %v1492
    %1579 = vmatprep.subr.mxu0 %v1489
    %1580 = vmatpush1.msra.mxu0 %v1488
    %1581 = vmatprep.subr.mxu0 %v1485
    %1582 = vmatpush1.msra.mxu0 %v1484
    %1583 = vmatprep.subr.mxu0 %v1481
    %1584 = vmatpush1.msra.mxu0 %v1480
    %1585 = vmatprep.subr.mxu0 %v1477
    %1586 = vmatpush1.msra.mxu0 %v1476
    %1587 = vmatprep.subr.mxu0 %v1473
    %1588 = vmatpush1.msra.mxu0 %v1472
    %1589 = vmatprep.subr.mxu0 %v1469
    %1590 = vmatpush1.msra.mxu0 %v1468
    %1591 = vmatprep.subr.mxu0 %v1465
    %1592 = vmatpush1.msra.mxu0 %v1464
    %1593 = vmatprep.subr.mxu0 %v1461
    %1594 = vmatpush1.msra.mxu0 %v1460
    %1595 = vmatprep.subr.mxu0 %v1457
    %1596 = vmatpush1.msra.mxu0 %v1456
    %1597 = vmatprep.subr.mxu0 %v1453
    %1598 = vmatpush1.msra.mxu0 %v1452
    %1599 = vmatprep.subr.mxu0 %v1449
    %1600 = vmatpush1.msra.mxu0 %v1448
    %1601 = vmatprep.subr.mxu0 %v1445
    %1602 = vmatpush1.msra.mxu0 %v1444
    %1603 = vmatprep.subr.mxu0 %v1441
    %1604 = vmatpush1.msra.mxu0 %v1440
    %1605 = vmatprep.subr.mxu0 0.0
    %1606 = vmatpush2.msra.mxu0 0.0
    %1607 = vmatprep.subr.mxu0 0.0
    %1608 = vmatpush2.msra.mxu0 0.0
    %1609 = vmatprep.subr.mxu0 0.0
    %1610 = vmatpush2.msra.mxu0 0.0
    %1611 = vmatprep.subr.mxu0 0.0
    %1612 = vmatpush2.msra.mxu0 0.0
    %1613 = vmatprep.subr.mxu0 0.0
    %1614 = vmatpush2.msra.mxu0 0.0
    %1615 = vmatprep.subr.mxu0 0.0
    %1616 = vmatpush2.msra.mxu0 0.0
    %1617 = vmatprep.subr.mxu0 0.0
    %1618 = vmatpush2.msra.mxu0 0.0
    %1619 = vmatprep.subr.mxu0 0.0
    %1620 = vmatpush2.msra.mxu0 0.0
    %1621 = vmatprep.subr.mxu0 0.0
    %1622 = vmatpush2.msra.mxu0 0.0
    %1623 = vmatprep.subr.mxu0 0.0
    %1624 = vmatpush2.msra.mxu0 0.0
    %1625 = vmatprep.subr.mxu0 0.0
    %1626 = vmatpush2.msra.mxu0 0.0
    %1627 = vmatprep.subr.mxu0 0.0
    %1628 = vmatpush2.msra.mxu0 0.0
    %1629 = vmatprep.subr.mxu0 0.0
    %1630 = vmatpush2.msra.mxu0 0.0
    %1631 = vmatprep.subr.mxu0 0.0
    %1632 = vmatpush2.msra.mxu0 0.0
    %1633 = vmatprep.subr.mxu0 0.0
    %1634 = vmatpush2.msra.mxu0 0.0
    %1635 = vmatprep.subr.mxu0 0.0
    %1636 = vmatpush2.msra.mxu0 0.0
    %1637 = vmatprep.mubr.f32.mxu0 0.0
    %1638 = vmatmul.mubr.f32.gmra.mxu0 %v1433
    %v1639 = vpop.f32.mrf.mxu0
    %v1640 = vadd.f32 0.0, %v1639
    %v1641 = vpop.f32.mrf.mxu0
    %v1642 = vadd.f32 0.0, %v1641
    %1643 = vdwg.mxu0
    %v1648 = vcombine.low %v1569, %v1571
    %v1649 = vcombine.low %v1640, %v1642
    %v1651 = vunpack.c.l.s4 1983009808
    %v1652 = vunpack.c.0.s8 %v1651
    %v1653 = vlaneseq
    %v1654 = vshrl.u32 %v1653, 7
    %v1655 = vsub.s32 %v1652, %v1654
    %v1656 = vrot.slane %v1648, %v1655
    %v1658 = vunpack.c.l.s4 1983009808
    %v1659 = vunpack.c.0.s8 %v1658
    %v1660 = vlaneseq
    %v1661 = vshrl.u32 %v1660, 7
    %v1662 = vsub.s32 %v1659, %v1661
    %v1663 = vrot.slane %v1649, %v1662
    %v1664 = vcombine.low %v1656, %v1663
    %v1666 = vadd.f32 %v1437, %v1664
    %v1667 = vxor.u32 %v1666, 2147483648
    %v1668 = vmul.f32 %v1667, 1.442695
    %v1669 = vpow.pop %v1668
    %v1670 = vadd.f32 %v1669, 1.0
    %v1671 = vrcp.pop %v1670
    %v1672 = vmul.f32 1.0, %v1671
    %v1674 = vrot.slane %v1666, 2
    %v1676 = vxor.u32 %v1674, 2147483648
    %v1677 = vmul.f32 %v1676, 1.442695
    %v1678 = vpow.pop %v1677
    %v1679 = vadd.f32 %v1678, 1.0
    %v1680 = vrcp.pop %v1679
    %v1681 = vmul.f32 1.0, %v1680
    %v1682 = vrot.slane %v1666, 4
    %v1684 = vtanh.pop %v1682
    %v1685 = vrot.slane %v1666, 6
    %v1687 = vxor.u32 %v1685, 2147483648
    %v1688 = vmul.f32 %v1687, 1.442695
    %v1689 = vpow.pop %v1688
    %v1690 = vadd.f32 %v1689, 1.0
    %v1691 = vrcp.pop %v1690
    %v1692 = vmul.f32 1.0, %v1691
    %v1693 = vmul.f32 %v1681, %v1431
    %v1694 = vmul.f32 %v1672, %v1684
    %v1695 = vadd.f32 %v1693, %v1694
    %v1696 = vtanh.pop %v1695
    %v1697 = vmul.f32 %v1692, %v1696
    %s1698 = scalar_lea.vmem [#allocation3], 6
    %1699 = vst [vmem:[%s1698] sm:$0x3] %v1697
    %s1700 = scalar_lea.vmem [#allocation4], 32
    %v1701 = vld [vmem:[%s1700] sm:$0xff]
    %v1702 = vld [vmem:[#allocation14] sm:$0xff]
    %v1703 = vld [vmem:[#allocation14 + $0x8] sm:$0xff]
    %v1704 = vld [vmem:[#allocation14 + $0x10] sm:$0xff]
    %v1705 = vld [vmem:[#allocation14 + $0x18] sm:$0xff]
    %v1706 = vld [vmem:[#allocation14 + $0x20] sm:$0xff]
    %v1707 = vld [vmem:[#allocation14 + $0x28] sm:$0xff]
    %v1708 = vld [vmem:[#allocation14 + $0x30] sm:$0xff]
    %v1709 = vld [vmem:[#allocation14 + $0x38] sm:$0xff]
    %v1710 = vld [vmem:[#allocation14 + $0x40] sm:$0xff]
    %v1711 = vld [vmem:[#allocation14 + $0x48] sm:$0xff]
    %v1712 = vld [vmem:[#allocation14 + $0x50] sm:$0xff]
    %v1713 = vld [vmem:[#allocation14 + $0x58] sm:$0xff]
    %v1714 = vld [vmem:[#allocation14 + $0x60] sm:$0xff]
    %v1715 = vld [vmem:[#allocation14 + $0x68] sm:$0xff]
    %v1716 = vld [vmem:[#allocation14 + $0x70] sm:$0xff]
    %v1717 = vld [vmem:[#allocation14 + $0x78] sm:$0xff]
    %v1718 = vld [vmem:[#allocation14 + $0x80] sm:$0xff]
    %v1719 = vld [vmem:[#allocation14 + $0x88] sm:$0xff]
    %v1720 = vld [vmem:[#allocation14 + $0x90] sm:$0xff]
    %v1721 = vld [vmem:[#allocation14 + $0x98] sm:$0xff]
    %v1722 = vld [vmem:[#allocation14 + $0xa0] sm:$0xff]
    %v1723 = vld [vmem:[#allocation14 + $0xa8] sm:$0xff]
    %v1724 = vld [vmem:[#allocation14 + $0xb0] sm:$0xff]
    %v1725 = vld [vmem:[#allocation14 + $0xb8] sm:$0xff]
    %v1726 = vld [vmem:[#allocation14 + $0xc0] sm:$0xff]
    %v1727 = vld [vmem:[#allocation14 + $0xc8] sm:$0xff]
    %v1728 = vld [vmem:[#allocation14 + $0xd0] sm:$0xff]
    %v1729 = vld [vmem:[#allocation14 + $0xd8] sm:$0xff]
    %v1730 = vld [vmem:[#allocation14 + $0xe0] sm:$0xff]
    %v1731 = vld [vmem:[#allocation14 + $0xe8] sm:$0xff]
    %v1732 = vld [vmem:[#allocation14 + $0xf0] sm:$0xff]
    %v1733 = vld [vmem:[#allocation14 + $0xf8] sm:$0xff]
    %v1734 = vld [vmem:[#allocation14 + $0x100] sm:$0xff]
    %v1735 = vld [vmem:[#allocation14 + $0x108] sm:$0xff]
    %v1736 = vld [vmem:[#allocation14 + $0x110] sm:$0xff]
    %v1737 = vld [vmem:[#allocation14 + $0x118] sm:$0xff]
    %v1738 = vld [vmem:[#allocation14 + $0x120] sm:$0xff]
    %v1739 = vld [vmem:[#allocation14 + $0x128] sm:$0xff]
    %v1740 = vld [vmem:[#allocation14 + $0x130] sm:$0xff]
    %v1741 = vld [vmem:[#allocation14 + $0x138] sm:$0xff]
    %v1742 = vld [vmem:[#allocation14 + $0x140] sm:$0xff]
    %v1743 = vld [vmem:[#allocation14 + $0x148] sm:$0xff]
    %v1744 = vld [vmem:[#allocation14 + $0x150] sm:$0xff]
    %v1745 = vld [vmem:[#allocation14 + $0x158] sm:$0xff]
    %v1746 = vld [vmem:[#allocation14 + $0x160] sm:$0xff]
    %v1747 = vld [vmem:[#allocation14 + $0x168] sm:$0xff]
    %v1748 = vld [vmem:[#allocation14 + $0x170] sm:$0xff]
    %v1749 = vld [vmem:[#allocation14 + $0x178] sm:$0xff]
    %v1750 = vld [vmem:[#allocation14 + $0x180] sm:$0xff]
    %v1751 = vld [vmem:[#allocation14 + $0x188] sm:$0xff]
    %v1752 = vld [vmem:[#allocation14 + $0x190] sm:$0xff]
    %v1753 = vld [vmem:[#allocation14 + $0x198] sm:$0xff]
    %v1754 = vld [vmem:[#allocation14 + $0x1a0] sm:$0xff]
    %v1755 = vld [vmem:[#allocation14 + $0x1a8] sm:$0xff]
    %v1756 = vld [vmem:[#allocation14 + $0x1b0] sm:$0xff]
    %v1757 = vld [vmem:[#allocation14 + $0x1b8] sm:$0xff]
    %v1758 = vld [vmem:[#allocation14 + $0x1c0] sm:$0xff]
    %v1759 = vld [vmem:[#allocation14 + $0x1c8] sm:$0xff]
    %v1760 = vld [vmem:[#allocation14 + $0x1d0] sm:$0xff]
    %v1761 = vld [vmem:[#allocation14 + $0x1d8] sm:$0xff]
    %v1762 = vld [vmem:[#allocation14 + $0x1e0] sm:$0xff]
    %v1763 = vld [vmem:[#allocation14 + $0x1e8] sm:$0xff]
    %v1764 = vld [vmem:[#allocation14 + $0x1f0] sm:$0xff]
    %v1765 = vld [vmem:[#allocation14 + $0x1f8] sm:$0xff]
    %1766 = vmatprep.subr.mxu0 %v1763
    %1767 = vmatpush1.msra.mxu0 %v1762
    %1768 = vmatprep.subr.mxu0 %v1759
    %1769 = vmatpush1.msra.mxu0 %v1758
    %1770 = vmatprep.subr.mxu0 %v1755
    %1771 = vmatpush1.msra.mxu0 %v1754
    %1772 = vmatprep.subr.mxu0 %v1751
    %1773 = vmatpush1.msra.mxu0 %v1750
    %1774 = vmatprep.subr.mxu0 %v1747
    %1775 = vmatpush1.msra.mxu0 %v1746
    %1776 = vmatprep.subr.mxu0 %v1743
    %1777 = vmatpush1.msra.mxu0 %v1742
    %1778 = vmatprep.subr.mxu0 %v1739
    %1779 = vmatpush1.msra.mxu0 %v1738
    %1780 = vmatprep.subr.mxu0 %v1735
    %1781 = vmatpush1.msra.mxu0 %v1734
    %1782 = vmatprep.subr.mxu0 %v1731
    %1783 = vmatpush1.msra.mxu0 %v1730
    %1784 = vmatprep.subr.mxu0 %v1727
    %1785 = vmatpush1.msra.mxu0 %v1726
    %1786 = vmatprep.subr.mxu0 %v1723
    %1787 = vmatpush1.msra.mxu0 %v1722
    %1788 = vmatprep.subr.mxu0 %v1719
    %1789 = vmatpush1.msra.mxu0 %v1718
    %1790 = vmatprep.subr.mxu0 %v1715
    %1791 = vmatpush1.msra.mxu0 %v1714
    %1792 = vmatprep.subr.mxu0 %v1711
    %1793 = vmatpush1.msra.mxu0 %v1710
    %1794 = vmatprep.subr.mxu0 %v1707
    %1795 = vmatpush1.msra.mxu0 %v1706
    %1796 = vmatprep.subr.mxu0 %v1703
    %1797 = vmatpush1.msra.mxu0 %v1702
    %1798 = vmatprep.subr.mxu0 0.0
    %1799 = vmatpush2.msra.mxu0 0.0
    %1800 = vmatprep.subr.mxu0 0.0
    %1801 = vmatpush2.msra.mxu0 0.0
    %1802 = vmatprep.subr.mxu0 0.0
    %1803 = vmatpush2.msra.mxu0 0.0
    %1804 = vmatprep.subr.mxu0 0.0
    %1805 = vmatpush2.msra.mxu0 0.0
    %1806 = vmatprep.subr.mxu0 0.0
    %1807 = vmatpush2.msra.mxu0 0.0
    %1808 = vmatprep.subr.mxu0 0.0
    %1809 = vmatpush2.msra.mxu0 0.0
    %1810 = vmatprep.subr.mxu0 0.0
    %1811 = vmatpush2.msra.mxu0 0.0
    %1812 = vmatprep.subr.mxu0 0.0
    %1813 = vmatpush2.msra.mxu0 0.0
    %1814 = vmatprep.subr.mxu0 0.0
    %1815 = vmatpush2.msra.mxu0 0.0
    %1816 = vmatprep.subr.mxu0 0.0
    %1817 = vmatpush2.msra.mxu0 0.0
    %1818 = vmatprep.subr.mxu0 0.0
    %1819 = vmatpush2.msra.mxu0 0.0
    %1820 = vmatprep.subr.mxu0 0.0
    %1821 = vmatpush2.msra.mxu0 0.0
    %1822 = vmatprep.subr.mxu0 0.0
    %1823 = vmatpush2.msra.mxu0 0.0
    %1824 = vmatprep.subr.mxu0 0.0
    %1825 = vmatpush2.msra.mxu0 0.0
    %1826 = vmatprep.subr.mxu0 0.0
    %1827 = vmatpush2.msra.mxu0 0.0
    %1828 = vmatprep.subr.mxu0 0.0
    %1829 = vmatpush2.msra.mxu0 0.0
    %1830 = vmatprep.mubr.f32.mxu0 0.0
    %1831 = vmatmul.mubr.f32.gmra.mxu0 %v1697
    %v1832 = vpop.f32.mrf.mxu0
    %v1833 = vadd.f32 0.0, %v1832
    %v1834 = vpop.f32.mrf.mxu0
    %v1835 = vadd.f32 0.0, %v1834
    %1836 = vdwg.mxu0
    %1837 = vmatprep.subr.mxu0 %v1765
    %1838 = vmatpush1.msra.mxu0 %v1764
    %1839 = vmatprep.subr.mxu0 %v1761
    %1840 = vmatpush1.msra.mxu0 %v1760
    %1841 = vmatprep.subr.mxu0 %v1757
    %1842 = vmatpush1.msra.mxu0 %v1756
    %1843 = vmatprep.subr.mxu0 %v1753
    %1844 = vmatpush1.msra.mxu0 %v1752
    %1845 = vmatprep.subr.mxu0 %v1749
    %1846 = vmatpush1.msra.mxu0 %v1748
    %1847 = vmatprep.subr.mxu0 %v1745
    %1848 = vmatpush1.msra.mxu0 %v1744
    %1849 = vmatprep.subr.mxu0 %v1741
    %1850 = vmatpush1.msra.mxu0 %v1740
    %1851 = vmatprep.subr.mxu0 %v1737
    %1852 = vmatpush1.msra.mxu0 %v1736
    %1853 = vmatprep.subr.mxu0 %v1733
    %1854 = vmatpush1.msra.mxu0 %v1732
    %1855 = vmatprep.subr.mxu0 %v1729
    %1856 = vmatpush1.msra.mxu0 %v1728
    %1857 = vmatprep.subr.mxu0 %v1725
    %1858 = vmatpush1.msra.mxu0 %v1724
    %1859 = vmatprep.subr.mxu0 %v1721
    %1860 = vmatpush1.msra.mxu0 %v1720
    %1861 = vmatprep.subr.mxu0 %v1717
    %1862 = vmatpush1.msra.mxu0 %v1716
    %1863 = vmatprep.subr.mxu0 %v1713
    %1864 = vmatpush1.msra.mxu0 %v1712
    %1865 = vmatprep.subr.mxu0 %v1709
    %1866 = vmatpush1.msra.mxu0 %v1708
    %1867 = vmatprep.subr.mxu0 %v1705
    %1868 = vmatpush1.msra.mxu0 %v1704
    %1869 = vmatprep.subr.mxu0 0.0
    %1870 = vmatpush2.msra.mxu0 0.0
    %1871 = vmatprep.subr.mxu0 0.0
    %1872 = vmatpush2.msra.mxu0 0.0
    %1873 = vmatprep.subr.mxu0 0.0
    %1874 = vmatpush2.msra.mxu0 0.0
    %1875 = vmatprep.subr.mxu0 0.0
    %1876 = vmatpush2.msra.mxu0 0.0
    %1877 = vmatprep.subr.mxu0 0.0
    %1878 = vmatpush2.msra.mxu0 0.0
    %1879 = vmatprep.subr.mxu0 0.0
    %1880 = vmatpush2.msra.mxu0 0.0
    %1881 = vmatprep.subr.mxu0 0.0
    %1882 = vmatpush2.msra.mxu0 0.0
    %1883 = vmatprep.subr.mxu0 0.0
    %1884 = vmatpush2.msra.mxu0 0.0
    %1885 = vmatprep.subr.mxu0 0.0
    %1886 = vmatpush2.msra.mxu0 0.0
    %1887 = vmatprep.subr.mxu0 0.0
    %1888 = vmatpush2.msra.mxu0 0.0
    %1889 = vmatprep.subr.mxu0 0.0
    %1890 = vmatpush2.msra.mxu0 0.0
    %1891 = vmatprep.subr.mxu0 0.0
    %1892 = vmatpush2.msra.mxu0 0.0
    %1893 = vmatprep.subr.mxu0 0.0
    %1894 = vmatpush2.msra.mxu0 0.0
    %1895 = vmatprep.subr.mxu0 0.0
    %1896 = vmatpush2.msra.mxu0 0.0
    %1897 = vmatprep.subr.mxu0 0.0
    %1898 = vmatpush2.msra.mxu0 0.0
    %1899 = vmatprep.subr.mxu0 0.0
    %1900 = vmatpush2.msra.mxu0 0.0
    %1901 = vmatprep.mubr.f32.mxu0 0.0
    %1902 = vmatmul.mubr.f32.gmra.mxu0 %v1697
    %v1903 = vpop.f32.mrf.mxu0
    %v1904 = vadd.f32 0.0, %v1903
    %v1905 = vpop.f32.mrf.mxu0
    %v1906 = vadd.f32 0.0, %v1905
    %1907 = vdwg.mxu0
    %v1912 = vcombine.low %v1833, %v1835
    %v1913 = vcombine.low %v1904, %v1906
    %v1915 = vunpack.c.l.s4 1983009808
    %v1916 = vunpack.c.0.s8 %v1915
    %v1917 = vlaneseq
    %v1918 = vshrl.u32 %v1917, 7
    %v1919 = vsub.s32 %v1916, %v1918
    %v1920 = vrot.slane %v1912, %v1919
    %v1922 = vunpack.c.l.s4 1983009808
    %v1923 = vunpack.c.0.s8 %v1922
    %v1924 = vlaneseq
    %v1925 = vshrl.u32 %v1924, 7
    %v1926 = vsub.s32 %v1923, %v1925
    %v1927 = vrot.slane %v1913, %v1926
    %v1928 = vcombine.low %v1920, %v1927
    %v1930 = vadd.f32 %v1701, %v1928
    %v1931 = vxor.u32 %v1930, 2147483648
    %v1932 = vmul.f32 %v1931, 1.442695
    %v1933 = vpow.pop %v1932
    %v1934 = vadd.f32 %v1933, 1.0
    %v1935 = vrcp.pop %v1934
    %v1936 = vmul.f32 1.0, %v1935
    %v1938 = vrot.slane %v1930, 2
    %v1940 = vxor.u32 %v1938, 2147483648
    %v1941 = vmul.f32 %v1940, 1.442695
    %v1942 = vpow.pop %v1941
    %v1943 = vadd.f32 %v1942, 1.0
    %v1944 = vrcp.pop %v1943
    %v1945 = vmul.f32 1.0, %v1944
    %v1946 = vrot.slane %v1930, 4
    %v1948 = vtanh.pop %v1946
    %v1949 = vrot.slane %v1930, 6
    %v1951 = vxor.u32 %v1949, 2147483648
    %v1952 = vmul.f32 %v1951, 1.442695
    %v1953 = vpow.pop %v1952
    %v1954 = vadd.f32 %v1953, 1.0
    %v1955 = vrcp.pop %v1954
    %v1956 = vmul.f32 1.0, %v1955
    %v1957 = vmul.f32 %v1945, %v1695
    %v1958 = vmul.f32 %v1936, %v1948
    %v1959 = vadd.f32 %v1957, %v1958
    %v1960 = vtanh.pop %v1959
    %v1961 = vmul.f32 %v1956, %v1960
    %s1962 = scalar_lea.vmem [#allocation3], 8
    %1963 = vst [vmem:[%s1962] sm:$0x3] %v1961
    %s1964 = scalar_lea.vmem [#allocation4], 40
    %v1965 = vld [vmem:[%s1964] sm:$0xff]
    %v1966 = vld [vmem:[#allocation14] sm:$0xff]
    %v1967 = vld [vmem:[#allocation14 + $0x8] sm:$0xff]
    %v1968 = vld [vmem:[#allocation14 + $0x10] sm:$0xff]
    %v1969 = vld [vmem:[#allocation14 + $0x18] sm:$0xff]
    %v1970 = vld [vmem:[#allocation14 + $0x20] sm:$0xff]
    %v1971 = vld [vmem:[#allocation14 + $0x28] sm:$0xff]
    %v1972 = vld [vmem:[#allocation14 + $0x30] sm:$0xff]
    %v1973 = vld [vmem:[#allocation14 + $0x38] sm:$0xff]
    %v1974 = vld [vmem:[#allocation14 + $0x40] sm:$0xff]
    %v1975 = vld [vmem:[#allocation14 + $0x48] sm:$0xff]
    %v1976 = vld [vmem:[#allocation14 + $0x50] sm:$0xff]
    %v1977 = vld [vmem:[#allocation14 + $0x58] sm:$0xff]
    %v1978 = vld [vmem:[#allocation14 + $0x60] sm:$0xff]
    %v1979 = vld [vmem:[#allocation14 + $0x68] sm:$0xff]
    %v1980 = vld [vmem:[#allocation14 + $0x70] sm:$0xff]
    %v1981 = vld [vmem:[#allocation14 + $0x78] sm:$0xff]
    %v1982 = vld [vmem:[#allocation14 + $0x80] sm:$0xff]
    %v1983 = vld [vmem:[#allocation14 + $0x88] sm:$0xff]
    %v1984 = vld [vmem:[#allocation14 + $0x90] sm:$0xff]
    %v1985 = vld [vmem:[#allocation14 + $0x98] sm:$0xff]
    %v1986 = vld [vmem:[#allocation14 + $0xa0] sm:$0xff]
    %v1987 = vld [vmem:[#allocation14 + $0xa8] sm:$0xff]
    %v1988 = vld [vmem:[#allocation14 + $0xb0] sm:$0xff]
    %v1989 = vld [vmem:[#allocation14 + $0xb8] sm:$0xff]
    %v1990 = vld [vmem:[#allocation14 + $0xc0] sm:$0xff]
    %v1991 = vld [vmem:[#allocation14 + $0xc8] sm:$0xff]
    %v1992 = vld [vmem:[#allocation14 + $0xd0] sm:$0xff]
    %v1993 = vld [vmem:[#allocation14 + $0xd8] sm:$0xff]
    %v1994 = vld [vmem:[#allocation14 + $0xe0] sm:$0xff]
    %v1995 = vld [vmem:[#allocation14 + $0xe8] sm:$0xff]
    %v1996 = vld [vmem:[#allocation14 + $0xf0] sm:$0xff]
    %v1997 = vld [vmem:[#allocation14 + $0xf8] sm:$0xff]
    %v1998 = vld [vmem:[#allocation14 + $0x100] sm:$0xff]
    %v1999 = vld [vmem:[#allocation14 + $0x108] sm:$0xff]
    %v2000 = vld [vmem:[#allocation14 + $0x110] sm:$0xff]
    %v2001 = vld [vmem:[#allocation14 + $0x118] sm:$0xff]
    %v2002 = vld [vmem:[#allocation14 + $0x120] sm:$0xff]
    %v2003 = vld [vmem:[#allocation14 + $0x128] sm:$0xff]
    %v2004 = vld [vmem:[#allocation14 + $0x130] sm:$0xff]
    %v2005 = vld [vmem:[#allocation14 + $0x138] sm:$0xff]
    %v2006 = vld [vmem:[#allocation14 + $0x140] sm:$0xff]
    %v2007 = vld [vmem:[#allocation14 + $0x148] sm:$0xff]
    %v2008 = vld [vmem:[#allocation14 + $0x150] sm:$0xff]
    %v2009 = vld [vmem:[#allocation14 + $0x158] sm:$0xff]
    %v2010 = vld [vmem:[#allocation14 + $0x160] sm:$0xff]
    %v2011 = vld [vmem:[#allocation14 + $0x168] sm:$0xff]
    %v2012 = vld [vmem:[#allocation14 + $0x170] sm:$0xff]
    %v2013 = vld [vmem:[#allocation14 + $0x178] sm:$0xff]
    %v2014 = vld [vmem:[#allocation14 + $0x180] sm:$0xff]
    %v2015 = vld [vmem:[#allocation14 + $0x188] sm:$0xff]
    %v2016 = vld [vmem:[#allocation14 + $0x190] sm:$0xff]
    %v2017 = vld [vmem:[#allocation14 + $0x198] sm:$0xff]
    %v2018 = vld [vmem:[#allocation14 + $0x1a0] sm:$0xff]
    %v2019 = vld [vmem:[#allocation14 + $0x1a8] sm:$0xff]
    %v2020 = vld [vmem:[#allocation14 + $0x1b0] sm:$0xff]
    %v2021 = vld [vmem:[#allocation14 + $0x1b8] sm:$0xff]
    %v2022 = vld [vmem:[#allocation14 + $0x1c0] sm:$0xff]
    %v2023 = vld [vmem:[#allocation14 + $0x1c8] sm:$0xff]
    %v2024 = vld [vmem:[#allocation14 + $0x1d0] sm:$0xff]
    %v2025 = vld [vmem:[#allocation14 + $0x1d8] sm:$0xff]
    %v2026 = vld [vmem:[#allocation14 + $0x1e0] sm:$0xff]
    %v2027 = vld [vmem:[#allocation14 + $0x1e8] sm:$0xff]
    %v2028 = vld [vmem:[#allocation14 + $0x1f0] sm:$0xff]
    %v2029 = vld [vmem:[#allocation14 + $0x1f8] sm:$0xff]
    %2030 = vmatprep.subr.mxu0 %v2027
    %2031 = vmatpush1.msra.mxu0 %v2026
    %2032 = vmatprep.subr.mxu0 %v2023
    %2033 = vmatpush1.msra.mxu0 %v2022
    %2034 = vmatprep.subr.mxu0 %v2019
    %2035 = vmatpush1.msra.mxu0 %v2018
    %2036 = vmatprep.subr.mxu0 %v2015
    %2037 = vmatpush1.msra.mxu0 %v2014
    %2038 = vmatprep.subr.mxu0 %v2011
    %2039 = vmatpush1.msra.mxu0 %v2010
    %2040 = vmatprep.subr.mxu0 %v2007
    %2041 = vmatpush1.msra.mxu0 %v2006
    %2042 = vmatprep.subr.mxu0 %v2003
    %2043 = vmatpush1.msra.mxu0 %v2002
    %2044 = vmatprep.subr.mxu0 %v1999
    %2045 = vmatpush1.msra.mxu0 %v1998
    %2046 = vmatprep.subr.mxu0 %v1995
    %2047 = vmatpush1.msra.mxu0 %v1994
    %2048 = vmatprep.subr.mxu0 %v1991
    %2049 = vmatpush1.msra.mxu0 %v1990
    %2050 = vmatprep.subr.mxu0 %v1987
    %2051 = vmatpush1.msra.mxu0 %v1986
    %2052 = vmatprep.subr.mxu0 %v1983
    %2053 = vmatpush1.msra.mxu0 %v1982
    %2054 = vmatprep.subr.mxu0 %v1979
    %2055 = vmatpush1.msra.mxu0 %v1978
    %2056 = vmatprep.subr.mxu0 %v1975
    %2057 = vmatpush1.msra.mxu0 %v1974
    %2058 = vmatprep.subr.mxu0 %v1971
    %2059 = vmatpush1.msra.mxu0 %v1970
    %2060 = vmatprep.subr.mxu0 %v1967
    %2061 = vmatpush1.msra.mxu0 %v1966
    %2062 = vmatprep.subr.mxu0 0.0
    %2063 = vmatpush2.msra.mxu0 0.0
    %2064 = vmatprep.subr.mxu0 0.0
    %2065 = vmatpush2.msra.mxu0 0.0
    %2066 = vmatprep.subr.mxu0 0.0
    %2067 = vmatpush2.msra.mxu0 0.0
    %2068 = vmatprep.subr.mxu0 0.0
    %2069 = vmatpush2.msra.mxu0 0.0
    %2070 = vmatprep.subr.mxu0 0.0
    %2071 = vmatpush2.msra.mxu0 0.0
    %2072 = vmatprep.subr.mxu0 0.0
    %2073 = vmatpush2.msra.mxu0 0.0
    %2074 = vmatprep.subr.mxu0 0.0
    %2075 = vmatpush2.msra.mxu0 0.0
    %2076 = vmatprep.subr.mxu0 0.0
    %2077 = vmatpush2.msra.mxu0 0.0
    %2078 = vmatprep.subr.mxu0 0.0
    %2079 = vmatpush2.msra.mxu0 0.0
    %2080 = vmatprep.subr.mxu0 0.0
    %2081 = vmatpush2.msra.mxu0 0.0
    %2082 = vmatprep.subr.mxu0 0.0
    %2083 = vmatpush2.msra.mxu0 0.0
    %2084 = vmatprep.subr.mxu0 0.0
    %2085 = vmatpush2.msra.mxu0 0.0
    %2086 = vmatprep.subr.mxu0 0.0
    %2087 = vmatpush2.msra.mxu0 0.0
    %2088 = vmatprep.subr.mxu0 0.0
    %2089 = vmatpush2.msra.mxu0 0.0
    %2090 = vmatprep.subr.mxu0 0.0
    %2091 = vmatpush2.msra.mxu0 0.0
    %2092 = vmatprep.subr.mxu0 0.0
    %2093 = vmatpush2.msra.mxu0 0.0
    %2094 = vmatprep.mubr.f32.mxu0 0.0
    %2095 = vmatmul.mubr.f32.gmra.mxu0 %v1961
    %v2096 = vpop.f32.mrf.mxu0
    %v2097 = vadd.f32 0.0, %v2096
    %v2098 = vpop.f32.mrf.mxu0
    %v2099 = vadd.f32 0.0, %v2098
    %2100 = vdwg.mxu0
    %2101 = vmatprep.subr.mxu0 %v2029
    %2102 = vmatpush1.msra.mxu0 %v2028
    %2103 = vmatprep.subr.mxu0 %v2025
    %2104 = vmatpush1.msra.mxu0 %v2024
    %2105 = vmatprep.subr.mxu0 %v2021
    %2106 = vmatpush1.msra.mxu0 %v2020
    %2107 = vmatprep.subr.mxu0 %v2017
    %2108 = vmatpush1.msra.mxu0 %v2016
    %2109 = vmatprep.subr.mxu0 %v2013
    %2110 = vmatpush1.msra.mxu0 %v2012
    %2111 = vmatprep.subr.mxu0 %v2009
    %2112 = vmatpush1.msra.mxu0 %v2008
    %2113 = vmatprep.subr.mxu0 %v2005
    %2114 = vmatpush1.msra.mxu0 %v2004
    %2115 = vmatprep.subr.mxu0 %v2001
    %2116 = vmatpush1.msra.mxu0 %v2000
    %2117 = vmatprep.subr.mxu0 %v1997
    %2118 = vmatpush1.msra.mxu0 %v1996
    %2119 = vmatprep.subr.mxu0 %v1993
    %2120 = vmatpush1.msra.mxu0 %v1992
    %2121 = vmatprep.subr.mxu0 %v1989
    %2122 = vmatpush1.msra.mxu0 %v1988
    %2123 = vmatprep.subr.mxu0 %v1985
    %2124 = vmatpush1.msra.mxu0 %v1984
    %2125 = vmatprep.subr.mxu0 %v1981
    %2126 = vmatpush1.msra.mxu0 %v1980
    %2127 = vmatprep.subr.mxu0 %v1977
    %2128 = vmatpush1.msra.mxu0 %v1976
    %2129 = vmatprep.subr.mxu0 %v1973
    %2130 = vmatpush1.msra.mxu0 %v1972
    %2131 = vmatprep.subr.mxu0 %v1969
    %2132 = vmatpush1.msra.mxu0 %v1968
    %2133 = vmatprep.subr.mxu0 0.0
    %2134 = vmatpush2.msra.mxu0 0.0
    %2135 = vmatprep.subr.mxu0 0.0
    %2136 = vmatpush2.msra.mxu0 0.0
    %2137 = vmatprep.subr.mxu0 0.0
    %2138 = vmatpush2.msra.mxu0 0.0
    %2139 = vmatprep.subr.mxu0 0.0
    %2140 = vmatpush2.msra.mxu0 0.0
    %2141 = vmatprep.subr.mxu0 0.0
    %2142 = vmatpush2.msra.mxu0 0.0
    %2143 = vmatprep.subr.mxu0 0.0
    %2144 = vmatpush2.msra.mxu0 0.0
    %2145 = vmatprep.subr.mxu0 0.0
    %2146 = vmatpush2.msra.mxu0 0.0
    %2147 = vmatprep.subr.mxu0 0.0
    %2148 = vmatpush2.msra.mxu0 0.0
    %2149 = vmatprep.subr.mxu0 0.0
    %2150 = vmatpush2.msra.mxu0 0.0
    %2151 = vmatprep.subr.mxu0 0.0
    %2152 = vmatpush2.msra.mxu0 0.0
    %2153 = vmatprep.subr.mxu0 0.0
    %2154 = vmatpush2.msra.mxu0 0.0
    %2155 = vmatprep.subr.mxu0 0.0
    %2156 = vmatpush2.msra.mxu0 0.0
    %2157 = vmatprep.subr.mxu0 0.0
    %2158 = vmatpush2.msra.mxu0 0.0
    %2159 = vmatprep.subr.mxu0 0.0
    %2160 = vmatpush2.msra.mxu0 0.0
    %2161 = vmatprep.subr.mxu0 0.0
    %2162 = vmatpush2.msra.mxu0 0.0
    %2163 = vmatprep.subr.mxu0 0.0
    %2164 = vmatpush2.msra.mxu0 0.0
    %2165 = vmatprep.mubr.f32.mxu0 0.0
    %2166 = vmatmul.mubr.f32.gmra.mxu0 %v1961
    %v2167 = vpop.f32.mrf.mxu0
    %v2168 = vadd.f32 0.0, %v2167
    %v2169 = vpop.f32.mrf.mxu0
    %v2170 = vadd.f32 0.0, %v2169
    %2171 = vdwg.mxu0
    %v2176 = vcombine.low %v2097, %v2099
    %v2177 = vcombine.low %v2168, %v2170
    %v2179 = vunpack.c.l.s4 1983009808
    %v2180 = vunpack.c.0.s8 %v2179
    %v2181 = vlaneseq
    %v2182 = vshrl.u32 %v2181, 7
    %v2183 = vsub.s32 %v2180, %v2182
    %v2184 = vrot.slane %v2176, %v2183
    %v2186 = vunpack.c.l.s4 1983009808
    %v2187 = vunpack.c.0.s8 %v2186
    %v2188 = vlaneseq
    %v2189 = vshrl.u32 %v2188, 7
    %v2190 = vsub.s32 %v2187, %v2189
    %v2191 = vrot.slane %v2177, %v2190
    %v2192 = vcombine.low %v2184, %v2191
    %v2194 = vadd.f32 %v1965, %v2192
    %v2195 = vxor.u32 %v2194, 2147483648
    %v2196 = vmul.f32 %v2195, 1.442695
    %v2197 = vpow.pop %v2196
    %v2198 = vadd.f32 %v2197, 1.0
    %v2199 = vrcp.pop %v2198
    %v2200 = vmul.f32 1.0, %v2199
    %v2202 = vrot.slane %v2194, 2
    %v2204 = vxor.u32 %v2202, 2147483648
    %v2205 = vmul.f32 %v2204, 1.442695
    %v2206 = vpow.pop %v2205
    %v2207 = vadd.f32 %v2206, 1.0
    %v2208 = vrcp.pop %v2207
    %v2209 = vmul.f32 1.0, %v2208
    %v2210 = vrot.slane %v2194, 4
    %v2212 = vtanh.pop %v2210
    %v2213 = vrot.slane %v2194, 6
    %v2215 = vxor.u32 %v2213, 2147483648
    %v2216 = vmul.f32 %v2215, 1.442695
    %v2217 = vpow.pop %v2216
    %v2218 = vadd.f32 %v2217, 1.0
    %v2219 = vrcp.pop %v2218
    %v2220 = vmul.f32 1.0, %v2219
    %v2221 = vmul.f32 %v2209, %v1959
    %v2222 = vmul.f32 %v2200, %v2212
    %v2223 = vadd.f32 %v2221, %v2222
    %v2224 = vtanh.pop %v2223
    %v2225 = vmul.f32 %v2220, %v2224
    %s2226 = scalar_lea.vmem [#allocation3], 10
    %2227 = vst [vmem:[%s2226] sm:$0x3] %v2225
    %s2228 = scalar_lea.vmem [#allocation4], 48
    %v2229 = vld [vmem:[%s2228] sm:$0xff]
    %v2230 = vld [vmem:[#allocation14] sm:$0xff]
    %v2231 = vld [vmem:[#allocation14 + $0x8] sm:$0xff]
    %v2232 = vld [vmem:[#allocation14 + $0x10] sm:$0xff]
    %v2233 = vld [vmem:[#allocation14 + $0x18] sm:$0xff]
    %v2234 = vld [vmem:[#allocation14 + $0x20] sm:$0xff]
    %v2235 = vld [vmem:[#allocation14 + $0x28] sm:$0xff]
    %v2236 = vld [vmem:[#allocation14 + $0x30] sm:$0xff]
    %v2237 = vld [vmem:[#allocation14 + $0x38] sm:$0xff]
    %v2238 = vld [vmem:[#allocation14 + $0x40] sm:$0xff]
    %v2239 = vld [vmem:[#allocation14 + $0x48] sm:$0xff]
    %v2240 = vld [vmem:[#allocation14 + $0x50] sm:$0xff]
    %v2241 = vld [vmem:[#allocation14 + $0x58] sm:$0xff]
    %v2242 = vld [vmem:[#allocation14 + $0x60] sm:$0xff]
    %v2243 = vld [vmem:[#allocation14 + $0x68] sm:$0xff]
    %v2244 = vld [vmem:[#allocation14 + $0x70] sm:$0xff]
    %v2245 = vld [vmem:[#allocation14 + $0x78] sm:$0xff]
    %v2246 = vld [vmem:[#allocation14 + $0x80] sm:$0xff]
    %v2247 = vld [vmem:[#allocation14 + $0x88] sm:$0xff]
    %v2248 = vld [vmem:[#allocation14 + $0x90] sm:$0xff]
    %v2249 = vld [vmem:[#allocation14 + $0x98] sm:$0xff]
    %v2250 = vld [vmem:[#allocation14 + $0xa0] sm:$0xff]
    %v2251 = vld [vmem:[#allocation14 + $0xa8] sm:$0xff]
    %v2252 = vld [vmem:[#allocation14 + $0xb0] sm:$0xff]
    %v2253 = vld [vmem:[#allocation14 + $0xb8] sm:$0xff]
    %v2254 = vld [vmem:[#allocation14 + $0xc0] sm:$0xff]
    %v2255 = vld [vmem:[#allocation14 + $0xc8] sm:$0xff]
    %v2256 = vld [vmem:[#allocation14 + $0xd0] sm:$0xff]
    %v2257 = vld [vmem:[#allocation14 + $0xd8] sm:$0xff]
    %v2258 = vld [vmem:[#allocation14 + $0xe0] sm:$0xff]
    %v2259 = vld [vmem:[#allocation14 + $0xe8] sm:$0xff]
    %v2260 = vld [vmem:[#allocation14 + $0xf0] sm:$0xff]
    %v2261 = vld [vmem:[#allocation14 + $0xf8] sm:$0xff]
    %v2262 = vld [vmem:[#allocation14 + $0x100] sm:$0xff]
    %v2263 = vld [vmem:[#allocation14 + $0x108] sm:$0xff]
    %v2264 = vld [vmem:[#allocation14 + $0x110] sm:$0xff]
    %v2265 = vld [vmem:[#allocation14 + $0x118] sm:$0xff]
    %v2266 = vld [vmem:[#allocation14 + $0x120] sm:$0xff]
    %v2267 = vld [vmem:[#allocation14 + $0x128] sm:$0xff]
    %v2268 = vld [vmem:[#allocation14 + $0x130] sm:$0xff]
    %v2269 = vld [vmem:[#allocation14 + $0x138] sm:$0xff]
    %v2270 = vld [vmem:[#allocation14 + $0x140] sm:$0xff]
    %v2271 = vld [vmem:[#allocation14 + $0x148] sm:$0xff]
    %v2272 = vld [vmem:[#allocation14 + $0x150] sm:$0xff]
    %v2273 = vld [vmem:[#allocation14 + $0x158] sm:$0xff]
    %v2274 = vld [vmem:[#allocation14 + $0x160] sm:$0xff]
    %v2275 = vld [vmem:[#allocation14 + $0x168] sm:$0xff]
    %v2276 = vld [vmem:[#allocation14 + $0x170] sm:$0xff]
    %v2277 = vld [vmem:[#allocation14 + $0x178] sm:$0xff]
    %v2278 = vld [vmem:[#allocation14 + $0x180] sm:$0xff]
    %v2279 = vld [vmem:[#allocation14 + $0x188] sm:$0xff]
    %v2280 = vld [vmem:[#allocation14 + $0x190] sm:$0xff]
    %v2281 = vld [vmem:[#allocation14 + $0x198] sm:$0xff]
    %v2282 = vld [vmem:[#allocation14 + $0x1a0] sm:$0xff]
    %v2283 = vld [vmem:[#allocation14 + $0x1a8] sm:$0xff]
    %v2284 = vld [vmem:[#allocation14 + $0x1b0] sm:$0xff]
    %v2285 = vld [vmem:[#allocation14 + $0x1b8] sm:$0xff]
    %v2286 = vld [vmem:[#allocation14 + $0x1c0] sm:$0xff]
    %v2287 = vld [vmem:[#allocation14 + $0x1c8] sm:$0xff]
    %v2288 = vld [vmem:[#allocation14 + $0x1d0] sm:$0xff]
    %v2289 = vld [vmem:[#allocation14 + $0x1d8] sm:$0xff]
    %v2290 = vld [vmem:[#allocation14 + $0x1e0] sm:$0xff]
    %v2291 = vld [vmem:[#allocation14 + $0x1e8] sm:$0xff]
    %v2292 = vld [vmem:[#allocation14 + $0x1f0] sm:$0xff]
    %v2293 = vld [vmem:[#allocation14 + $0x1f8] sm:$0xff]
    %2294 = vmatprep.subr.mxu0 %v2291
    %2295 = vmatpush1.msra.mxu0 %v2290
    %2296 = vmatprep.subr.mxu0 %v2287
    %2297 = vmatpush1.msra.mxu0 %v2286
    %2298 = vmatprep.subr.mxu0 %v2283
    %2299 = vmatpush1.msra.mxu0 %v2282
    %2300 = vmatprep.subr.mxu0 %v2279
    %2301 = vmatpush1.msra.mxu0 %v2278
    %2302 = vmatprep.subr.mxu0 %v2275
    %2303 = vmatpush1.msra.mxu0 %v2274
    %2304 = vmatprep.subr.mxu0 %v2271
    %2305 = vmatpush1.msra.mxu0 %v2270
    %2306 = vmatprep.subr.mxu0 %v2267
    %2307 = vmatpush1.msra.mxu0 %v2266
    %2308 = vmatprep.subr.mxu0 %v2263
    %2309 = vmatpush1.msra.mxu0 %v2262
    %2310 = vmatprep.subr.mxu0 %v2259
    %2311 = vmatpush1.msra.mxu0 %v2258
    %2312 = vmatprep.subr.mxu0 %v2255
    %2313 = vmatpush1.msra.mxu0 %v2254
    %2314 = vmatprep.subr.mxu0 %v2251
    %2315 = vmatpush1.msra.mxu0 %v2250
    %2316 = vmatprep.subr.mxu0 %v2247
    %2317 = vmatpush1.msra.mxu0 %v2246
    %2318 = vmatprep.subr.mxu0 %v2243
    %2319 = vmatpush1.msra.mxu0 %v2242
    %2320 = vmatprep.subr.mxu0 %v2239
    %2321 = vmatpush1.msra.mxu0 %v2238
    %2322 = vmatprep.subr.mxu0 %v2235
    %2323 = vmatpush1.msra.mxu0 %v2234
    %2324 = vmatprep.subr.mxu0 %v2231
    %2325 = vmatpush1.msra.mxu0 %v2230
    %2326 = vmatprep.subr.mxu0 0.0
    %2327 = vmatpush2.msra.mxu0 0.0
    %2328 = vmatprep.subr.mxu0 0.0
    %2329 = vmatpush2.msra.mxu0 0.0
    %2330 = vmatprep.subr.mxu0 0.0
    %2331 = vmatpush2.msra.mxu0 0.0
    %2332 = vmatprep.subr.mxu0 0.0
    %2333 = vmatpush2.msra.mxu0 0.0
    %2334 = vmatprep.subr.mxu0 0.0
    %2335 = vmatpush2.msra.mxu0 0.0
    %2336 = vmatprep.subr.mxu0 0.0
    %2337 = vmatpush2.msra.mxu0 0.0
    %2338 = vmatprep.subr.mxu0 0.0
    %2339 = vmatpush2.msra.mxu0 0.0
    %2340 = vmatprep.subr.mxu0 0.0
    %2341 = vmatpush2.msra.mxu0 0.0
    %2342 = vmatprep.subr.mxu0 0.0
    %2343 = vmatpush2.msra.mxu0 0.0
    %2344 = vmatprep.subr.mxu0 0.0
    %2345 = vmatpush2.msra.mxu0 0.0
    %2346 = vmatprep.subr.mxu0 0.0
    %2347 = vmatpush2.msra.mxu0 0.0
    %2348 = vmatprep.subr.mxu0 0.0
    %2349 = vmatpush2.msra.mxu0 0.0
    %2350 = vmatprep.subr.mxu0 0.0
    %2351 = vmatpush2.msra.mxu0 0.0
    %2352 = vmatprep.subr.mxu0 0.0
    %2353 = vmatpush2.msra.mxu0 0.0
    %2354 = vmatprep.subr.mxu0 0.0
    %2355 = vmatpush2.msra.mxu0 0.0
    %2356 = vmatprep.subr.mxu0 0.0
    %2357 = vmatpush2.msra.mxu0 0.0
    %2358 = vmatprep.mubr.f32.mxu0 0.0
    %2359 = vmatmul.mubr.f32.gmra.mxu0 %v2225
    %v2360 = vpop.f32.mrf.mxu0
    %v2361 = vadd.f32 0.0, %v2360
    %v2362 = vpop.f32.mrf.mxu0
    %v2363 = vadd.f32 0.0, %v2362
    %2364 = vdwg.mxu0
    %2365 = vmatprep.subr.mxu0 %v2293
    %2366 = vmatpush1.msra.mxu0 %v2292
    %2367 = vmatprep.subr.mxu0 %v2289
    %2368 = vmatpush1.msra.mxu0 %v2288
    %2369 = vmatprep.subr.mxu0 %v2285
    %2370 = vmatpush1.msra.mxu0 %v2284
    %2371 = vmatprep.subr.mxu0 %v2281
    %2372 = vmatpush1.msra.mxu0 %v2280
    %2373 = vmatprep.subr.mxu0 %v2277
    %2374 = vmatpush1.msra.mxu0 %v2276
    %2375 = vmatprep.subr.mxu0 %v2273
    %2376 = vmatpush1.msra.mxu0 %v2272
    %2377 = vmatprep.subr.mxu0 %v2269
    %2378 = vmatpush1.msra.mxu0 %v2268
    %2379 = vmatprep.subr.mxu0 %v2265
    %2380 = vmatpush1.msra.mxu0 %v2264
    %2381 = vmatprep.subr.mxu0 %v2261
    %2382 = vmatpush1.msra.mxu0 %v2260
    %2383 = vmatprep.subr.mxu0 %v2257
    %2384 = vmatpush1.msra.mxu0 %v2256
    %2385 = vmatprep.subr.mxu0 %v2253
    %2386 = vmatpush1.msra.mxu0 %v2252
    %2387 = vmatprep.subr.mxu0 %v2249
    %2388 = vmatpush1.msra.mxu0 %v2248
    %2389 = vmatprep.subr.mxu0 %v2245
    %2390 = vmatpush1.msra.mxu0 %v2244
    %2391 = vmatprep.subr.mxu0 %v2241
    %2392 = vmatpush1.msra.mxu0 %v2240
    %2393 = vmatprep.subr.mxu0 %v2237
    %2394 = vmatpush1.msra.mxu0 %v2236
    %2395 = vmatprep.subr.mxu0 %v2233
    %2396 = vmatpush1.msra.mxu0 %v2232
    %2397 = vmatprep.subr.mxu0 0.0
    %2398 = vmatpush2.msra.mxu0 0.0
    %2399 = vmatprep.subr.mxu0 0.0
    %2400 = vmatpush2.msra.mxu0 0.0
    %2401 = vmatprep.subr.mxu0 0.0
    %2402 = vmatpush2.msra.mxu0 0.0
    %2403 = vmatprep.subr.mxu0 0.0
    %2404 = vmatpush2.msra.mxu0 0.0
    %2405 = vmatprep.subr.mxu0 0.0
    %2406 = vmatpush2.msra.mxu0 0.0
    %2407 = vmatprep.subr.mxu0 0.0
    %2408 = vmatpush2.msra.mxu0 0.0
    %2409 = vmatprep.subr.mxu0 0.0
    %2410 = vmatpush2.msra.mxu0 0.0
    %2411 = vmatprep.subr.mxu0 0.0
    %2412 = vmatpush2.msra.mxu0 0.0
    %2413 = vmatprep.subr.mxu0 0.0
    %2414 = vmatpush2.msra.mxu0 0.0
    %2415 = vmatprep.subr.mxu0 0.0
    %2416 = vmatpush2.msra.mxu0 0.0
    %2417 = vmatprep.subr.mxu0 0.0
    %2418 = vmatpush2.msra.mxu0 0.0
    %2419 = vmatprep.subr.mxu0 0.0
    %2420 = vmatpush2.msra.mxu0 0.0
    %2421 = vmatprep.subr.mxu0 0.0
    %2422 = vmatpush2.msra.mxu0 0.0
    %2423 = vmatprep.subr.mxu0 0.0
    %2424 = vmatpush2.msra.mxu0 0.0
    %2425 = vmatprep.subr.mxu0 0.0
    %2426 = vmatpush2.msra.mxu0 0.0
    %2427 = vmatprep.subr.mxu0 0.0
    %2428 = vmatpush2.msra.mxu0 0.0
    %2429 = vmatprep.mubr.f32.mxu0 0.0
    %2430 = vmatmul.mubr.f32.gmra.mxu0 %v2225
    %v2431 = vpop.f32.mrf.mxu0
    %v2432 = vadd.f32 0.0, %v2431
    %v2433 = vpop.f32.mrf.mxu0
    %v2434 = vadd.f32 0.0, %v2433
    %2435 = vdwg.mxu0
    %v2440 = vcombine.low %v2361, %v2363
    %v2441 = vcombine.low %v2432, %v2434
    %v2443 = vunpack.c.l.s4 1983009808
    %v2444 = vunpack.c.0.s8 %v2443
    %v2445 = vlaneseq
    %v2446 = vshrl.u32 %v2445, 7
    %v2447 = vsub.s32 %v2444, %v2446
    %v2448 = vrot.slane %v2440, %v2447
    %v2450 = vunpack.c.l.s4 1983009808
    %v2451 = vunpack.c.0.s8 %v2450
    %v2452 = vlaneseq
    %v2453 = vshrl.u32 %v2452, 7
    %v2454 = vsub.s32 %v2451, %v2453
    %v2455 = vrot.slane %v2441, %v2454
    %v2456 = vcombine.low %v2448, %v2455
    %v2458 = vadd.f32 %v2229, %v2456
    %v2459 = vxor.u32 %v2458, 2147483648
    %v2460 = vmul.f32 %v2459, 1.442695
    %v2461 = vpow.pop %v2460
    %v2462 = vadd.f32 %v2461, 1.0
    %v2463 = vrcp.pop %v2462
    %v2464 = vmul.f32 1.0, %v2463
    %v2466 = vrot.slane %v2458, 2
    %v2468 = vxor.u32 %v2466, 2147483648
    %v2469 = vmul.f32 %v2468, 1.442695
    %v2470 = vpow.pop %v2469
    %v2471 = vadd.f32 %v2470, 1.0
    %v2472 = vrcp.pop %v2471
    %v2473 = vmul.f32 1.0, %v2472
    %v2474 = vrot.slane %v2458, 4
    %v2476 = vtanh.pop %v2474
    %v2477 = vrot.slane %v2458, 6
    %v2479 = vxor.u32 %v2477, 2147483648
    %v2480 = vmul.f32 %v2479, 1.442695
    %v2481 = vpow.pop %v2480
    %v2482 = vadd.f32 %v2481, 1.0
    %v2483 = vrcp.pop %v2482
    %v2484 = vmul.f32 1.0, %v2483
    %v2485 = vmul.f32 %v2473, %v2223
    %v2486 = vmul.f32 %v2464, %v2476
    %v2487 = vadd.f32 %v2485, %v2486
    %v2488 = vtanh.pop %v2487
    %v2489 = vmul.f32 %v2484, %v2488
    %s2490 = scalar_lea.vmem [#allocation3], 12
    %2491 = vst [vmem:[%s2490] sm:$0x3] %v2489
    %s2492 = scalar_lea.vmem [#allocation4], 56
    %v2493 = vld [vmem:[%s2492] sm:$0xff]
    %v2494 = vld [vmem:[#allocation14] sm:$0xff]
    %v2495 = vld [vmem:[#allocation14 + $0x8] sm:$0xff]
    %v2496 = vld [vmem:[#allocation14 + $0x10] sm:$0xff]
    %v2497 = vld [vmem:[#allocation14 + $0x18] sm:$0xff]
    %v2498 = vld [vmem:[#allocation14 + $0x20] sm:$0xff]
    %v2499 = vld [vmem:[#allocation14 + $0x28] sm:$0xff]
    %v2500 = vld [vmem:[#allocation14 + $0x30] sm:$0xff]
    %v2501 = vld [vmem:[#allocation14 + $0x38] sm:$0xff]
    %v2502 = vld [vmem:[#allocation14 + $0x40] sm:$0xff]
    %v2503 = vld [vmem:[#allocation14 + $0x48] sm:$0xff]
    %v2504 = vld [vmem:[#allocation14 + $0x50] sm:$0xff]
    %v2505 = vld [vmem:[#allocation14 + $0x58] sm:$0xff]
    %v2506 = vld [vmem:[#allocation14 + $0x60] sm:$0xff]
    %v2507 = vld [vmem:[#allocation14 + $0x68] sm:$0xff]
    %v2508 = vld [vmem:[#allocation14 + $0x70] sm:$0xff]
    %v2509 = vld [vmem:[#allocation14 + $0x78] sm:$0xff]
    %v2510 = vld [vmem:[#allocation14 + $0x80] sm:$0xff]
    %v2511 = vld [vmem:[#allocation14 + $0x88] sm:$0xff]
    %v2512 = vld [vmem:[#allocation14 + $0x90] sm:$0xff]
    %v2513 = vld [vmem:[#allocation14 + $0x98] sm:$0xff]
    %v2514 = vld [vmem:[#allocation14 + $0xa0] sm:$0xff]
    %v2515 = vld [vmem:[#allocation14 + $0xa8] sm:$0xff]
    %v2516 = vld [vmem:[#allocation14 + $0xb0] sm:$0xff]
    %v2517 = vld [vmem:[#allocation14 + $0xb8] sm:$0xff]
    %v2518 = vld [vmem:[#allocation14 + $0xc0] sm:$0xff]
    %v2519 = vld [vmem:[#allocation14 + $0xc8] sm:$0xff]
    %v2520 = vld [vmem:[#allocation14 + $0xd0] sm:$0xff]
    %v2521 = vld [vmem:[#allocation14 + $0xd8] sm:$0xff]
    %v2522 = vld [vmem:[#allocation14 + $0xe0] sm:$0xff]
    %v2523 = vld [vmem:[#allocation14 + $0xe8] sm:$0xff]
    %v2524 = vld [vmem:[#allocation14 + $0xf0] sm:$0xff]
    %v2525 = vld [vmem:[#allocation14 + $0xf8] sm:$0xff]
    %v2526 = vld [vmem:[#allocation14 + $0x100] sm:$0xff]
    %v2527 = vld [vmem:[#allocation14 + $0x108] sm:$0xff]
    %v2528 = vld [vmem:[#allocation14 + $0x110] sm:$0xff]
    %v2529 = vld [vmem:[#allocation14 + $0x118] sm:$0xff]
    %v2530 = vld [vmem:[#allocation14 + $0x120] sm:$0xff]
    %v2531 = vld [vmem:[#allocation14 + $0x128] sm:$0xff]
    %v2532 = vld [vmem:[#allocation14 + $0x130] sm:$0xff]
    %v2533 = vld [vmem:[#allocation14 + $0x138] sm:$0xff]
    %v2534 = vld [vmem:[#allocation14 + $0x140] sm:$0xff]
    %v2535 = vld [vmem:[#allocation14 + $0x148] sm:$0xff]
    %v2536 = vld [vmem:[#allocation14 + $0x150] sm:$0xff]
    %v2537 = vld [vmem:[#allocation14 + $0x158] sm:$0xff]
    %v2538 = vld [vmem:[#allocation14 + $0x160] sm:$0xff]
    %v2539 = vld [vmem:[#allocation14 + $0x168] sm:$0xff]
    %v2540 = vld [vmem:[#allocation14 + $0x170] sm:$0xff]
    %v2541 = vld [vmem:[#allocation14 + $0x178] sm:$0xff]
    %v2542 = vld [vmem:[#allocation14 + $0x180] sm:$0xff]
    %v2543 = vld [vmem:[#allocation14 + $0x188] sm:$0xff]
    %v2544 = vld [vmem:[#allocation14 + $0x190] sm:$0xff]
    %v2545 = vld [vmem:[#allocation14 + $0x198] sm:$0xff]
    %v2546 = vld [vmem:[#allocation14 + $0x1a0] sm:$0xff]
    %v2547 = vld [vmem:[#allocation14 + $0x1a8] sm:$0xff]
    %v2548 = vld [vmem:[#allocation14 + $0x1b0] sm:$0xff]
    %v2549 = vld [vmem:[#allocation14 + $0x1b8] sm:$0xff]
    %v2550 = vld [vmem:[#allocation14 + $0x1c0] sm:$0xff]
    %v2551 = vld [vmem:[#allocation14 + $0x1c8] sm:$0xff]
    %v2552 = vld [vmem:[#allocation14 + $0x1d0] sm:$0xff]
    %v2553 = vld [vmem:[#allocation14 + $0x1d8] sm:$0xff]
    %v2554 = vld [vmem:[#allocation14 + $0x1e0] sm:$0xff]
    %v2555 = vld [vmem:[#allocation14 + $0x1e8] sm:$0xff]
    %v2556 = vld [vmem:[#allocation14 + $0x1f0] sm:$0xff]
    %v2557 = vld [vmem:[#allocation14 + $0x1f8] sm:$0xff]
    %2558 = vmatprep.subr.mxu0 %v2555
    %2559 = vmatpush1.msra.mxu0 %v2554
    %2560 = vmatprep.subr.mxu0 %v2551
    %2561 = vmatpush1.msra.mxu0 %v2550
    %2562 = vmatprep.subr.mxu0 %v2547
    %2563 = vmatpush1.msra.mxu0 %v2546
    %2564 = vmatprep.subr.mxu0 %v2543
    %2565 = vmatpush1.msra.mxu0 %v2542
    %2566 = vmatprep.subr.mxu0 %v2539
    %2567 = vmatpush1.msra.mxu0 %v2538
    %2568 = vmatprep.subr.mxu0 %v2535
    %2569 = vmatpush1.msra.mxu0 %v2534
    %2570 = vmatprep.subr.mxu0 %v2531
    %2571 = vmatpush1.msra.mxu0 %v2530
    %2572 = vmatprep.subr.mxu0 %v2527
    %2573 = vmatpush1.msra.mxu0 %v2526
    %2574 = vmatprep.subr.mxu0 %v2523
    %2575 = vmatpush1.msra.mxu0 %v2522
    %2576 = vmatprep.subr.mxu0 %v2519
    %2577 = vmatpush1.msra.mxu0 %v2518
    %2578 = vmatprep.subr.mxu0 %v2515
    %2579 = vmatpush1.msra.mxu0 %v2514
    %2580 = vmatprep.subr.mxu0 %v2511
    %2581 = vmatpush1.msra.mxu0 %v2510
    %2582 = vmatprep.subr.mxu0 %v2507
    %2583 = vmatpush1.msra.mxu0 %v2506
    %2584 = vmatprep.subr.mxu0 %v2503
    %2585 = vmatpush1.msra.mxu0 %v2502
    %2586 = vmatprep.subr.mxu0 %v2499
    %2587 = vmatpush1.msra.mxu0 %v2498
    %2588 = vmatprep.subr.mxu0 %v2495
    %2589 = vmatpush1.msra.mxu0 %v2494
    %2590 = vmatprep.subr.mxu0 0.0
    %2591 = vmatpush2.msra.mxu0 0.0
    %2592 = vmatprep.subr.mxu0 0.0
    %2593 = vmatpush2.msra.mxu0 0.0
    %2594 = vmatprep.subr.mxu0 0.0
    %2595 = vmatpush2.msra.mxu0 0.0
    %2596 = vmatprep.subr.mxu0 0.0
    %2597 = vmatpush2.msra.mxu0 0.0
    %2598 = vmatprep.subr.mxu0 0.0
    %2599 = vmatpush2.msra.mxu0 0.0
    %2600 = vmatprep.subr.mxu0 0.0
    %2601 = vmatpush2.msra.mxu0 0.0
    %2602 = vmatprep.subr.mxu0 0.0
    %2603 = vmatpush2.msra.mxu0 0.0
    %2604 = vmatprep.subr.mxu0 0.0
    %2605 = vmatpush2.msra.mxu0 0.0
    %2606 = vmatprep.subr.mxu0 0.0
    %2607 = vmatpush2.msra.mxu0 0.0
    %2608 = vmatprep.subr.mxu0 0.0
    %2609 = vmatpush2.msra.mxu0 0.0
    %2610 = vmatprep.subr.mxu0 0.0
    %2611 = vmatpush2.msra.mxu0 0.0
    %2612 = vmatprep.subr.mxu0 0.0
    %2613 = vmatpush2.msra.mxu0 0.0
    %2614 = vmatprep.subr.mxu0 0.0
    %2615 = vmatpush2.msra.mxu0 0.0
    %2616 = vmatprep.subr.mxu0 0.0
    %2617 = vmatpush2.msra.mxu0 0.0
    %2618 = vmatprep.subr.mxu0 0.0
    %2619 = vmatpush2.msra.mxu0 0.0
    %2620 = vmatprep.subr.mxu0 0.0
    %2621 = vmatpush2.msra.mxu0 0.0
    %2622 = vmatprep.mubr.f32.mxu0 0.0
    %2623 = vmatmul.mubr.f32.gmra.mxu0 %v2489
    %v2624 = vpop.f32.mrf.mxu0
    %v2625 = vadd.f32 0.0, %v2624
    %v2626 = vpop.f32.mrf.mxu0
    %v2627 = vadd.f32 0.0, %v2626
    %2628 = vdwg.mxu0
    %2629 = vmatprep.subr.mxu0 %v2557
    %2630 = vmatpush1.msra.mxu0 %v2556
    %2631 = vmatprep.subr.mxu0 %v2553
    %2632 = vmatpush1.msra.mxu0 %v2552
    %2633 = vmatprep.subr.mxu0 %v2549
    %2634 = vmatpush1.msra.mxu0 %v2548
    %2635 = vmatprep.subr.mxu0 %v2545
    %2636 = vmatpush1.msra.mxu0 %v2544
    %2637 = vmatprep.subr.mxu0 %v2541
    %2638 = vmatpush1.msra.mxu0 %v2540
    %2639 = vmatprep.subr.mxu0 %v2537
    %2640 = vmatpush1.msra.mxu0 %v2536
    %2641 = vmatprep.subr.mxu0 %v2533
    %2642 = vmatpush1.msra.mxu0 %v2532
    %2643 = vmatprep.subr.mxu0 %v2529
    %2644 = vmatpush1.msra.mxu0 %v2528
    %2645 = vmatprep.subr.mxu0 %v2525
    %2646 = vmatpush1.msra.mxu0 %v2524
    %2647 = vmatprep.subr.mxu0 %v2521
    %2648 = vmatpush1.msra.mxu0 %v2520
    %2649 = vmatprep.subr.mxu0 %v2517
    %2650 = vmatpush1.msra.mxu0 %v2516
    %2651 = vmatprep.subr.mxu0 %v2513
    %2652 = vmatpush1.msra.mxu0 %v2512
    %2653 = vmatprep.subr.mxu0 %v2509
    %2654 = vmatpush1.msra.mxu0 %v2508
    %2655 = vmatprep.subr.mxu0 %v2505
    %2656 = vmatpush1.msra.mxu0 %v2504
    %2657 = vmatprep.subr.mxu0 %v2501
    %2658 = vmatpush1.msra.mxu0 %v2500
    %2659 = vmatprep.subr.mxu0 %v2497
    %2660 = vmatpush1.msra.mxu0 %v2496
    %2661 = vmatprep.subr.mxu0 0.0
    %2662 = vmatpush2.msra.mxu0 0.0
    %2663 = vmatprep.subr.mxu0 0.0
    %2664 = vmatpush2.msra.mxu0 0.0
    %2665 = vmatprep.subr.mxu0 0.0
    %2666 = vmatpush2.msra.mxu0 0.0
    %2667 = vmatprep.subr.mxu0 0.0
    %2668 = vmatpush2.msra.mxu0 0.0
    %2669 = vmatprep.subr.mxu0 0.0
    %2670 = vmatpush2.msra.mxu0 0.0
    %2671 = vmatprep.subr.mxu0 0.0
    %2672 = vmatpush2.msra.mxu0 0.0
    %2673 = vmatprep.subr.mxu0 0.0
    %2674 = vmatpush2.msra.mxu0 0.0
    %2675 = vmatprep.subr.mxu0 0.0
    %2676 = vmatpush2.msra.mxu0 0.0
    %2677 = vmatprep.subr.mxu0 0.0
    %2678 = vmatpush2.msra.mxu0 0.0
    %2679 = vmatprep.subr.mxu0 0.0
    %2680 = vmatpush2.msra.mxu0 0.0
    %2681 = vmatprep.subr.mxu0 0.0
    %2682 = vmatpush2.msra.mxu0 0.0
    %2683 = vmatprep.subr.mxu0 0.0
    %2684 = vmatpush2.msra.mxu0 0.0
    %2685 = vmatprep.subr.mxu0 0.0
    %2686 = vmatpush2.msra.mxu0 0.0
    %2687 = vmatprep.subr.mxu0 0.0
    %2688 = vmatpush2.msra.mxu0 0.0
    %2689 = vmatprep.subr.mxu0 0.0
    %2690 = vmatpush2.msra.mxu0 0.0
    %2691 = vmatprep.subr.mxu0 0.0
    %2692 = vmatpush2.msra.mxu0 0.0
    %2693 = vmatprep.mubr.f32.mxu0 0.0
    %2694 = vmatmul.mubr.f32.gmra.mxu0 %v2489
    %v2695 = vpop.f32.mrf.mxu0
    %v2696 = vadd.f32 0.0, %v2695
    %v2697 = vpop.f32.mrf.mxu0
    %v2698 = vadd.f32 0.0, %v2697
    %2699 = vdwg.mxu0
    %v2704 = vcombine.low %v2625, %v2627
    %v2705 = vcombine.low %v2696, %v2698
    %v2707 = vunpack.c.l.s4 1983009808
    %v2708 = vunpack.c.0.s8 %v2707
    %v2709 = vlaneseq
    %v2710 = vshrl.u32 %v2709, 7
    %v2711 = vsub.s32 %v2708, %v2710
    %v2712 = vrot.slane %v2704, %v2711
    %v2714 = vunpack.c.l.s4 1983009808
    %v2715 = vunpack.c.0.s8 %v2714
    %v2716 = vlaneseq
    %v2717 = vshrl.u32 %v2716, 7
    %v2718 = vsub.s32 %v2715, %v2717
    %v2719 = vrot.slane %v2705, %v2718
    %v2720 = vcombine.low %v2712, %v2719
    %v2722 = vadd.f32 %v2493, %v2720
    %v2723 = vxor.u32 %v2722, 2147483648
    %v2724 = vmul.f32 %v2723, 1.442695
    %v2725 = vpow.pop %v2724
    %v2726 = vadd.f32 %v2725, 1.0
    %v2727 = vrcp.pop %v2726
    %v2728 = vmul.f32 1.0, %v2727
    %v2730 = vrot.slane %v2722, 2
    %v2732 = vxor.u32 %v2730, 2147483648
    %v2733 = vmul.f32 %v2732, 1.442695
    %v2734 = vpow.pop %v2733
    %v2735 = vadd.f32 %v2734, 1.0
    %v2736 = vrcp.pop %v2735
    %v2737 = vmul.f32 1.0, %v2736
    %v2738 = vrot.slane %v2722, 4
    %v2740 = vtanh.pop %v2738
    %v2741 = vrot.slane %v2722, 6
    %v2743 = vxor.u32 %v2741, 2147483648
    %v2744 = vmul.f32 %v2743, 1.442695
    %v2745 = vpow.pop %v2744
    %v2746 = vadd.f32 %v2745, 1.0
    %v2747 = vrcp.pop %v2746
    %v2748 = vmul.f32 1.0, %v2747
    %v2749 = vmul.f32 %v2737, %v2487
    %v2750 = vmul.f32 %v2728, %v2740
    %v2751 = vadd.f32 %v2749, %v2750
    %v2752 = vtanh.pop %v2751
    %v2753 = vmul.f32 %v2748, %v2752
    %s2754 = scalar_lea.vmem [#allocation3], 14
    %2755 = vst [vmem:[%s2754] sm:$0x3] %v2753
    %2756 = vst [vmem:[#allocation22] sm:$0x3] %v2753
    %2757 = vst [vmem:[#allocation24] sm:$0x3] %v2751
    %s2758 = smul.u32 4, 2
    %s2759 = smul.u32 %s2758, 16
    %s2760 = smul.u32 %s2759, 1
    %s2761 = sshll.u32 %s2760, 4
    %2762 = dma.done [#allocation5], %s2761
    %v2763 = vld [vmem:[#allocation2] sm:$0xf]
    %v2764 = vld [vmem:[#allocation2 + $0x4] sm:$0xf]
    %v2765 = vld [vmem:[#allocation2 + $0x8] sm:$0xf]
    %v2766 = vld [vmem:[#allocation2 + $0xc] sm:$0xf]
    %v2767 = vld [vmem:[#allocation2 + $0x10] sm:$0xf]
    %v2768 = vld [vmem:[#allocation2 + $0x14] sm:$0xf]
    %v2769 = vld [vmem:[#allocation2 + $0x18] sm:$0xf]
    %v2770 = vld [vmem:[#allocation2 + $0x1c] sm:$0xf]
    %v2771 = vld [vmem:[#allocation2 + $0x20] sm:$0xf]
    %v2772 = vld [vmem:[#allocation2 + $0x24] sm:$0xf]
    %v2773 = vld [vmem:[#allocation2 + $0x28] sm:$0xf]
    %v2774 = vld [vmem:[#allocation2 + $0x2c] sm:$0xf]
    %v2775 = vld [vmem:[#allocation2 + $0x30] sm:$0xf]
    %v2776 = vld [vmem:[#allocation2 + $0x34] sm:$0xf]
    %v2777 = vld [vmem:[#allocation2 + $0x38] sm:$0xf]
    %v2778 = vld [vmem:[#allocation2 + $0x3c] sm:$0xf]
    %v2779 = vld [vmem:[#allocation2 + $0x40] sm:$0xf]
    %v2780 = vld [vmem:[#allocation2 + $0x44] sm:$0xf]
    %v2781 = vld [vmem:[#allocation2 + $0x48] sm:$0xf]
    %v2782 = vld [vmem:[#allocation2 + $0x4c] sm:$0xf]
    %v2783 = vld [vmem:[#allocation2 + $0x50] sm:$0xf]
    %v2784 = vld [vmem:[#allocation2 + $0x54] sm:$0xf]
    %v2785 = vld [vmem:[#allocation2 + $0x58] sm:$0xf]
    %v2786 = vld [vmem:[#allocation2 + $0x5c] sm:$0xf]
    %v2787 = vld [vmem:[#allocation2 + $0x60] sm:$0xf]
    %v2788 = vld [vmem:[#allocation2 + $0x64] sm:$0xf]
    %v2789 = vld [vmem:[#allocation2 + $0x68] sm:$0xf]
    %v2790 = vld [vmem:[#allocation2 + $0x6c] sm:$0xf]
    %v2791 = vld [vmem:[#allocation2 + $0x70] sm:$0xf]
    %v2792 = vld [vmem:[#allocation2 + $0x74] sm:$0xf]
    %v2793 = vld [vmem:[#allocation2 + $0x78] sm:$0xf]
    %v2794 = vld [vmem:[#allocation2 + $0x7c] sm:$0xf]
    %v2795 = vld [vmem:[#allocation3] sm:$0x3]
    %v2796 = vld [vmem:[#allocation3 + $0x2] sm:$0x3]
    %v2797 = vld [vmem:[#allocation3 + $0x4] sm:$0x3]
    %v2798 = vld [vmem:[#allocation3 + $0x6] sm:$0x3]
    %v2799 = vld [vmem:[#allocation3 + $0x8] sm:$0x3]
    %v2800 = vld [vmem:[#allocation3 + $0xa] sm:$0x3]
    %v2801 = vld [vmem:[#allocation3 + $0xc] sm:$0x3]
    %v2802 = vld [vmem:[#allocation3 + $0xe] sm:$0x3]
    %v2811 = vcombine.low %v2795, %v2796
    %v2812 = vcombine.low %v2797, %v2798
    %v2814 = vunpack.c.l.s4 1983009808
    %v2815 = vunpack.c.0.s8 %v2814
    %v2816 = vlaneseq
    %v2817 = vshrl.u32 %v2816, 7
    %v2818 = vsub.s32 %v2815, %v2817
    %v2819 = vrot.slane %v2811, %v2818
    %v2821 = vunpack.c.l.s4 1983009808
    %v2822 = vunpack.c.0.s8 %v2821
    %v2823 = vlaneseq
    %v2824 = vshrl.u32 %v2823, 7
    %v2825 = vsub.s32 %v2822, %v2824
    %v2826 = vrot.slane %v2812, %v2825
    %v2827 = vcombine.low %v2819, %v2826
    %v2828 = vcombine.low %v2799, %v2800
    %v2829 = vcombine.low %v2801, %v2802
    %v2831 = vunpack.c.l.s4 1983009808
    %v2832 = vunpack.c.0.s8 %v2831
    %v2833 = vlaneseq
    %v2834 = vshrl.u32 %v2833, 7
    %v2835 = vsub.s32 %v2832, %v2834
    %v2836 = vrot.slane %v2828, %v2835
    %v2838 = vunpack.c.l.s4 1983009808
    %v2839 = vunpack.c.0.s8 %v2838
    %v2840 = vlaneseq
    %v2841 = vshrl.u32 %v2840, 7
    %v2842 = vsub.s32 %v2839, %v2841
    %v2843 = vrot.slane %v2829, %v2842
    %v2844 = vcombine.low %v2836, %v2843
    %v2847 = vpack.c.bf16 %v2844, %v2827
    %v2848 = vld [vmem:[#allocation15] sm:$0xf]
    %v2849 = vld [vmem:[#allocation15 + $0x4] sm:$0xf]
    %v2850 = vld [vmem:[#allocation15 + $0x8] sm:$0xf]
    %v2851 = vld [vmem:[#allocation15 + $0xc] sm:$0xf]
    %v2852 = vld [vmem:[#allocation15 + $0x10] sm:$0xf]
    %v2853 = vld [vmem:[#allocation15 + $0x14] sm:$0xf]
    %v2854 = vld [vmem:[#allocation15 + $0x18] sm:$0xf]
    %v2855 = vld [vmem:[#allocation15 + $0x1c] sm:$0xf]
    %v2856 = vld [vmem:[#allocation15 + $0x20] sm:$0xf]
    %v2857 = vld [vmem:[#allocation15 + $0x24] sm:$0xf]
    %v2858 = vld [vmem:[#allocation15 + $0x28] sm:$0xf]
    %v2859 = vld [vmem:[#allocation15 + $0x2c] sm:$0xf]
    %v2860 = vld [vmem:[#allocation15 + $0x30] sm:$0xf]
    %v2861 = vld [vmem:[#allocation15 + $0x34] sm:$0xf]
    %v2862 = vld [vmem:[#allocation15 + $0x38] sm:$0xf]
    %v2863 = vld [vmem:[#allocation15 + $0x3c] sm:$0xf]
    %v2880 = vunpack.c.l.b16 %v2848
    %v2881 = vunpack.c.l.b16 %v2849
    %v2882 = vunpack.c.l.b16 %v2850
    %v2883 = vunpack.c.l.b16 %v2851
    %v2884 = vunpack.c.l.b16 %v2852
    %v2885 = vunpack.c.l.b16 %v2853
    %v2886 = vunpack.c.l.b16 %v2854
    %v2887 = vunpack.c.l.b16 %v2855
    %v2888 = vunpack.c.l.b16 %v2856
    %v2889 = vunpack.c.l.b16 %v2857
    %v2890 = vunpack.c.l.b16 %v2858
    %v2891 = vunpack.c.l.b16 %v2859
    %v2892 = vunpack.c.l.b16 %v2860
    %v2893 = vunpack.c.l.b16 %v2861
    %v2894 = vunpack.c.l.b16 %v2862
    %v2895 = vunpack.c.l.b16 %v2863
    %v2896 = vpack.c.b16 %v2881, %v2880
    %v2897 = vpack.c.b16 %v2883, %v2882
    %v2898 = vpack.c.b16 %v2885, %v2884
    %v2899 = vpack.c.b16 %v2887, %v2886
    %v2900 = vpack.c.b16 %v2889, %v2888
    %v2901 = vpack.c.b16 %v2891, %v2890
    %v2902 = vpack.c.b16 %v2893, %v2892
    %v2903 = vpack.c.b16 %v2895, %v2894
    %2912 = vmatprep.subr.bf16.mxu0 0
    %2913 = vmatpush1.bf16.msra.mxu0 %v2903
    %2914 = vmatprep.subr.bf16.mxu0 0
    %2915 = vmatpush1.bf16.msra.mxu0 %v2902
    %2916 = vmatprep.subr.bf16.mxu0 0
    %2917 = vmatpush1.bf16.msra.mxu0 %v2901
    %2918 = vmatprep.subr.bf16.mxu0 0
    %2919 = vmatpush1.bf16.msra.mxu0 %v2900
    %2920 = vmatprep.subr.bf16.mxu0 0
    %2921 = vmatpush1.bf16.msra.mxu0 %v2899
    %2922 = vmatprep.subr.bf16.mxu0 0
    %2923 = vmatpush1.bf16.msra.mxu0 %v2898
    %2924 = vmatprep.subr.bf16.mxu0 0
    %2925 = vmatpush1.bf16.msra.mxu0 %v2897
    %2926 = vmatprep.subr.bf16.mxu0 0
    %2927 = vmatpush1.bf16.msra.mxu0 %v2896
    %2928 = vmatprep.subr.bf16.mxu0 0
    %2929 = vmatpush2.bf16.msra.mxu0 0
    %2930 = vmatprep.subr.bf16.mxu0 0
    %2931 = vmatpush2.bf16.msra.mxu0 0
    %2932 = vmatprep.subr.bf16.mxu0 0
    %2933 = vmatpush2.bf16.msra.mxu0 0
    %2934 = vmatprep.subr.bf16.mxu0 0
    %2935 = vmatpush2.bf16.msra.mxu0 0
    %2936 = vmatprep.subr.bf16.mxu0 0
    %2937 = vmatpush2.bf16.msra.mxu0 0
    %2938 = vmatprep.subr.bf16.mxu0 0
    %2939 = vmatpush2.bf16.msra.mxu0 0
    %2940 = vmatprep.subr.bf16.mxu0 0
    %2941 = vmatpush2.bf16.msra.mxu0 0
    %2942 = vmatprep.subr.bf16.mxu0 0
    %2943 = vmatpush2.bf16.msra.mxu0 0
    %2944 = vmatprep.mubr.bf16.mxu0 0
    %2945 = vmatmul.mubr.bf16.gmra.mxu0 %v2847
    %v2946 = vpop.f32.mrf.mxu0
    %v2947 = vadd.f32 0.0, %v2946
    %v2948 = vpop.f32.mrf.mxu0
    %v2949 = vpop.f32.mrf.mxu0
    %v2950 = vadd.f32 0.0, %v2949
    %v2951 = vpop.f32.mrf.mxu0
    %2952 = vdwg.mxu0
    %v2955 = vcombine.high %v2947, %v2947
    %v2957 = vunpack.c.l.s4 1983009808
    %v2958 = vunpack.c.0.s8 %v2957
    %v2959 = vlaneseq
    %v2960 = vshrl.u32 %v2959, 7
    %v2961 = vsub.s32 %v2958, %v2960
    %v2962 = vrot.slane %v2947, %v2961
    %v2964 = vunpack.c.l.s4 1983009808
    %v2965 = vunpack.c.0.s8 %v2964
    %v2966 = vlaneseq
    %v2967 = vshrl.u32 %v2966, 7
    %v2968 = vsub.s32 %v2965, %v2967
    %v2969 = vrot.slane %v2955, %v2968
    %v2970 = vcombine.high %v2962, %v2962
    %v2971 = vcombine.high %v2969, %v2969
    %v2972 = vcombine.high %v2950, %v2950
    %v2974 = vunpack.c.l.s4 1983009808
    %v2975 = vunpack.c.0.s8 %v2974
    %v2976 = vlaneseq
    %v2977 = vshrl.u32 %v2976, 7
    %v2978 = vsub.s32 %v2975, %v2977
    %v2979 = vrot.slane %v2950, %v2978
    %v2981 = vunpack.c.l.s4 1983009808
    %v2982 = vunpack.c.0.s8 %v2981
    %v2983 = vlaneseq
    %v2984 = vshrl.u32 %v2983, 7
    %v2985 = vsub.s32 %v2982, %v2984
    %v2986 = vrot.slane %v2972, %v2985
    %v2987 = vcombine.high %v2979, %v2979
    %v2988 = vcombine.high %v2986, %v2986
    %v2997 = vrot.slane %v2962, 7
    %v2998 = vrot.slane %v2997, 2
    %v2999 = vrot.slane %v2970, 7
    %v3000 = vrot.slane %v2999, 2
    %v3001 = vrot.slane %v2969, 7
    %v3002 = vrot.slane %v3001, 2
    %v3003 = vrot.slane %v2971, 7
    %v3004 = vrot.slane %v3003, 2
    %v3005 = vrot.slane %v2979, 7
    %v3006 = vrot.slane %v3005, 2
    %v3007 = vrot.slane %v2987, 7
    %v3008 = vrot.slane %v3007, 2
    %v3009 = vrot.slane %v2986, 7
    %v3010 = vrot.slane %v3009, 2
    %v3011 = vrot.slane %v2988, 7
    %v3012 = vrot.slane %v3011, 2
    %v3021 = vpack.c.bf16 %v2962, %v2962
    %v3022 = vpack.c.bf16 %v2970, %v2970
    %v3023 = vpack.c.bf16 %v2969, %v2969
    %v3024 = vpack.c.bf16 %v2971, %v2971
    %v3025 = vpack.c.bf16 %v2979, %v2979
    %v3026 = vpack.c.bf16 %v2987, %v2987
    %v3027 = vpack.c.bf16 %v2986, %v2986
    %v3028 = vpack.c.bf16 %v2988, %v2988
    %v3029 = vpack.c.bf16 %v2998, %v2998
    %v3030 = vpack.c.bf16 %v3000, %v3000
    %v3031 = vpack.c.bf16 %v3002, %v3002
    %v3032 = vpack.c.bf16 %v3004, %v3004
    %v3033 = vpack.c.bf16 %v3006, %v3006
    %v3034 = vpack.c.bf16 %v3008, %v3008
    %v3035 = vpack.c.bf16 %v3010, %v3010
    %v3036 = vpack.c.bf16 %v3012, %v3012
    %v3037 = vld [vmem:[#allocation9] sm:$0x3]
    %v3040 = vunpack.c.l.s4 1966171168
    %v3041 = vunpack.c.0.s8 %v3040
    %v3042 = vlaneseq
    %v3043 = vshrl.u32 %v3042, 7
    %v3044 = vsub.s32 %v3041, %v3043
    %v3045 = vrot.slane %v3037, %v3044
    %v3046 = vcombine.high %v3045, %v3045
    %v3048 = vunpack.c.l.s4 1966171168
    %v3049 = vunpack.c.0.s8 %v3048
    %v3050 = vlaneseq
    %v3051 = vshrl.u32 %v3050, 7
    %v3052 = vsub.s32 %v3049, %v3051
    %v3053 = vrot.slane %v3045, %v3052
    %v3055 = vunpack.c.l.s4 1966171168
    %v3056 = vunpack.c.0.s8 %v3055
    %v3057 = vlaneseq
    %v3058 = vshrl.u32 %v3057, 7
    %v3059 = vsub.s32 %v3056, %v3058
    %v3060 = vrot.slane %v3046, %v3059
    %v3061 = vlaneseq
    %v3062 = vshrl.u32 %v3061, 7
    %v3063 = vsub.s32 0, %v3062
    %v3064 = vrot.slane %v3053, %v3063
    %v3065 = vlaneseq
    %v3066 = vshrl.u32 %v3065, 7
    %v3067 = vsub.s32 0, %v3066
    %v3068 = vrot.slane %v3060, %v3067
    %v3079 = vunpack.c.l.b16 %v3021
    %v3080 = vunpack.c.l.b16 %v3022
    %v3081 = vunpack.c.l.b16 %v3023
    %v3082 = vunpack.c.l.b16 %v3024
    %v3083 = vunpack.c.l.b16 %v3025
    %v3084 = vunpack.c.l.b16 %v3026
    %v3085 = vunpack.c.l.b16 %v3027
    %v3086 = vunpack.c.l.b16 %v3028
    %v3087 = vrot.slane %v3080, 7
    %vm3088 = vcmask 1041409
    %v3089 = vsel %vm3088, %v3087, %v3079
    %v3090 = vrot.slane %v3081, 6
    %vm3091 = vcmask 1042434
    %v3092 = vsel %vm3091, %v3090, %v3089
    %v3093 = vrot.slane %v3082, 5
    %vm3094 = vcmask 1043459
    %v3095 = vsel %vm3094, %v3093, %v3092
    %v3096 = vrot.slane %v3083, 4
    %vm3097 = vcmask 1044484
    %v3098 = vsel %vm3097, %v3096, %v3095
    %v3099 = vrot.slane %v3084, 3
    %vm3100 = vcmask 1045509
    %v3101 = vsel %vm3100, %v3099, %v3098
    %v3102 = vrot.slane %v3085, 2
    %vm3103 = vcmask 1046534
    %v3104 = vsel %vm3103, %v3102, %v3101
    %v3105 = vrot.slane %v3086, 1
    %vm3106 = vcmask 1047559
    %v3107 = vsel %vm3106, %v3105, %v3104
    %v3108 = vpack.c.b16 %v3107, %v3107
    %v3126 = vunpack.c.l.b16 %v2763
    %v3127 = vunpack.c.l.b16 %v2764
    %v3128 = vunpack.c.l.b16 %v2765
    %v3129 = vunpack.c.l.b16 %v2766
    %v3130 = vunpack.c.l.b16 %v2767
    %v3131 = vunpack.c.l.b16 %v2768
    %v3132 = vunpack.c.l.b16 %v2769
    %v3133 = vunpack.c.l.b16 %v2770
    %v3134 = vunpack.c.l.b16 %v2771
    %v3135 = vunpack.c.l.b16 %v2772
    %v3136 = vunpack.c.l.b16 %v2773
    %v3137 = vunpack.c.l.b16 %v2774
    %v3138 = vunpack.c.l.b16 %v2775
    %v3139 = vunpack.c.l.b16 %v2776
    %v3140 = vunpack.c.l.b16 %v2777
    %v3141 = vunpack.c.l.b16 %v2778
    %v3142 = vpack.c.b16 %v3127, %v3126
    %v3143 = vpack.c.b16 %v3129, %v3128
    %v3144 = vpack.c.b16 %v3131, %v3130
    %v3145 = vpack.c.b16 %v3133, %v3132
    %v3146 = vpack.c.b16 %v3135, %v3134
    %v3147 = vpack.c.b16 %v3137, %v3136
    %v3148 = vpack.c.b16 %v3139, %v3138
    %v3149 = vpack.c.b16 %v3141, %v3140
    %3158 = vmatprep.subr.bf16.mxu0 0
    %3159 = vmatpush1.bf16.xpose.msra.mxu0 %v3149
    %3160 = vmatprep.subr.bf16.mxu0 0
    %3161 = vmatpush1.bf16.xpose.msra.mxu0 %v3148
    %3162 = vmatprep.subr.bf16.mxu0 0
    %3163 = vmatpush1.bf16.xpose.msra.mxu0 %v3147
    %3164 = vmatprep.subr.bf16.mxu0 0
    %3165 = vmatpush1.bf16.xpose.msra.mxu0 %v3146
    %3166 = vmatprep.subr.bf16.mxu0 0
    %3167 = vmatpush1.bf16.xpose.msra.mxu0 %v3145
    %3168 = vmatprep.subr.bf16.mxu0 0
    %3169 = vmatpush1.bf16.xpose.msra.mxu0 %v3144
    %3170 = vmatprep.subr.bf16.mxu0 0
    %3171 = vmatpush1.bf16.xpose.msra.mxu0 %v3143
    %3172 = vmatprep.subr.bf16.mxu0 0
    %3173 = vmatpush1.bf16.xpose.msra.mxu0 %v3142
    %3174 = vmatprep.subr.bf16.mxu0 0
    %3175 = vmatpush2.bf16.xpose.msra.mxu0 0
    %3176 = vmatprep.subr.bf16.mxu0 0
    %3177 = vmatpush2.bf16.xpose.msra.mxu0 0
    %3178 = vmatprep.subr.bf16.mxu0 0
    %3179 = vmatpush2.bf16.xpose.msra.mxu0 0
    %3180 = vmatprep.subr.bf16.mxu0 0
    %3181 = vmatpush2.bf16.xpose.msra.mxu0 0
    %3182 = vmatprep.subr.bf16.mxu0 0
    %3183 = vmatpush2.bf16.xpose.msra.mxu0 0
    %3184 = vmatprep.subr.bf16.mxu0 0
    %3185 = vmatpush2.bf16.xpose.msra.mxu0 0
    %3186 = vmatprep.subr.bf16.mxu0 0
    %3187 = vmatpush2.bf16.xpose.msra.mxu0 0
    %3188 = vmatprep.subr.bf16.mxu0 0
    %3189 = vmatpush2.bf16.xpose.msra.mxu0 0
    %3190 = vmatprep.mubr.bf16.mxu0 0
    %3191 = vmatmul.mubr.bf16.gmra.mxu0 %v3108
    %v3192 = vpop.f32.mrf.mxu0
    %v3193 = vadd.f32 %v3064, %v3192
    %v3194 = vpop.f32.mrf.mxu0
    %v3195 = vpop.f32.mrf.mxu0
    %v3196 = vpop.f32.mrf.mxu0
    %3197 = vdwg.mxu0
    %v3206 = vunpack.c.l.b16 %v3029
    %v3207 = vunpack.c.l.b16 %v3030
    %v3208 = vunpack.c.l.b16 %v3031
    %v3209 = vunpack.c.l.b16 %v3032
    %v3210 = vunpack.c.l.b16 %v3033
    %v3211 = vunpack.c.l.b16 %v3034
    %v3212 = vunpack.c.l.b16 %v3035
    %v3213 = vunpack.c.l.b16 %v3036
    %v3214 = vrot.slane %v3207, 7
    %v3215 = vsel %vm3088, %v3214, %v3206
    %v3216 = vrot.slane %v3208, 6
    %v3217 = vsel %vm3091, %v3216, %v3215
    %v3218 = vrot.slane %v3209, 5
    %v3219 = vsel %vm3094, %v3218, %v3217
    %v3220 = vrot.slane %v3210, 4
    %v3221 = vsel %vm3097, %v3220, %v3219
    %v3222 = vrot.slane %v3211, 3
    %v3223 = vsel %vm3100, %v3222, %v3221
    %v3224 = vrot.slane %v3212, 2
    %v3225 = vsel %vm3103, %v3224, %v3223
    %v3226 = vrot.slane %v3213, 1
    %v3227 = vsel %vm3106, %v3226, %v3225
    %v3228 = vpack.c.b16 %v3227, %v3227
    %v3246 = vunpack.c.l.b16 %v2779
    %v3247 = vunpack.c.l.b16 %v2780
    %v3248 = vunpack.c.l.b16 %v2781
    %v3249 = vunpack.c.l.b16 %v2782
    %v3250 = vunpack.c.l.b16 %v2783
    %v3251 = vunpack.c.l.b16 %v2784
    %v3252 = vunpack.c.l.b16 %v2785
    %v3253 = vunpack.c.l.b16 %v2786
    %v3254 = vunpack.c.l.b16 %v2787
    %v3255 = vunpack.c.l.b16 %v2788
    %v3256 = vunpack.c.l.b16 %v2789
    %v3257 = vunpack.c.l.b16 %v2790
    %v3258 = vunpack.c.l.b16 %v2791
    %v3259 = vunpack.c.l.b16 %v2792
    %v3260 = vunpack.c.l.b16 %v2793
    %v3261 = vunpack.c.l.b16 %v2794
    %v3262 = vpack.c.b16 %v3247, %v3246
    %v3263 = vpack.c.b16 %v3249, %v3248
    %v3264 = vpack.c.b16 %v3251, %v3250
    %v3265 = vpack.c.b16 %v3253, %v3252
    %v3266 = vpack.c.b16 %v3255, %v3254
    %v3267 = vpack.c.b16 %v3257, %v3256
    %v3268 = vpack.c.b16 %v3259, %v3258
    %v3269 = vpack.c.b16 %v3261, %v3260
    %3278 = vmatprep.subr.bf16.mxu0 0
    %3279 = vmatpush1.bf16.xpose.msra.mxu0 %v3269
    %3280 = vmatprep.subr.bf16.mxu0 0
    %3281 = vmatpush1.bf16.xpose.msra.mxu0 %v3268
    %3282 = vmatprep.subr.bf16.mxu0 0
    %3283 = vmatpush1.bf16.xpose.msra.mxu0 %v3267
    %3284 = vmatprep.subr.bf16.mxu0 0
    %3285 = vmatpush1.bf16.xpose.msra.mxu0 %v3266
    %3286 = vmatprep.subr.bf16.mxu0 0
    %3287 = vmatpush1.bf16.xpose.msra.mxu0 %v3265
    %3288 = vmatprep.subr.bf16.mxu0 0
    %3289 = vmatpush1.bf16.xpose.msra.mxu0 %v3264
    %3290 = vmatprep.subr.bf16.mxu0 0
    %3291 = vmatpush1.bf16.xpose.msra.mxu0 %v3263
    %3292 = vmatprep.subr.bf16.mxu0 0
    %3293 = vmatpush1.bf16.xpose.msra.mxu0 %v3262
    %3294 = vmatprep.subr.bf16.mxu0 0
    %3295 = vmatpush2.bf16.xpose.msra.mxu0 0
    %3296 = vmatprep.subr.bf16.mxu0 0
    %3297 = vmatpush2.bf16.xpose.msra.mxu0 0
    %3298 = vmatprep.subr.bf16.mxu0 0
    %3299 = vmatpush2.bf16.xpose.msra.mxu0 0
    %3300 = vmatprep.subr.bf16.mxu0 0
    %3301 = vmatpush2.bf16.xpose.msra.mxu0 0
    %3302 = vmatprep.subr.bf16.mxu0 0
    %3303 = vmatpush2.bf16.xpose.msra.mxu0 0
    %3304 = vmatprep.subr.bf16.mxu0 0
    %3305 = vmatpush2.bf16.xpose.msra.mxu0 0
    %3306 = vmatprep.subr.bf16.mxu0 0
    %3307 = vmatpush2.bf16.xpose.msra.mxu0 0
    %3308 = vmatprep.subr.bf16.mxu0 0
    %3309 = vmatpush2.bf16.xpose.msra.mxu0 0
    %3310 = vmatprep.mubr.bf16.mxu0 0
    %3311 = vmatmul.mubr.bf16.gmra.mxu0 %v3228
    %v3312 = vpop.f32.mrf.mxu0
    %v3313 = vadd.f32 %v3068, %v3312
    %v3314 = vpop.f32.mrf.mxu0
    %v3315 = vpop.f32.mrf.mxu0
    %v3316 = vpop.f32.mrf.mxu0
    %3317 = vdwg.mxu0
    %3318 = vmax.xlane.f32.xlu0 %v3193
    %v3319 = vpop.xlane.xlu0 %3318
    %3320 = vmax.xlane.f32.xlu0 %v3313
    %v3321 = vpop.xlane.xlu0 %3320
    %v3322 = vsub.f32 %v3193, %v3319
    %v3323 = vsub.f32 %v3313, %v3321
    %v3324 = vmul.f32 %v3322, 1.442695
    %v3325 = vpow.pop %v3324
    %v3326 = vmul.f32 %v3323, 1.442695
    %v3327 = vpow.pop %v3326
    %3328 = vadd.xlane.f32.xlu0 %v3325
    %v3329 = vpop.xlane.xlu0 %3328
    %3330 = vadd.xlane.f32.xlu0 %v3327
    %v3331 = vpop.xlane.xlu0 %3330
    %v3332 = vrcp.pop %v3329
    %v3333 = vrcp.pop %v3331
    %v3334 = vmul.f32 %v3325, %v3332
    %v3335 = vmul.f32 %v3327, %v3333
    %3336 = vst [vmem:[#allocation25] sm:$0xff] %v3334
    %3337 = vst [vmem:[#allocation25 + $0x8] sm:$0xff] %v3335
    %v3338 = vpack.c.bf16 %v3334, %v3334
    %v3339 = vpack.c.bf16 %v3335, %v3335
    %3340 = vmatprep.subr.bf16.mxu0 0
    %3341 = vmatpush1.bf16.msra.mxu0 %v3149
    %3342 = vmatprep.subr.bf16.mxu0 0
    %3343 = vmatpush1.bf16.msra.mxu0 %v3148
    %3344 = vmatprep.subr.bf16.mxu0 0
    %3345 = vmatpush1.bf16.msra.mxu0 %v3147
    %3346 = vmatprep.subr.bf16.mxu0 0
    %3347 = vmatpush1.bf16.msra.mxu0 %v3146
    %3348 = vmatprep.subr.bf16.mxu0 0
    %3349 = vmatpush1.bf16.msra.mxu0 %v3145
    %3350 = vmatprep.subr.bf16.mxu0 0
    %3351 = vmatpush1.bf16.msra.mxu0 %v3144
    %3352 = vmatprep.subr.bf16.mxu0 0
    %3353 = vmatpush1.bf16.msra.mxu0 %v3143
    %3354 = vmatprep.subr.bf16.mxu0 0
    %3355 = vmatpush1.bf16.msra.mxu0 %v3142
    %3356 = vmatprep.subr.bf16.mxu0 0
    %3357 = vmatpush2.bf16.msra.mxu0 0
    %3358 = vmatprep.subr.bf16.mxu0 0
    %3359 = vmatpush2.bf16.msra.mxu0 0
    %3360 = vmatprep.subr.bf16.mxu0 0
    %3361 = vmatpush2.bf16.msra.mxu0 0
    %3362 = vmatprep.subr.bf16.mxu0 0
    %3363 = vmatpush2.bf16.msra.mxu0 0
    %3364 = vmatprep.subr.bf16.mxu0 0
    %3365 = vmatpush2.bf16.msra.mxu0 0
    %3366 = vmatprep.subr.bf16.mxu0 0
    %3367 = vmatpush2.bf16.msra.mxu0 0
    %3368 = vmatprep.subr.bf16.mxu0 0
    %3369 = vmatpush2.bf16.msra.mxu0 0
    %3370 = vmatprep.subr.bf16.mxu0 0
    %3371 = vmatpush2.bf16.msra.mxu0 0
    %3372 = vmatprep.mubr.bf16.mxu0 0
    %3373 = vmatmul.mubr.bf16.gmra.mxu0 %v3338
    %v3374 = vpop.f32.mrf.mxu0
    %v3375 = vadd.f32 0.0, %v3374
    %v3376 = vpop.f32.mrf.mxu0
    %v3377 = vpop.f32.mrf.mxu0
    %v3378 = vpop.f32.mrf.mxu0
    %3379 = vdwg.mxu0
    %3380 = vmatprep.subr.bf16.mxu0 0
    %3381 = vmatpush1.bf16.msra.mxu0 %v3269
    %3382 = vmatprep.subr.bf16.mxu0 0
    %3383 = vmatpush1.bf16.msra.mxu0 %v3268
    %3384 = vmatprep.subr.bf16.mxu0 0
    %3385 = vmatpush1.bf16.msra.mxu0 %v3267
    %3386 = vmatprep.subr.bf16.mxu0 0
    %3387 = vmatpush1.bf16.msra.mxu0 %v3266
    %3388 = vmatprep.subr.bf16.mxu0 0
    %3389 = vmatpush1.bf16.msra.mxu0 %v3265
    %3390 = vmatprep.subr.bf16.mxu0 0
    %3391 = vmatpush1.bf16.msra.mxu0 %v3264
    %3392 = vmatprep.subr.bf16.mxu0 0
    %3393 = vmatpush1.bf16.msra.mxu0 %v3263
    %3394 = vmatprep.subr.bf16.mxu0 0
    %3395 = vmatpush1.bf16.msra.mxu0 %v3262
    %3396 = vmatprep.subr.bf16.mxu0 0
    %3397 = vmatpush2.bf16.msra.mxu0 0
    %3398 = vmatprep.subr.bf16.mxu0 0
    %3399 = vmatpush2.bf16.msra.mxu0 0
    %3400 = vmatprep.subr.bf16.mxu0 0
    %3401 = vmatpush2.bf16.msra.mxu0 0
    %3402 = vmatprep.subr.bf16.mxu0 0
    %3403 = vmatpush2.bf16.msra.mxu0 0
    %3404 = vmatprep.subr.bf16.mxu0 0
    %3405 = vmatpush2.bf16.msra.mxu0 0
    %3406 = vmatprep.subr.bf16.mxu0 0
    %3407 = vmatpush2.bf16.msra.mxu0 0
    %3408 = vmatprep.subr.bf16.mxu0 0
    %3409 = vmatpush2.bf16.msra.mxu0 0
    %3410 = vmatprep.subr.bf16.mxu0 0
    %3411 = vmatpush2.bf16.msra.mxu0 0
    %3412 = vmatprep.mubr.bf16.mxu0 0
    %3413 = vmatmul.mubr.bf16.gmra.mxu0 %v3339
    %v3414 = vpop.f32.mrf.mxu0
    %v3415 = vadd.f32 0.0, %v3414
    %v3416 = vpop.f32.mrf.mxu0
    %v3417 = vpop.f32.mrf.mxu0
    %v3418 = vpop.f32.mrf.mxu0
    %3419 = vdwg.mxu0
    %v3422 = vrot.slane %v3415, 7
    %v3423 = vsel %vm3088, %v3422, %v3375
    %v3425 = vrot.slane %v3375, 7
    %v3426 = vrot.slane %v3415, 6
    %v3427 = vsel %vm3094, %v3426, %v3425
    %v3429 = vrot.slane %v3375, 6
    %v3430 = vrot.slane %v3415, 5
    %v3431 = vsel %vm3100, %v3430, %v3429
    %v3433 = vrot.slane %v3375, 5
    %v3434 = vrot.slane %v3415, 4
    %v3435 = vsel %vm3106, %v3434, %v3433
    %v3437 = vrot.slane %v3375, 4
    %v3438 = vrot.slane %v3415, 3
    %v3439 = vsel %vm3088, %v3438, %v3437
    %v3441 = vrot.slane %v3375, 3
    %v3442 = vrot.slane %v3415, 2
    %v3443 = vsel %vm3094, %v3442, %v3441
    %v3445 = vrot.slane %v3375, 2
    %v3446 = vrot.slane %v3415, 1
    %v3447 = vsel %vm3100, %v3446, %v3445
    %v3449 = vrot.slane %v3375, 1
    %v3450 = vsel %vm3106, %v3415, %v3449
    %vm3452 = vcmask 1041408
    %v3453 = vsel %vm3452, %v3423, %v3427
    %vm3454 = vcmask 1043456
    %v3455 = vsel %vm3454, %v3453, %v3431
    %vm3456 = vcmask 1045504
    %v3457 = vsel %vm3456, %v3455, %v3435
    %v3458 = vsel %vm3452, %v3439, %v3443
    %v3459 = vsel %vm3454, %v3458, %v3447
    %v3460 = vsel %vm3456, %v3459, %v3450
    %v3461 = vpack.c.bf16 %v3460, %v3457
    %v3462 = vld [vmem:[#allocation17] sm:$0xf]
    %v3463 = vld [vmem:[#allocation17 + $0x4] sm:$0xf]
    %v3464 = vld [vmem:[#allocation17 + $0x8] sm:$0xf]
    %v3465 = vld [vmem:[#allocation17 + $0xc] sm:$0xf]
    %v3466 = vld [vmem:[#allocation17 + $0x10] sm:$0xf]
    %v3467 = vld [vmem:[#allocation17 + $0x14] sm:$0xf]
    %v3468 = vld [vmem:[#allocation17 + $0x18] sm:$0xf]
    %v3469 = vld [vmem:[#allocation17 + $0x1c] sm:$0xf]
    %v3470 = vld [vmem:[#allocation17 + $0x20] sm:$0xf]
    %v3471 = vld [vmem:[#allocation17 + $0x24] sm:$0xf]
    %v3472 = vld [vmem:[#allocation17 + $0x28] sm:$0xf]
    %v3473 = vld [vmem:[#allocation17 + $0x2c] sm:$0xf]
    %v3474 = vld [vmem:[#allocation17 + $0x30] sm:$0xf]
    %v3475 = vld [vmem:[#allocation17 + $0x34] sm:$0xf]
    %v3476 = vld [vmem:[#allocation17 + $0x38] sm:$0xf]
    %v3477 = vld [vmem:[#allocation17 + $0x3c] sm:$0xf]
    %v3478 = vld [vmem:[#allocation18] sm:$0xf]
    %v3479 = vld [vmem:[#allocation18 + $0x4] sm:$0xf]
    %v3480 = vld [vmem:[#allocation18 + $0x8] sm:$0xf]
    %v3481 = vld [vmem:[#allocation18 + $0xc] sm:$0xf]
    %v3482 = vld [vmem:[#allocation18 + $0x10] sm:$0xf]
    %v3483 = vld [vmem:[#allocation18 + $0x14] sm:$0xf]
    %v3484 = vld [vmem:[#allocation18 + $0x18] sm:$0xf]
    %v3485 = vld [vmem:[#allocation18 + $0x1c] sm:$0xf]
    %v3486 = vld [vmem:[#allocation18 + $0x20] sm:$0xf]
    %v3487 = vld [vmem:[#allocation18 + $0x24] sm:$0xf]
    %v3488 = vld [vmem:[#allocation18 + $0x28] sm:$0xf]
    %v3489 = vld [vmem:[#allocation18 + $0x2c] sm:$0xf]
    %v3490 = vld [vmem:[#allocation18 + $0x30] sm:$0xf]
    %v3491 = vld [vmem:[#allocation18 + $0x34] sm:$0xf]
    %v3492 = vld [vmem:[#allocation18 + $0x38] sm:$0xf]
    %v3493 = vld [vmem:[#allocation18 + $0x3c] sm:$0xf]
    %v3510 = vunpack.c.l.b16 %v3478
    %v3511 = vunpack.c.l.b16 %v3479
    %v3512 = vunpack.c.l.b16 %v3480
    %v3513 = vunpack.c.l.b16 %v3481
    %v3514 = vunpack.c.l.b16 %v3482
    %v3515 = vunpack.c.l.b16 %v3483
    %v3516 = vunpack.c.l.b16 %v3484
    %v3517 = vunpack.c.l.b16 %v3485
    %v3518 = vunpack.c.l.b16 %v3486
    %v3519 = vunpack.c.l.b16 %v3487
    %v3520 = vunpack.c.l.b16 %v3488
    %v3521 = vunpack.c.l.b16 %v3489
    %v3522 = vunpack.c.l.b16 %v3490
    %v3523 = vunpack.c.l.b16 %v3491
    %v3524 = vunpack.c.l.b16 %v3492
    %v3525 = vunpack.c.l.b16 %v3493
    %v3526 = vpack.c.b16 %v3511, %v3510
    %v3527 = vpack.c.b16 %v3513, %v3512
    %v3528 = vpack.c.b16 %v3515, %v3514
    %v3529 = vpack.c.b16 %v3517, %v3516
    %v3530 = vpack.c.b16 %v3519, %v3518
    %v3531 = vpack.c.b16 %v3521, %v3520
    %v3532 = vpack.c.b16 %v3523, %v3522
    %v3533 = vpack.c.b16 %v3525, %v3524
    %3542 = vmatprep.subr.bf16.mxu0 0
    %3543 = vmatpush1.bf16.msra.mxu0 %v3533
    %3544 = vmatprep.subr.bf16.mxu0 0
    %3545 = vmatpush1.bf16.msra.mxu0 %v3532
    %3546 = vmatprep.subr.bf16.mxu0 0
    %3547 = vmatpush1.bf16.msra.mxu0 %v3531
    %3548 = vmatprep.subr.bf16.mxu0 0
    %3549 = vmatpush1.bf16.msra.mxu0 %v3530
    %3550 = vmatprep.subr.bf16.mxu0 0
    %3551 = vmatpush1.bf16.msra.mxu0 %v3529
    %3552 = vmatprep.subr.bf16.mxu0 0
    %3553 = vmatpush1.bf16.msra.mxu0 %v3528
    %3554 = vmatprep.subr.bf16.mxu0 0
    %3555 = vmatpush1.bf16.msra.mxu0 %v3527
    %3556 = vmatprep.subr.bf16.mxu0 0
    %3557 = vmatpush1.bf16.msra.mxu0 %v3526
    %3558 = vmatprep.subr.bf16.mxu0 0
    %3559 = vmatpush2.bf16.msra.mxu0 0
    %3560 = vmatprep.subr.bf16.mxu0 0
    %3561 = vmatpush2.bf16.msra.mxu0 0
    %3562 = vmatprep.subr.bf16.mxu0 0
    %3563 = vmatpush2.bf16.msra.mxu0 0
    %3564 = vmatprep.subr.bf16.mxu0 0
    %3565 = vmatpush2.bf16.msra.mxu0 0
    %3566 = vmatprep.subr.bf16.mxu0 0
    %3567 = vmatpush2.bf16.msra.mxu0 0
    %3568 = vmatprep.subr.bf16.mxu0 0
    %3569 = vmatpush2.bf16.msra.mxu0 0
    %3570 = vmatprep.subr.bf16.mxu0 0
    %3571 = vmatpush2.bf16.msra.mxu0 0
    %3572 = vmatprep.subr.bf16.mxu0 0
    %3573 = vmatpush2.bf16.msra.mxu0 0
    %3574 = vmatprep.mubr.bf16.mxu0 0
    %3575 = vmatmul.mubr.bf16.gmra.mxu0 %v2847
    %v3576 = vpop.f32.mrf.mxu0
    %v3577 = vadd.f32 0.0, %v3576
    %v3578 = vpop.f32.mrf.mxu0
    %v3579 = vpop.f32.mrf.mxu0
    %v3580 = vadd.f32 0.0, %v3579
    %v3581 = vpop.f32.mrf.mxu0
    %3582 = vdwg.mxu0
    %v3599 = vunpack.c.l.b16 %v3462
    %v3600 = vunpack.c.l.b16 %v3463
    %v3601 = vunpack.c.l.b16 %v3464
    %v3602 = vunpack.c.l.b16 %v3465
    %v3603 = vunpack.c.l.b16 %v3466
    %v3604 = vunpack.c.l.b16 %v3467
    %v3605 = vunpack.c.l.b16 %v3468
    %v3606 = vunpack.c.l.b16 %v3469
    %v3607 = vunpack.c.l.b16 %v3470
    %v3608 = vunpack.c.l.b16 %v3471
    %v3609 = vunpack.c.l.b16 %v3472
    %v3610 = vunpack.c.l.b16 %v3473
    %v3611 = vunpack.c.l.b16 %v3474
    %v3612 = vunpack.c.l.b16 %v3475
    %v3613 = vunpack.c.l.b16 %v3476
    %v3614 = vunpack.c.l.b16 %v3477
    %v3615 = vpack.c.b16 %v3600, %v3599
    %v3616 = vpack.c.b16 %v3602, %v3601
    %v3617 = vpack.c.b16 %v3604, %v3603
    %v3618 = vpack.c.b16 %v3606, %v3605
    %v3619 = vpack.c.b16 %v3608, %v3607
    %v3620 = vpack.c.b16 %v3610, %v3609
    %v3621 = vpack.c.b16 %v3612, %v3611
    %v3622 = vpack.c.b16 %v3614, %v3613
    %3631 = vmatprep.subr.bf16.mxu0 0
    %3632 = vmatpush1.bf16.msra.mxu0 %v3622
    %3633 = vmatprep.subr.bf16.mxu0 0
    %3634 = vmatpush1.bf16.msra.mxu0 %v3621
    %3635 = vmatprep.subr.bf16.mxu0 0
    %3636 = vmatpush1.bf16.msra.mxu0 %v3620
    %3637 = vmatprep.subr.bf16.mxu0 0
    %3638 = vmatpush1.bf16.msra.mxu0 %v3619
    %3639 = vmatprep.subr.bf16.mxu0 0
    %3640 = vmatpush1.bf16.msra.mxu0 %v3618
    %3641 = vmatprep.subr.bf16.mxu0 0
    %3642 = vmatpush1.bf16.msra.mxu0 %v3617
    %3643 = vmatprep.subr.bf16.mxu0 0
    %3644 = vmatpush1.bf16.msra.mxu0 %v3616
    %3645 = vmatprep.subr.bf16.mxu0 0
    %3646 = vmatpush1.bf16.msra.mxu0 %v3615
    %3647 = vmatprep.subr.bf16.mxu0 0
    %3648 = vmatpush2.bf16.msra.mxu0 0
    %3649 = vmatprep.subr.bf16.mxu0 0
    %3650 = vmatpush2.bf16.msra.mxu0 0
    %3651 = vmatprep.subr.bf16.mxu0 0
    %3652 = vmatpush2.bf16.msra.mxu0 0
    %3653 = vmatprep.subr.bf16.mxu0 0
    %3654 = vmatpush2.bf16.msra.mxu0 0
    %3655 = vmatprep.subr.bf16.mxu0 0
    %3656 = vmatpush2.bf16.msra.mxu0 0
    %3657 = vmatprep.subr.bf16.mxu0 0
    %3658 = vmatpush2.bf16.msra.mxu0 0
    %3659 = vmatprep.subr.bf16.mxu0 0
    %3660 = vmatpush2.bf16.msra.mxu0 0
    %3661 = vmatprep.subr.bf16.mxu0 0
    %3662 = vmatpush2.bf16.msra.mxu0 0
    %3663 = vmatprep.mubr.bf16.mxu0 0
    %3664 = vmatmul.mubr.bf16.gmra.mxu0 %v3461
    %v3665 = vpop.f32.mrf.mxu0
    %v3666 = vadd.f32 %v3577, %v3665
    %v3667 = vpop.f32.mrf.mxu0
    %v3668 = vpop.f32.mrf.mxu0
    %v3669 = vadd.f32 %v3580, %v3668
    %v3670 = vpop.f32.mrf.mxu0
    %3671 = vdwg.mxu0
    %v3672 = vld [vmem:[%s10] sm:$0x1]
    %v3674 = vlaneseq
    %v3675 = vshrl.u32 %v3674, 7
    %v3676 = vsub.s32 0, %v3675
    %v3677 = vrot.slane %v3672, %v3676
    %v3679 = vadd.f32 %v3666, %v3677
    %v3680 = vadd.f32 %v3669, %v3677
    %v3681 = vtanh.pop %v3679
    %v3682 = vtanh.pop %v3680
    %v3683 = vpack.c.bf16 %v3682, %v3681
    %v3684 = vld [vmem:[#allocation20] sm:$0xff]
    %v3685 = vld [vmem:[#allocation20 + $0x8] sm:$0xff]
    %v3686 = vld [vmem:[#allocation20 + $0x10] sm:$0xff]
    %v3687 = vld [vmem:[#allocation20 + $0x18] sm:$0xff]
    %v3688 = vld [vmem:[#allocation20 + $0x20] sm:$0xff]
    %v3689 = vld [vmem:[#allocation20 + $0x28] sm:$0xff]
    %v3690 = vld [vmem:[#allocation20 + $0x30] sm:$0xff]
    %v3691 = vld [vmem:[#allocation20 + $0x38] sm:$0xff]
    %v3692 = vld [vmem:[#allocation20 + $0x40] sm:$0xff]
    %v3693 = vld [vmem:[#allocation20 + $0x48] sm:$0xff]
    %v3694 = vld [vmem:[#allocation20 + $0x50] sm:$0xff]
    %v3695 = vld [vmem:[#allocation20 + $0x58] sm:$0xff]
    %v3696 = vld [vmem:[#allocation20 + $0x60] sm:$0xff]
    %v3697 = vld [vmem:[#allocation20 + $0x68] sm:$0xff]
    %v3698 = vld [vmem:[#allocation20 + $0x70] sm:$0xff]
    %v3699 = vld [vmem:[#allocation20 + $0x78] sm:$0xff]
    %v3700 = vld [vmem:[#allocation20 + $0x80] sm:$0xff]
    %v3701 = vld [vmem:[#allocation20 + $0x88] sm:$0xff]
    %v3702 = vld [vmem:[#allocation20 + $0x90] sm:$0xff]
    %v3703 = vld [vmem:[#allocation20 + $0x98] sm:$0xff]
    %v3704 = vld [vmem:[#allocation20 + $0xa0] sm:$0xff]
    %v3705 = vld [vmem:[#allocation20 + $0xa8] sm:$0xff]
    %v3706 = vld [vmem:[#allocation20 + $0xb0] sm:$0xff]
    %v3707 = vld [vmem:[#allocation20 + $0xb8] sm:$0xff]
    %v3708 = vld [vmem:[#allocation20 + $0xc0] sm:$0xff]
    %v3709 = vld [vmem:[#allocation20 + $0xc8] sm:$0xff]
    %v3710 = vld [vmem:[#allocation20 + $0xd0] sm:$0xff]
    %v3711 = vld [vmem:[#allocation20 + $0xd8] sm:$0xff]
    %v3712 = vld [vmem:[#allocation20 + $0xe0] sm:$0xff]
    %v3713 = vld [vmem:[#allocation20 + $0xe8] sm:$0xff]
    %v3714 = vld [vmem:[#allocation20 + $0xf0] sm:$0xff]
    %v3715 = vld [vmem:[#allocation20 + $0xf8] sm:$0xff]
    %v3716 = vld [vmem:[#allocation20 + $0x100] sm:$0xff]
    %v3717 = vld [vmem:[#allocation20 + $0x108] sm:$0xff]
    %v3718 = vld [vmem:[#allocation20 + $0x110] sm:$0xff]
    %v3719 = vld [vmem:[#allocation20 + $0x118] sm:$0xff]
    %v3720 = vld [vmem:[#allocation20 + $0x120] sm:$0xff]
    %v3721 = vld [vmem:[#allocation20 + $0x128] sm:$0xff]
    %v3722 = vld [vmem:[#allocation20 + $0x130] sm:$0xff]
    %v3723 = vld [vmem:[#allocation20 + $0x138] sm:$0xff]
    %v3724 = vld [vmem:[#allocation20 + $0x140] sm:$0xff]
    %v3725 = vld [vmem:[#allocation20 + $0x148] sm:$0xff]
    %v3726 = vld [vmem:[#allocation20 + $0x150] sm:$0xff]
    %v3727 = vld [vmem:[#allocation20 + $0x158] sm:$0xff]
    %v3728 = vld [vmem:[#allocation20 + $0x160] sm:$0xff]
    %v3729 = vld [vmem:[#allocation20 + $0x168] sm:$0xff]
    %v3730 = vld [vmem:[#allocation20 + $0x170] sm:$0xff]
    %v3731 = vld [vmem:[#allocation20 + $0x178] sm:$0xff]
    %v3732 = vld [vmem:[#allocation20 + $0x180] sm:$0xff]
    %v3733 = vld [vmem:[#allocation20 + $0x188] sm:$0xff]
    %v3734 = vld [vmem:[#allocation20 + $0x190] sm:$0xff]
    %v3735 = vld [vmem:[#allocation20 + $0x198] sm:$0xff]
    %v3736 = vld [vmem:[#allocation20 + $0x1a0] sm:$0xff]
    %v3737 = vld [vmem:[#allocation20 + $0x1a8] sm:$0xff]
    %v3738 = vld [vmem:[#allocation20 + $0x1b0] sm:$0xff]
    %v3739 = vld [vmem:[#allocation20 + $0x1b8] sm:$0xff]
    %v3740 = vld [vmem:[#allocation20 + $0x1c0] sm:$0xff]
    %v3741 = vld [vmem:[#allocation20 + $0x1c8] sm:$0xff]
    %v3742 = vld [vmem:[#allocation20 + $0x1d0] sm:$0xff]
    %v3743 = vld [vmem:[#allocation20 + $0x1d8] sm:$0xff]
    %v3744 = vld [vmem:[#allocation20 + $0x1e0] sm:$0xff]
    %v3745 = vld [vmem:[#allocation20 + $0x1e8] sm:$0xff]
    %v3746 = vld [vmem:[#allocation20 + $0x1f0] sm:$0xff]
    %v3747 = vld [vmem:[#allocation20 + $0x1f8] sm:$0xff]
    %v3748 = vld [vmem:[%s12] sm:$0xff]
    %v3750 = vlaneseq
    %v3751 = vshrl.u32 %v3750, 7
    %v3752 = vsub.s32 0, %v3751
    %v3753 = vrot.slane %v3748, %v3752
    %v3754 = vlaneseq
    %v3755 = vshrl.u32 %v3754, 7
    %v3756 = vsub.s32 1, %v3755
    %v3757 = vrot.slane %v3748, %v3756
    %v3758 = vlaneseq
    %v3759 = vshrl.u32 %v3758, 7
    %v3760 = vsub.s32 2, %v3759
    %v3761 = vrot.slane %v3748, %v3760
    %v3762 = vlaneseq
    %v3763 = vshrl.u32 %v3762, 7
    %v3764 = vsub.s32 3, %v3763
    %v3765 = vrot.slane %v3748, %v3764
    %v3766 = vlaneseq
    %v3767 = vshrl.u32 %v3766, 7
    %v3768 = vsub.s32 4, %v3767
    %v3769 = vrot.slane %v3748, %v3768
    %v3770 = vlaneseq
    %v3771 = vshrl.u32 %v3770, 7
    %v3772 = vsub.s32 5, %v3771
    %v3773 = vrot.slane %v3748, %v3772
    %v3774 = vlaneseq
    %v3775 = vshrl.u32 %v3774, 7
    %v3776 = vsub.s32 6, %v3775
    %v3777 = vrot.slane %v3748, %v3776
    %v3778 = vlaneseq
    %v3779 = vshrl.u32 %v3778, 7
    %v3780 = vsub.s32 7, %v3779
    %v3781 = vrot.slane %v3748, %v3780
    %v3854 = vunpack.c.l.b16 %v3684
    %v3855 = vunpack.c.h.b16 %v3684
    %v3856 = vunpack.c.l.b16 %v3685
    %v3857 = vunpack.c.h.b16 %v3685
    %v3858 = vunpack.c.l.b16 %v3686
    %v3859 = vunpack.c.h.b16 %v3686
    %v3860 = vunpack.c.l.b16 %v3687
    %v3861 = vunpack.c.h.b16 %v3687
    %v3862 = vunpack.c.l.b16 %v3688
    %v3863 = vunpack.c.h.b16 %v3688
    %v3864 = vunpack.c.l.b16 %v3689
    %v3865 = vunpack.c.h.b16 %v3689
    %v3866 = vunpack.c.l.b16 %v3690
    %v3867 = vunpack.c.h.b16 %v3690
    %v3868 = vunpack.c.l.b16 %v3691
    %v3869 = vunpack.c.h.b16 %v3691
    %v3870 = vunpack.c.l.b16 %v3692
    %v3871 = vunpack.c.h.b16 %v3692
    %v3872 = vunpack.c.l.b16 %v3693
    %v3873 = vunpack.c.h.b16 %v3693
    %v3874 = vunpack.c.l.b16 %v3694
    %v3875 = vunpack.c.h.b16 %v3694
    %v3876 = vunpack.c.l.b16 %v3695
    %v3877 = vunpack.c.h.b16 %v3695
    %v3878 = vunpack.c.l.b16 %v3696
    %v3879 = vunpack.c.h.b16 %v3696
    %v3880 = vunpack.c.l.b16 %v3697
    %v3881 = vunpack.c.h.b16 %v3697
    %v3882 = vunpack.c.l.b16 %v3698
    %v3883 = vunpack.c.h.b16 %v3698
    %v3884 = vunpack.c.l.b16 %v3699
    %v3885 = vunpack.c.h.b16 %v3699
    %v3886 = vunpack.c.l.b16 %v3700
    %v3887 = vunpack.c.h.b16 %v3700
    %v3888 = vunpack.c.l.b16 %v3701
    %v3889 = vunpack.c.h.b16 %v3701
    %v3890 = vunpack.c.l.b16 %v3702
    %v3891 = vunpack.c.h.b16 %v3702
    %v3892 = vunpack.c.l.b16 %v3703
    %v3893 = vunpack.c.h.b16 %v3703
    %v3894 = vunpack.c.l.b16 %v3704
    %v3895 = vunpack.c.h.b16 %v3704
    %v3896 = vunpack.c.l.b16 %v3705
    %v3897 = vunpack.c.h.b16 %v3705
    %v3898 = vunpack.c.l.b16 %v3706
    %v3899 = vunpack.c.h.b16 %v3706
    %v3900 = vunpack.c.l.b16 %v3707
    %v3901 = vunpack.c.h.b16 %v3707
    %v3902 = vunpack.c.l.b16 %v3708
    %v3903 = vunpack.c.h.b16 %v3708
    %v3904 = vunpack.c.l.b16 %v3709
    %v3905 = vunpack.c.h.b16 %v3709
    %v3906 = vunpack.c.l.b16 %v3710
    %v3907 = vunpack.c.h.b16 %v3710
    %v3908 = vunpack.c.l.b16 %v3711
    %v3909 = vunpack.c.h.b16 %v3711
    %v3910 = vunpack.c.l.b16 %v3712
    %v3911 = vunpack.c.h.b16 %v3712
    %v3912 = vunpack.c.l.b16 %v3713
    %v3913 = vunpack.c.h.b16 %v3713
    %v3914 = vunpack.c.l.b16 %v3714
    %v3915 = vunpack.c.h.b16 %v3714
    %v3916 = vunpack.c.l.b16 %v3715
    %v3917 = vunpack.c.h.b16 %v3715
    %v3918 = vunpack.c.l.b16 %v3716
    %v3919 = vunpack.c.h.b16 %v3716
    %v3920 = vunpack.c.l.b16 %v3717
    %v3921 = vunpack.c.h.b16 %v3717
    %v3922 = vunpack.c.l.b16 %v3718
    %v3923 = vunpack.c.h.b16 %v3718
    %v3924 = vunpack.c.l.b16 %v3719
    %v3925 = vunpack.c.h.b16 %v3719
    %v3926 = vunpack.c.l.b16 %v3720
    %v3927 = vunpack.c.h.b16 %v3720
    %v3928 = vunpack.c.l.b16 %v3721
    %v3929 = vunpack.c.h.b16 %v3721
    %v3930 = vunpack.c.l.b16 %v3722
    %v3931 = vunpack.c.h.b16 %v3722
    %v3932 = vunpack.c.l.b16 %v3723
    %v3933 = vunpack.c.h.b16 %v3723
    %v3934 = vunpack.c.l.b16 %v3724
    %v3935 = vunpack.c.h.b16 %v3724
    %v3936 = vunpack.c.l.b16 %v3725
    %v3937 = vunpack.c.h.b16 %v3725
    %v3938 = vunpack.c.l.b16 %v3726
    %v3939 = vunpack.c.h.b16 %v3726
    %v3940 = vunpack.c.l.b16 %v3727
    %v3941 = vunpack.c.h.b16 %v3727
    %v3942 = vunpack.c.l.b16 %v3728
    %v3943 = vunpack.c.h.b16 %v3728
    %v3944 = vunpack.c.l.b16 %v3729
    %v3945 = vunpack.c.h.b16 %v3729
    %v3946 = vunpack.c.l.b16 %v3730
    %v3947 = vunpack.c.h.b16 %v3730
    %v3948 = vunpack.c.l.b16 %v3731
    %v3949 = vunpack.c.h.b16 %v3731
    %v3950 = vunpack.c.l.b16 %v3732
    %v3951 = vunpack.c.h.b16 %v3732
    %v3952 = vunpack.c.l.b16 %v3733
    %v3953 = vunpack.c.h.b16 %v3733
    %v3954 = vunpack.c.l.b16 %v3734
    %v3955 = vunpack.c.h.b16 %v3734
    %v3956 = vunpack.c.l.b16 %v3735
    %v3957 = vunpack.c.h.b16 %v3735
    %v3958 = vunpack.c.l.b16 %v3736
    %v3959 = vunpack.c.h.b16 %v3736
    %v3960 = vunpack.c.l.b16 %v3737
    %v3961 = vunpack.c.h.b16 %v3737
    %v3962 = vunpack.c.l.b16 %v3738
    %v3963 = vunpack.c.h.b16 %v3738
    %v3964 = vunpack.c.l.b16 %v3739
    %v3965 = vunpack.c.h.b16 %v3739
    %v3966 = vunpack.c.l.b16 %v3740
    %v3967 = vunpack.c.h.b16 %v3740
    %v3968 = vunpack.c.l.b16 %v3741
    %v3969 = vunpack.c.h.b16 %v3741
    %v3970 = vunpack.c.l.b16 %v3742
    %v3971 = vunpack.c.h.b16 %v3742
    %v3972 = vunpack.c.l.b16 %v3743
    %v3973 = vunpack.c.h.b16 %v3743
    %v3974 = vunpack.c.l.b16 %v3744
    %v3975 = vunpack.c.h.b16 %v3744
    %v3976 = vunpack.c.l.b16 %v3745
    %v3977 = vunpack.c.h.b16 %v3745
    %v3978 = vunpack.c.l.b16 %v3746
    %v3979 = vunpack.c.h.b16 %v3746
    %v3980 = vunpack.c.l.b16 %v3747
    %v3981 = vunpack.c.h.b16 %v3747
    %v3982 = vpack.c.b16 %v3862, %v3854
    %v3983 = vpack.c.b16 %v3863, %v3855
    %v3984 = vpack.c.b16 %v3864, %v3856
    %v3985 = vpack.c.b16 %v3865, %v3857
    %v3986 = vpack.c.b16 %v3866, %v3858
    %v3987 = vpack.c.b16 %v3867, %v3859
    %v3988 = vpack.c.b16 %v3868, %v3860
    %v3989 = vpack.c.b16 %v3869, %v3861
    %v3990 = vpack.c.b16 %v3878, %v3870
    %v3991 = vpack.c.b16 %v3879, %v3871
    %v3992 = vpack.c.b16 %v3880, %v3872
    %v3993 = vpack.c.b16 %v3881, %v3873
    %v3994 = vpack.c.b16 %v3882, %v3874
    %v3995 = vpack.c.b16 %v3883, %v3875
    %v3996 = vpack.c.b16 %v3884, %v3876
    %v3997 = vpack.c.b16 %v3885, %v3877
    %v3998 = vpack.c.b16 %v3894, %v3886
    %v3999 = vpack.c.b16 %v3895, %v3887
    %v4000 = vpack.c.b16 %v3896, %v3888
    %v4001 = vpack.c.b16 %v3897, %v3889
    %v4002 = vpack.c.b16 %v3898, %v3890
    %v4003 = vpack.c.b16 %v3899, %v3891
    %v4004 = vpack.c.b16 %v3900, %v3892
    %v4005 = vpack.c.b16 %v3901, %v3893
    %v4006 = vpack.c.b16 %v3910, %v3902
    %v4007 = vpack.c.b16 %v3911, %v3903
    %v4008 = vpack.c.b16 %v3912, %v3904
    %v4009 = vpack.c.b16 %v3913, %v3905
    %v4010 = vpack.c.b16 %v3914, %v3906
    %v4011 = vpack.c.b16 %v3915, %v3907
    %v4012 = vpack.c.b16 %v3916, %v3908
    %v4013 = vpack.c.b16 %v3917, %v3909
    %v4014 = vpack.c.b16 %v3926, %v3918
    %v4015 = vpack.c.b16 %v3927, %v3919
    %v4016 = vpack.c.b16 %v3928, %v3920
    %v4017 = vpack.c.b16 %v3929, %v3921
    %v4018 = vpack.c.b16 %v3930, %v3922
    %v4019 = vpack.c.b16 %v3931, %v3923
    %v4020 = vpack.c.b16 %v3932, %v3924
    %v4021 = vpack.c.b16 %v3933, %v3925
    %v4022 = vpack.c.b16 %v3942, %v3934
    %v4023 = vpack.c.b16 %v3943, %v3935
    %v4024 = vpack.c.b16 %v3944, %v3936
    %v4025 = vpack.c.b16 %v3945, %v3937
    %v4026 = vpack.c.b16 %v3946, %v3938
    %v4027 = vpack.c.b16 %v3947, %v3939
    %v4028 = vpack.c.b16 %v3948, %v3940
    %v4029 = vpack.c.b16 %v3949, %v3941
    %v4030 = vpack.c.b16 %v3958, %v3950
    %v4031 = vpack.c.b16 %v3959, %v3951
    %v4032 = vpack.c.b16 %v3960, %v3952
    %v4033 = vpack.c.b16 %v3961, %v3953
    %v4034 = vpack.c.b16 %v3962, %v3954
    %v4035 = vpack.c.b16 %v3963, %v3955
    %v4036 = vpack.c.b16 %v3964, %v3956
    %v4037 = vpack.c.b16 %v3965, %v3957
    %v4038 = vpack.c.b16 %v3974, %v3966
    %v4039 = vpack.c.b16 %v3975, %v3967
    %v4040 = vpack.c.b16 %v3976, %v3968
    %v4041 = vpack.c.b16 %v3977, %v3969
    %v4042 = vpack.c.b16 %v3978, %v3970
    %v4043 = vpack.c.b16 %v3979, %v3971
    %v4044 = vpack.c.b16 %v3980, %v3972
    %v4045 = vpack.c.b16 %v3981, %v3973
    %4110 = vmatprep.subr.bf16.mxu0 %v4039
    %4111 = vmatpush1.bf16.msra.mxu0 %v4038
    %4112 = vmatprep.subr.bf16.mxu0 %v4031
    %4113 = vmatpush1.bf16.msra.mxu0 %v4030
    %4114 = vmatprep.subr.bf16.mxu0 %v4023
    %4115 = vmatpush1.bf16.msra.mxu0 %v4022
    %4116 = vmatprep.subr.bf16.mxu0 %v4015
    %4117 = vmatpush1.bf16.msra.mxu0 %v4014
    %4118 = vmatprep.subr.bf16.mxu0 %v4007
    %4119 = vmatpush1.bf16.msra.mxu0 %v4006
    %4120 = vmatprep.subr.bf16.mxu0 %v3999
    %4121 = vmatpush1.bf16.msra.mxu0 %v3998
    %4122 = vmatprep.subr.bf16.mxu0 %v3991
    %4123 = vmatpush1.bf16.msra.mxu0 %v3990
    %4124 = vmatprep.subr.bf16.mxu0 %v3983
    %4125 = vmatpush1.bf16.msra.mxu0 %v3982
    %4126 = vmatprep.subr.bf16.mxu0 0
    %4127 = vmatpush2.bf16.msra.mxu0 0
    %4128 = vmatprep.subr.bf16.mxu0 0
    %4129 = vmatpush2.bf16.msra.mxu0 0
    %4130 = vmatprep.subr.bf16.mxu0 0
    %4131 = vmatpush2.bf16.msra.mxu0 0
    %4132 = vmatprep.subr.bf16.mxu0 0
    %4133 = vmatpush2.bf16.msra.mxu0 0
    %4134 = vmatprep.subr.bf16.mxu0 0
    %4135 = vmatpush2.bf16.msra.mxu0 0
    %4136 = vmatprep.subr.bf16.mxu0 0
    %4137 = vmatpush2.bf16.msra.mxu0 0
    %4138 = vmatprep.subr.bf16.mxu0 0
    %4139 = vmatpush2.bf16.msra.mxu0 0
    %4140 = vmatprep.subr.bf16.mxu0 0
    %4141 = vmatpush2.bf16.msra.mxu0 0
    %4142 = vmatprep.mubr.bf16.mxu0 0
    %4143 = vmatmul.mubr.bf16.gmra.mxu0 %v3683
    %v4144 = vpop.f32.mrf.mxu0
    %v4145 = vadd.f32 %v3753, %v4144
    %v4146 = vpop.f32.mrf.mxu0
    %v4147 = vadd.f32 %v3757, %v4146
    %v4148 = vpop.f32.mrf.mxu0
    %v4149 = vadd.f32 %v3753, %v4148
    %v4150 = vpop.f32.mrf.mxu0
    %v4151 = vadd.f32 %v3757, %v4150
    %4152 = vdwg.mxu0
    %4153 = vmatprep.subr.bf16.mxu0 %v4041
    %4154 = vmatpush1.bf16.msra.mxu0 %v4040
    %4155 = vmatprep.subr.bf16.mxu0 %v4033
    %4156 = vmatpush1.bf16.msra.mxu0 %v4032
    %4157 = vmatprep.subr.bf16.mxu0 %v4025
    %4158 = vmatpush1.bf16.msra.mxu0 %v4024
    %4159 = vmatprep.subr.bf16.mxu0 %v4017
    %4160 = vmatpush1.bf16.msra.mxu0 %v4016
    %4161 = vmatprep.subr.bf16.mxu0 %v4009
    %4162 = vmatpush1.bf16.msra.mxu0 %v4008
    %4163 = vmatprep.subr.bf16.mxu0 %v4001
    %4164 = vmatpush1.bf16.msra.mxu0 %v4000
    %4165 = vmatprep.subr.bf16.mxu0 %v3993
    %4166 = vmatpush1.bf16.msra.mxu0 %v3992
    %4167 = vmatprep.subr.bf16.mxu0 %v3985
    %4168 = vmatpush1.bf16.msra.mxu0 %v3984
    %4169 = vmatprep.subr.bf16.mxu0 0
    %4170 = vmatpush2.bf16.msra.mxu0 0
    %4171 = vmatprep.subr.bf16.mxu0 0
    %4172 = vmatpush2.bf16.msra.mxu0 0
    %4173 = vmatprep.subr.bf16.mxu0 0
    %4174 = vmatpush2.bf16.msra.mxu0 0
    %4175 = vmatprep.subr.bf16.mxu0 0
    %4176 = vmatpush2.bf16.msra.mxu0 0
    %4177 = vmatprep.subr.bf16.mxu0 0
    %4178 = vmatpush2.bf16.msra.mxu0 0
    %4179 = vmatprep.subr.bf16.mxu0 0
    %4180 = vmatpush2.bf16.msra.mxu0 0
    %4181 = vmatprep.subr.bf16.mxu0 0
    %4182 = vmatpush2.bf16.msra.mxu0 0
    %4183 = vmatprep.subr.bf16.mxu0 0
    %4184 = vmatpush2.bf16.msra.mxu0 0
    %4185 = vmatprep.mubr.bf16.mxu0 0
    %4186 = vmatmul.mubr.bf16.gmra.mxu0 %v3683
    %v4187 = vpop.f32.mrf.mxu0
    %v4188 = vadd.f32 %v3761, %v4187
    %v4189 = vpop.f32.mrf.mxu0
    %v4190 = vadd.f32 %v3765, %v4189
    %v4191 = vpop.f32.mrf.mxu0
    %v4192 = vadd.f32 %v3761, %v4191
    %v4193 = vpop.f32.mrf.mxu0
    %v4194 = vadd.f32 %v3765, %v4193
    %4195 = vdwg.mxu0
    %4196 = vmatprep.subr.bf16.mxu0 %v4043
    %4197 = vmatpush1.bf16.msra.mxu0 %v4042
    %4198 = vmatprep.subr.bf16.mxu0 %v4035
    %4199 = vmatpush1.bf16.msra.mxu0 %v4034
    %4200 = vmatprep.subr.bf16.mxu0 %v4027
    %4201 = vmatpush1.bf16.msra.mxu0 %v4026
    %4202 = vmatprep.subr.bf16.mxu0 %v4019
    %4203 = vmatpush1.bf16.msra.mxu0 %v4018
    %4204 = vmatprep.subr.bf16.mxu0 %v4011
    %4205 = vmatpush1.bf16.msra.mxu0 %v4010
    %4206 = vmatprep.subr.bf16.mxu0 %v4003
    %4207 = vmatpush1.bf16.msra.mxu0 %v4002
    %4208 = vmatprep.subr.bf16.mxu0 %v3995
    %4209 = vmatpush1.bf16.msra.mxu0 %v3994
    %4210 = vmatprep.subr.bf16.mxu0 %v3987
    %4211 = vmatpush1.bf16.msra.mxu0 %v3986
    %4212 = vmatprep.subr.bf16.mxu0 0
    %4213 = vmatpush2.bf16.msra.mxu0 0
    %4214 = vmatprep.subr.bf16.mxu0 0
    %4215 = vmatpush2.bf16.msra.mxu0 0
    %4216 = vmatprep.subr.bf16.mxu0 0
    %4217 = vmatpush2.bf16.msra.mxu0 0
    %4218 = vmatprep.subr.bf16.mxu0 0
    %4219 = vmatpush2.bf16.msra.mxu0 0
    %4220 = vmatprep.subr.bf16.mxu0 0
    %4221 = vmatpush2.bf16.msra.mxu0 0
    %4222 = vmatprep.subr.bf16.mxu0 0
    %4223 = vmatpush2.bf16.msra.mxu0 0
    %4224 = vmatprep.subr.bf16.mxu0 0
    %4225 = vmatpush2.bf16.msra.mxu0 0
    %4226 = vmatprep.subr.bf16.mxu0 0
    %4227 = vmatpush2.bf16.msra.mxu0 0
    %4228 = vmatprep.mubr.bf16.mxu0 0
    %4229 = vmatmul.mubr.bf16.gmra.mxu0 %v3683
    %v4230 = vpop.f32.mrf.mxu0
    %v4231 = vadd.f32 %v3769, %v4230
    %v4232 = vpop.f32.mrf.mxu0
    %v4233 = vadd.f32 %v3773, %v4232
    %v4234 = vpop.f32.mrf.mxu0
    %v4235 = vadd.f32 %v3769, %v4234
    %v4236 = vpop.f32.mrf.mxu0
    %v4237 = vadd.f32 %v3773, %v4236
    %4238 = vdwg.mxu0
    %4239 = vmatprep.subr.bf16.mxu0 %v4045
    %4240 = vmatpush1.bf16.msra.mxu0 %v4044
    %4241 = vmatprep.subr.bf16.mxu0 %v4037
    %4242 = vmatpush1.bf16.msra.mxu0 %v4036
    %4243 = vmatprep.subr.bf16.mxu0 %v4029
    %4244 = vmatpush1.bf16.msra.mxu0 %v4028
    %4245 = vmatprep.subr.bf16.mxu0 %v4021
    %4246 = vmatpush1.bf16.msra.mxu0 %v4020
    %4247 = vmatprep.subr.bf16.mxu0 %v4013
    %4248 = vmatpush1.bf16.msra.mxu0 %v4012
    %4249 = vmatprep.subr.bf16.mxu0 %v4005
    %4250 = vmatpush1.bf16.msra.mxu0 %v4004
    %4251 = vmatprep.subr.bf16.mxu0 %v3997
    %4252 = vmatpush1.bf16.msra.mxu0 %v3996
    %4253 = vmatprep.subr.bf16.mxu0 %v3989
    %4254 = vmatpush1.bf16.msra.mxu0 %v3988
    %4255 = vmatprep.subr.bf16.mxu0 0
    %4256 = vmatpush2.bf16.msra.mxu0 0
    %4257 = vmatprep.subr.bf16.mxu0 0
    %4258 = vmatpush2.bf16.msra.mxu0 0
    %4259 = vmatprep.subr.bf16.mxu0 0
    %4260 = vmatpush2.bf16.msra.mxu0 0
    %4261 = vmatprep.subr.bf16.mxu0 0
    %4262 = vmatpush2.bf16.msra.mxu0 0
    %4263 = vmatprep.subr.bf16.mxu0 0
    %4264 = vmatpush2.bf16.msra.mxu0 0
    %4265 = vmatprep.subr.bf16.mxu0 0
    %4266 = vmatpush2.bf16.msra.mxu0 0
    %4267 = vmatprep.subr.bf16.mxu0 0
    %4268 = vmatpush2.bf16.msra.mxu0 0
    %4269 = vmatprep.subr.bf16.mxu0 0
    %4270 = vmatpush2.bf16.msra.mxu0 0
    %4271 = vmatprep.mubr.bf16.mxu0 0
    %4272 = vmatmul.mubr.bf16.gmra.mxu0 %v3683
    %v4273 = vpop.f32.mrf.mxu0
    %v4274 = vadd.f32 %v3777, %v4273
    %v4275 = vpop.f32.mrf.mxu0
    %v4276 = vadd.f32 %v3781, %v4275
    %v4277 = vpop.f32.mrf.mxu0
    %v4278 = vadd.f32 %v3777, %v4277
    %v4279 = vpop.f32.mrf.mxu0
    %v4280 = vadd.f32 %v3781, %v4279
    %4281 = vdwg.mxu0
    %4282 = vst [vmem:[#allocation21] sm:$0xff] %v4145
    %4283 = vst [vmem:[#allocation21 + $0x8] sm:$0xff] %v4147
    %4284 = vst [vmem:[#allocation21 + $0x10] sm:$0xff] %v4188
    %4285 = vst [vmem:[#allocation21 + $0x18] sm:$0xff] %v4190
    %4286 = vst [vmem:[#allocation21 + $0x20] sm:$0xff] %v4231
    %4287 = vst [vmem:[#allocation21 + $0x28] sm:$0xff] %v4233
    %4288 = vst [vmem:[#allocation21 + $0x30] sm:$0xff] %v4274
    %4289 = vst [vmem:[#allocation21 + $0x38] sm:$0xff] %v4276
    %4290 = vst [vmem:[#allocation21 + $0x40] sm:$0xff] %v4149
    %4291 = vst [vmem:[#allocation21 + $0x48] sm:$0xff] %v4151
    %4292 = vst [vmem:[#allocation21 + $0x50] sm:$0xff] %v4192
    %4293 = vst [vmem:[#allocation21 + $0x58] sm:$0xff] %v4194
    %4294 = vst [vmem:[#allocation21 + $0x60] sm:$0xff] %v4235
    %4295 = vst [vmem:[#allocation21 + $0x68] sm:$0xff] %v4237
    %4296 = vst [vmem:[#allocation21 + $0x70] sm:$0xff] %v4278
    %4297 = vst [vmem:[#allocation21 + $0x78] sm:$0xff] %v4280
    // Predicated region
    $region94: #{tpu_custom_call.1} parent=1 // pred_check
      _
    $region95: #{tpu_custom_call.1} parent=1 // pred_check_branch
      %4299 = sbr.rel (0) target = $region97
    $region96: #{tpu_custom_call.1} parent=1 // pred_region
      %s4301 = ssub.s32 2048, 2048
      %4302 = vsyncadd [#allocation8], %s4301
      %s4303 = sshll.u32 [#allocation21], 4
      %s4304 = int_to_ptr.vmem [resolvable:$true] %s4303
      %4309 = dma.vmem_to_hbm [thread:$0]  %s4304, 2048, %s14, [#allocation8], 1024, 1024, 64
    $region97: #{tpu_custom_call.1} parent=1 // pred_fallthru
      _
    // Predicated region
    $region98: #{tpu_custom_call.1} parent=1 // pred_check
      _
    $region99: #{tpu_custom_call.1} parent=1 // pred_check_branch
      %4311 = sbr.rel (0) target = $region101
    $region100: #{tpu_custom_call.1} parent=1 // pred_region
      %s4313 = ssub.s32 32, 32
      %4314 = vsyncadd [#allocation23], %s4313
      %s4316 = sshll.u32 [#allocation22], 4
      %s4317 = int_to_ptr.vmem [resolvable:$true] %s4316
      %4319 = dma.vmem_to_hbm [thread:$0]  %s4317, 32, %s15, [#allocation23]
    $region101: #{tpu_custom_call.1} parent=1 // pred_fallthru
      _
    // Predicated region
    $region102: #{tpu_custom_call.1} parent=1 // pred_check
      _
    $region103: #{tpu_custom_call.1} parent=1 // pred_check_branch
      %4321 = sbr.rel (0) target = $region105
    $region104: #{tpu_custom_call.1} parent=1 // pred_region
      %s4323 = ssub.s32 32, 32
      %4324 = vsyncadd [#allocation23], %s4323
      %s4326 = sshll.u32 [#allocation24], 4
      %s4327 = int_to_ptr.vmem [resolvable:$true] %s4326
      %4329 = dma.vmem_to_hbm [thread:$0]  %s4327, 32, %s16, [#allocation23]
    $region105: #{tpu_custom_call.1} parent=1 // pred_fallthru
      _
    // Predicated region
    $region106: #{tpu_custom_call.1} parent=1 // pred_check
      _
    $region107: #{tpu_custom_call.1} parent=1 // pred_check_branch
      %4331 = sbr.rel (0) target = $region109
    $region108: #{tpu_custom_call.1} parent=1 // pred_region
      %s4333 = ssub.s32 256, 256
      %4334 = vsyncadd [#allocation26], %s4333
      %s4335 = sshll.u32 [#allocation25], 4
      %s4336 = int_to_ptr.vmem [resolvable:$true] %s4335
      %4341 = dma.vmem_to_hbm [thread:$0]  %s4336, 256, %s17, [#allocation26], 128, 128, 8
    $region109: #{tpu_custom_call.1} parent=1 // pred_fallthru
      _
    // Predicated region
    $region110: #{tpu_custom_call.1} parent=1 // pred_check
      _
    $region111: #{tpu_custom_call.1} parent=1 // pred_check_branch
      %4343 = sbr.rel (0) target = $region113
    $region112: #{tpu_custom_call.1} parent=1 // pred_region
      %4344 = dma.done [#allocation8], 2048
    $region113: #{tpu_custom_call.1} parent=1 // pred_fallthru
      _
    // Predicated region
    $region114: #{tpu_custom_call.1} parent=1 // pred_check
      _
    $region115: #{tpu_custom_call.1} parent=1 // pred_check_branch
      %4346 = sbr.rel (0) target = $region117
    $region116: #{tpu_custom_call.1} parent=1 // pred_region
      %4347 = dma.done [#allocation23], 32
    $region117: #{tpu_custom_call.1} parent=1 // pred_fallthru
      _
    // Predicated region
    $region118: #{tpu_custom_call.1} parent=1 // pred_check
      _
    $region119: #{tpu_custom_call.1} parent=1 // pred_check_branch
      %4349 = sbr.rel (0) target = $region121
    $region120: #{tpu_custom_call.1} parent=1 // pred_region
      %4350 = dma.done [#allocation23], 32
    $region121: #{tpu_custom_call.1} parent=1 // pred_fallthru
      _
    // Predicated region
    $region122: #{tpu_custom_call.1} parent=1 // pred_check
      _
    $region123: #{tpu_custom_call.1} parent=1 // pred_check_branch
      %4352 = sbr.rel (0) target = $region125
    $region124: #{tpu_custom_call.1} parent=1 // pred_region
      %4353 = dma.done [#allocation26], 256
    $region125: #{tpu_custom_call.1} parent=1 // pred_fallthru
      _
    %4354 = vsyncpa [#allocation7], 1
    %4355 = vsyncpa [#allocation10], 1
    %4356 = vsyncpa [#allocation13], 1
    %4357 = vsyncpa [#allocation16], 1
    %4358 = vsyncpa [#allocation19], 1
    %4359 = vsyncpa [#allocation8], 1
    %4360 = vsyncpa [#allocation23], 1
    %4361 = vsyncpa [#allocation26], 1
  %4362 = vsyncmov [#allocation5]
  %s4363 = vpop.sfrf %4362
  %p4364 = scmp.eq.s32.totalorder %s4363, 0
  %p4365 = pneg %p4364
  %4367 = shalt.err (%p4365)

</llo_original>
